<compile_context>
chip_gen: v7x
topology: tpu7x:2x2x1
jax: 0.10.0
libtpu: 0.0.40
codegen_flags: <defaults>
</compile_context>

<pallas_src>
import jax
import jax.numpy as jnp
import numpy as np
from jax.experimental import pallas as pl
from jax.experimental.pallas import tpu as pltpu


def _round_up(n, m):
    return ((n + m - 1) // m) * m


def _pick_tile8(n, target):
    """Largest multiple-of-8 divisor of n (n % 8 == 0) that is <= max(target, 8)."""
    t = min(n, max(8, (target // 8) * 8))
    t -= t % 8
    while n % t:
        t -= 8
    return t


# ----------------------------------------------------------------------------
# Kernel A: backbone = Conv2d(C, F, 3, pad=1) -> ReLU -> global average pool.
# Wrapper packs the 9 taps into a lane-dense im2col patch tensor; the kernel
# does a single (Bt*HW, KCp) x (KCp, Fp) bf16 MXU matmul with f32 accumulation,
# bias + ReLU, and a one-shot pooled (Bt, Fp) store.
# ----------------------------------------------------------------------------
def backbone_forward(x, conv_w, conv_b):
    Bp, C, H, W = x.shape            # Bp already a multiple of 8
    F = conv_w.shape[0]
    K = 3
    HW = H * W
    Fp = _round_up(F, 128)           # lane-dense output channels
    KC = K * K * C
    KCp = _round_up(KC, 128)         # lane-dense contraction dim

    # Wrapper-side layout plumbing (done once by XLA): NCHW -> NHWC, SAME pad,
    # pack the 9 conv taps into the last axis so the matmul LHS is lane-dense.
    x_nhwc = jnp.transpose(x, (0, 2, 3, 1)).astype(jnp.float32)
    xp = jnp.pad(x_nhwc, ((0, 0), (1, 1), (1, 1), (0, 0)))
    taps = [xp[:, di:di + H, dj:dj + W, :] for di in range(K) for dj in range(K)]
    patches = jnp.concatenate(taps, axis=-1).reshape(Bp, HW, KC)
    patches = jnp.pad(patches, ((0, 0), (0, 0), (0, KCp - KC))).astype(jnp.bfloat16)

    # Conv weight as one (KCp, Fp) RHS; row index = (di*3 + dj)*C + c.
    w_mat = jnp.transpose(conv_w, (2, 3, 1, 0)).reshape(KC, F)
    w_mat = jnp.pad(w_mat, ((0, KCp - KC), (0, Fp - F))).astype(jnp.bfloat16)
    b_row = jnp.pad(conv_b, (0, Fp - F)).reshape(1, Fp).astype(jnp.float32)

    # ~2048 matmul rows per grid step; tile is a multiple of 8 dividing Bp.
    bt_target = max(8, (max(2048 // HW, 1) // 8) * 8)
    Bt = _pick_tile8(Bp, bt_target)
    n_tiles = Bp // Bt
    rows = Bt * HW
    inv_hw = 1.0 / float(HW)

    def kernel(p_ref, w_ref, b_ref, o_ref):
        # p_ref: (Bt, HW, KCp) bf16   w_ref: (KCp, Fp) bf16   b_ref: (1, Fp) f32
        acts = jnp.dot(p_ref[...].reshape(rows, KCp), w_ref[...],
                       preferred_element_type=jnp.float32)
        acts = jnp.maximum(acts + b_ref[...], 0.0)
        # One batched reduction + one dense (Bt, Fp) store (no masked stores).
        o_ref[...] = jnp.sum(acts.reshape(Bt, HW, Fp), axis=1) * inv_hw

    cost = pl.CostEstimate(
        flops=2 * Bp * HW * KCp * Fp,
        transcendentals=0,
        bytes_accessed=int(patches.size) * 2 + int(w_mat.size) * 2
        + Fp * 4 + Bp * Fp * 4)

    # NOTE: for very large H*W an extra spatial row-block grid axis would be
    # needed to keep the per-step patch block inside v7x's 64 MiB VMEM; at
    # typical SimCLR crops the adaptive Bt keeps the block small.
    feats = pl.pallas_call(
        kernel,
        out_shape=jax.ShapeDtypeStruct((Bp, Fp), jnp.float32),
        grid=(n_tiles,),
        in_specs=[
            pl.BlockSpec((Bt, HW, KCp), lambda i: (i, 0, 0)),
            pl.BlockSpec((KCp, Fp), lambda i: (0, 0)),
            pl.BlockSpec((1, Fp), lambda i: (0, 0)),
        ],
        out_specs=pl.BlockSpec((Bt, Fp), lambda i: (i, 0)),
        compiler_params=pltpu.CompilerParams(
            dimension_semantics=("parallel",),
            vmem_limit_bytes=48 * 1024 * 1024),
        cost_estimate=cost,
    )(patches, w_mat, b_row)
    return feats                      # (Bp, Fp) f32; columns >= F are zero


# ----------------------------------------------------------------------------
# Kernel B: fused projection head (Linear -> BatchNorm1d -> ReLU -> Linear)
# in ONE pallas_call with a 3-phase grid.  h stays resident in a VMEM scratch;
# BN uses full-batch, two-pass (centered) statistics; padded batch rows are
# masked out of the statistics.
# ----------------------------------------------------------------------------
def projection_head_forward(feats, w1, b1, gamma, beta, w2, b2, batch):
    Bp, Fp = feats.shape
    F_in, Dh = w1.shape
    Do = w2.shape[1]
    Dhp = _round_up(Dh, 128)
    Dop = _round_up(Do, 128)

    w1_p = jnp.pad(w1, ((0, Fp - F_in), (0, Dhp - Dh))).astype(jnp.bfloat16)
    w2_p = jnp.pad(w2, ((0, Dhp - Dh), (0, Dop - Do))).astype(jnp.bfloat16)
    # (8, Dhp)-aligned constant block: row0 = b1, row1 = gamma, row2 = beta.
    c1 = jnp.zeros((8, Dhp), jnp.float32)
    c1 = c1.at[0, :Dh].set(b1).at[1, :Dh].set(gamma).at[2, :Dh].set(beta)
    c2 = jnp.zeros((8, Dop), jnp.float32).at[0, :Do].set(b2)

    Bt = _pick_tile8(Bp, 256)
    n_tiles = Bp // Bt
    inv_b = 1.0 / float(batch)
    need_mask = (Bp != batch)

    def kernel(f_ref, w1_ref, c1_ref, w2_ref, c2_ref, o_ref, h_ref, s_ref):
        phase = pl.program_id(0)
        i = pl.program_id(1)
        row0 = pl.multiple_of(i * Bt, 8)

        if need_mask:
            rid = jax.lax.broadcasted_iota(jnp.int32, (Bt, 1), 0) + row0
            mask = (rid < batch).astype(jnp.float32)

        @pl.when(jnp.logical_and(phase == 0, i == 0))
        def _init():
            s_ref[...] = jnp.zeros_like(s_ref)

        @pl.when(phase == 0)
        def _linear1():
            h = jnp.dot(f_ref[...].astype(jnp.bfloat16), w1_ref[...],
                        preferred_element_type=jnp.float32) + c1_ref[0:1, :]
            h_ref[pl.ds(row0, Bt), :] = h
            hm = h * mask if need_mask else h
            s_ref[0:1, :] += jnp.sum(hm, axis=0, keepdims=True)

        @pl.when(phase == 1)
        def _centered_sumsq():
            h = h_ref[pl.ds(row0, Bt), :]
            d = h - s_ref[0:1, :] * inv_b
            if need_mask:
                d = d * mask
            s_ref[1:2, :] += jnp.sum(d * d, axis=0, keepdims=True)

        @pl.when(phase == 2)
        def _bn_relu_linear2():
            h = h_ref[pl.ds(row0, Bt), :]
            mean = s_ref[0:1, :] * inv_b
            var = s_ref[1:2, :] * inv_b
            hn = (h - mean) * jax.lax.rsqrt(var + 1e-5) * c1_ref[1:2, :] \
                + c1_ref[2:3, :]
            hn = jnp.maximum(hn, 0.0)
            o_ref[...] = jnp.dot(hn.astype(jnp.bfloat16), w2_ref[...],
                                 preferred_element_type=jnp.float32) + c2_ref[0:1, :]

    cost = pl.CostEstimate(
        flops=2 * Bp * (Fp * Dhp + Dhp * Dop),
        transcendentals=n_tiles * Dhp,
        bytes_accessed=Bp * Fp * 4 + Fp * Dhp * 2 + Dhp * Dop * 2
        + Bp * Dop * 4 + (8 * Dhp + 8 * Dop) * 4)

    z = pl.pallas_call(
        kernel,
        out_shape=jax.ShapeDtypeStruct((Bp, Dop), jnp.float32),
        grid=(3, n_tiles),
        in_specs=[
            # feats only needed in phase 0: park the index at block 0 afterwards
            pl.BlockSpec((Bt, Fp), lambda p, i: (jnp.where(p == 0, i, 0), 0)),
            pl.BlockSpec((Fp, Dhp), lambda p, i: (0, 0)),
            pl.BlockSpec((8, Dhp), lambda p, i: (0, 0)),
            pl.BlockSpec((Dhp, Dop), lambda p, i: (0, 0)),
            pl.BlockSpec((8, Dop), lambda p, i: (0, 0)),
        ],
        # output only written in phase 2: keep earlier phases on block 0 so no
        # uninitialized block is ever the final writeback for its tile.
        out_specs=pl.BlockSpec((Bt, Dop),
                               lambda p, i: (jnp.where(p == 2, i, 0), 0)),
        scratch_shapes=[pltpu.VMEM((Bp, Dhp), jnp.float32),   # resident h
                        pltpu.VMEM((8, Dhp), jnp.float32)],   # [sum; centered ss]
        compiler_params=pltpu.CompilerParams(
            dimension_semantics=("arbitrary", "arbitrary"),
            vmem_limit_bytes=48 * 1024 * 1024),
        cost_estimate=cost,
    )(feats, w1_p, c1, w2_p, c2)

    return z[:batch, :Do]


# ----------------------------------------------------------------------------
# Full SimCLR forward
# ----------------------------------------------------------------------------
def simclr_forward(x, params):
    B = x.shape[0]
    Bp = _round_up(B, 8)
    if Bp != B:                       # pad batch so all blocks are (8,128)-aligned
        x = jnp.pad(x, ((0, Bp - B), (0, 0), (0, 0), (0, 0)))
    feats = backbone_forward(x, params["conv_w"], params["conv_b"])
    return projection_head_forward(feats, params["w1"], params["b1"],
                                   params["gamma"], params["beta"],
                                   params["w2"], params["b2"], batch=B)


# Pure-JAX reference mirroring the kernels' mixed precision: bf16 matmul
# operands with f32 accumulation; BN (two-pass variance) / pooling in f32.
def simclr_reference(x, params):
    xb = x.astype(jnp.bfloat16)
    wb = params["conv_w"].astype(jnp.bfloat16)
    y = jax.lax.conv_general_dilated(
        xb, wb, window_strides=(1, 1), padding="SAME",
        dimension_numbers=("NCHW", "OIHW", "NCHW"),
        preferred_element_type=jnp.float32)
    y = jnp.maximum(y + params["conv_b"].reshape(1, -1, 1, 1), 0.0)
    feats = jnp.mean(y, axis=(2, 3))                               # (B, F)
    h = jnp.dot(feats.astype(jnp.bfloat16), params["w1"].astype(jnp.bfloat16),
                preferred_element_type=jnp.float32) + params["b1"]
    mean = jnp.mean(h, axis=0, keepdims=True)
    var = jnp.mean((h - mean) ** 2, axis=0, keepdims=True)
    h = (h - mean) * jax.lax.rsqrt(var + 1e-5) * params["gamma"] + params["beta"]
    h = jnp.maximum(h, 0.0)
    return jnp.dot(h.astype(jnp.bfloat16), params["w2"].astype(jnp.bfloat16),
                   preferred_element_type=jnp.float32) + params["b2"]


if __name__ == "__main__":
    # Small shapes: batch=2, channels=4, spatial=16x16,
    # backbone feature dim (input_dim)=32, hidden_dim=64, output_dim=16.
    B, C, H, W = 2, 4, 16, 16
    INPUT_DIM, HIDDEN_DIM, OUTPUT_DIM = 32, 64, 16

    key = jax.random.PRNGKey(0)
    keys = jax.random.split(key, 8)
    x = jax.random.normal(keys[0], (B, C, H, W), dtype=jnp.float32)

    params = {
        "conv_w": 0.05 * jax.random.normal(keys[1], (INPUT_DIM, C, 3, 3), jnp.float32),
        "conv_b": 0.01 * jax.random.normal(keys[2], (INPUT_DIM,), jnp.float32),
        "w1":     0.05 * jax.random.normal(keys[3], (INPUT_DIM, HIDDEN_DIM), jnp.float32),
        "b1":     0.01 * jax.random.normal(keys[4], (HIDDEN_DIM,), jnp.float32),
        "gamma":  jnp.ones((HIDDEN_DIM,), jnp.float32),
        "beta":   jnp.zeros((HIDDEN_DIM,), jnp.float32),
        "w2":     0.05 * jax.random.normal(keys[5], (HIDDEN_DIM, OUTPUT_DIM), jnp.float32),
        "b2":     0.01 * jax.random.normal(keys[6], (OUTPUT_DIM,), jnp.float32),
    }

    fwd = jax.jit(simclr_forward)
    z = jax.block_until_ready(fwd(x, params))
    z_ref = jax.block_until_ready(simclr_reference(x, params))

    np.testing.assert_allclose(np.asarray(z), np.asarray(z_ref),
                               rtol=2e-3, atol=2e-3)
    assert z.shape == (B, OUTPUT_DIM)

    print("KERNEL_OK")
</pallas_src>

<mosaic_0001>
module attributes {stable_mosaic.version = 11 : i64} {
  func.func @kernel(%arg0: i32, %arg1: memref<8x256x128xbf16, #tpu.memory_space<vmem>>, %arg2: memref<128x128xbf16, #tpu.memory_space<vmem>>, %arg3: memref<1x128xf32, #tpu.memory_space<vmem>>, %arg4: memref<8x128xf32, #tpu.memory_space<vmem>>) attributes {dimension_semantics = [#tpu.dimension_semantics<parallel>], iteration_bounds = array<i64: 1>, scalar_prefetch = 0 : i64, scratch_operands = 0 : i64, tpu.core_type = #tpu.core_type<tc>, window_params = [{transform_indices = @transform_0, window_bounds = array<i64: 8, 256, 128>}, {pipeline_mode = #tpu.pipeline_mode<synchronous>, transform_indices = @transform_1, window_bounds = array<i64: 128, 128>}, {pipeline_mode = #tpu.pipeline_mode<synchronous>, transform_indices = @transform_2, window_bounds = array<i64: 1, 128>}, {transform_indices = @transform_3, window_bounds = array<i64: 8, 128>}]} {
    %c0 = arith.constant 0 : index
    %c0_0 = arith.constant 0 : index
    %c0_1 = arith.constant 0 : index
    %0 = vector.load %arg1[%c0, %c0_0, %c0_1] : memref<8x256x128xbf16, #tpu.memory_space<vmem>>, vector<8x256x128xbf16>
    %1 = vector.shape_cast %0 : vector<8x256x128xbf16> to vector<2048x128xbf16>
    %c0_2 = arith.constant 0 : index
    %c0_3 = arith.constant 0 : index
    %2 = vector.load %arg2[%c0_2, %c0_3] : memref<128x128xbf16, #tpu.memory_space<vmem>>, vector<128x128xbf16>
    %cst = arith.constant dense<0.000000e+00> : vector<2048x128xf32>
    %3 = tpu.matmul %1, %2, %cst {dimension_numbers = #tpu.dot_dimension_numbers<[1], [0], [0], [1], [0, 0, 1, 1], [], []>} : vector<2048x128xbf16>, vector<128x128xbf16>, vector<2048x128xf32> -> vector<2048x128xf32>
    %c0_4 = arith.constant 0 : index
    %c0_5 = arith.constant 0 : index
    %4 = vector.load %arg3[%c0_4, %c0_5] : memref<1x128xf32, #tpu.memory_space<vmem>>, vector<1x128xf32>
    %5 = vector.broadcast %4 : vector<1x128xf32> to vector<2048x128xf32>
    %6 = arith.addf %3, %5 : vector<2048x128xf32>
    %cst_6 = arith.constant 0.000000e+00 : f32
    %7 = vector.broadcast %cst_6 : f32 to vector<2048x128xf32>
    %8 = arith.maximumf %6, %7 : vector<2048x128xf32>
    %9 = vector.shape_cast %8 : vector<2048x128xf32> to vector<8x256x128xf32>
    %cst_7 = arith.constant dense<0.000000e+00> : vector<8x128xf32>
    %10 = vector.multi_reduction <add>, %9, %cst_7 [1] : vector<8x256x128xf32> to vector<8x128xf32>
    %cst_8 = arith.constant 3.906250e-03 : f32
    %11 = vector.broadcast %cst_8 : f32 to vector<8x128xf32>
    %12 = arith.mulf %10, %11 : vector<8x128xf32>
    %c0_9 = arith.constant 0 : index
    %c0_10 = arith.constant 0 : index
    %13 = vector.load %arg4[%c0_9, %c0_10] : memref<8x128xf32, #tpu.memory_space<vmem>>, vector<8x128xf32>
    tpu.vector_store %arg4[%c0_9, %c0_10], %12 {strides = array<i32>} : memref<8x128xf32, #tpu.memory_space<vmem>>, vector<8x128xf32>,
    return
  }
  func.func @transform_0(%arg0: i32) -> (i32, i32, i32) {
    %c0_i32 = arith.constant 0 : i32
    %c0_i32_0 = arith.constant 0 : i32
    %c0_i32_1 = arith.constant 0 : i32
    return %arg0, %c0_i32, %c0_i32_0 : i32, i32, i32
  }
  func.func @transform_1(%arg0: i32) -> (i32, i32) {
    %c0_i32 = arith.constant 0 : i32
    %c0_i32_0 = arith.constant 0 : i32
    %c0_i32_1 = arith.constant 0 : i32
    return %c0_i32, %c0_i32_0 : i32, i32
  }
  func.func @transform_2(%arg0: i32) -> (i32, i32) {
    %c0_i32 = arith.constant 0 : i32
    %c0_i32_0 = arith.constant 0 : i32
    %c0_i32_1 = arith.constant 0 : i32
    return %c0_i32, %c0_i32_0 : i32, i32
  }
  func.func @transform_3(%arg0: i32) -> (i32, i32) {
    %c0_i32 = arith.constant 0 : i32
    %c0_i32_0 = arith.constant 0 : i32
    return %arg0, %c0_i32 : i32, i32
  }
}

module attributes {stable_mosaic.version = 11 : i64} {
  func.func @kernel(%arg0: i32, %arg1: i32, %arg2: memref<8x128xf32, #tpu.memory_space<vmem>>, %arg3: memref<128x128xbf16, #tpu.memory_space<vmem>>, %arg4: memref<8x128xf32, #tpu.memory_space<vmem>>, %arg5: memref<128x128xbf16, #tpu.memory_space<vmem>>, %arg6: memref<8x128xf32, #tpu.memory_space<vmem>>, %arg7: memref<8x128xf32, #tpu.memory_space<vmem>>, %arg8: memref<8x128xf32, #tpu.memory_space<vmem>>, %arg9: memref<8x128xf32, #tpu.memory_space<vmem>>) attributes {dimension_semantics = [#tpu.dimension_semantics<arbitrary>, #tpu.dimension_semantics<arbitrary>], iteration_bounds = array<i64: 3, 1>, scalar_prefetch = 0 : i64, scratch_operands = 2 : i64, tpu.core_type = #tpu.core_type<tc>, window_params = [{transform_indices = @transform_0, window_bounds = array<i64: 8, 128>}, {pipeline_mode = #tpu.pipeline_mode<synchronous>, transform_indices = @transform_1, window_bounds = array<i64: 128, 128>}, {pipeline_mode = #tpu.pipeline_mode<synchronous>, transform_indices = @transform_2, window_bounds = array<i64: 8, 128>}, {pipeline_mode = #tpu.pipeline_mode<synchronous>, transform_indices = @transform_3, window_bounds = array<i64: 128, 128>}, {pipeline_mode = #tpu.pipeline_mode<synchronous>, transform_indices = @transform_4, window_bounds = array<i64: 8, 128>}, {transform_indices = @transform_5, window_bounds = array<i64: 8, 128>}]} {
    %c8_i32 = arith.constant 8 : i32
    %0 = arith.muli %arg1, %c8_i32 : i32
    %1 = tpu.assume_multiple %0, 8 : i32
    %2 = tpu.iota {dimensions = array<i32: 0>} : vector<8x1xi32>
    %3 = vector.broadcast %1 : i32 to vector<8x1xi32>
    %4 = arith.addi %2, %3 : vector<8x1xi32>
    %c2_i32 = arith.constant 2 : i32
    %5 = vector.broadcast %c2_i32 : i32 to vector<8x1xi32>
    %6 = arith.cmpi slt, %4, %5 : vector<8x1xi32>
    %7 = arith.extui %6 : vector<8x1xi1> to vector<8x1xi32>
    %8 = arith.sitofp %7 : vector<8x1xi32> to vector<8x1xf32>
    %c0_i32 = arith.constant 0 : i32
    %9 = arith.cmpi eq, %arg0, %c0_i32 : i32
    %c0_i32_0 = arith.constant 0 : i32
    %10 = arith.cmpi eq, %arg1, %c0_i32_0 : i32
    %11 = arith.andi %9, %10 : i1
    %12 = arith.extui %11 : i1 to i32
    %c0_i32_1 = arith.constant 0 : i32
    %13 = arith.cmpi ne, %12, %c0_i32_1 : i32
    scf.if %13 {
      %cst = arith.constant 0.000000e+00 : f32
      %23 = vector.broadcast %cst : f32 to vector<8x128xf32>
      %c0 = arith.constant 0 : index
      %c0_7 = arith.constant 0 : index
      %24 = vector.load %arg9[%c0, %c0_7] : memref<8x128xf32, #tpu.memory_space<vmem>>, vector<8x128xf32>
      tpu.vector_store %arg9[%c0, %c0_7], %23 {strides = array<i32>} : memref<8x128xf32, #tpu.memory_space<vmem>>, vector<8x128xf32>,
    } else {
    }
    %c0_i32_2 = arith.constant 0 : i32
    %14 = arith.cmpi eq, %arg0, %c0_i32_2 : i32
    %15 = arith.extui %14 : i1 to i32
    %c0_i32_3 = arith.constant 0 : i32
    %16 = arith.cmpi ne, %15, %c0_i32_3 : i32
    scf.if %16 {
      %c0 = arith.constant 0 : index
      %c0_7 = arith.constant 0 : index
      %23 = vector.load %arg2[%c0, %c0_7] : memref<8x128xf32, #tpu.memory_space<vmem>>, vector<8x128xf32>
      %24 = arith.truncf %23 : vector<8x128xf32> to vector<8x128xbf16>
      %c0_8 = arith.constant 0 : index
      %c0_9 = arith.constant 0 : index
      %25 = vector.load %arg3[%c0_8, %c0_9] : memref<128x128xbf16, #tpu.memory_space<vmem>>, vector<128x128xbf16>
      %cst = arith.constant dense<0.000000e+00> : vector<8x128xf32>
      %26 = tpu.matmul %24, %25, %cst {dimension_numbers = #tpu.dot_dimension_numbers<[1], [0], [0], [1], [0, 0, 1, 1], [], []>} : vector<8x128xbf16>, vector<128x128xbf16>, vector<8x128xf32> -> vector<8x128xf32>
      %c0_10 = arith.constant 0 : index
      %c0_11 = arith.constant 0 : index
      %27 = vector.load %arg4[%c0_10, %c0_11] : memref<8x128xf32, #tpu.memory_space<vmem>>, vector<1x128xf32>
      %28 = vector.broadcast %27 : vector<1x128xf32> to vector<8x128xf32>
      %29 = arith.addf %26, %28 : vector<8x128xf32>
      %30 = arith.index_cast %1 : i32 to index
      %c0_12 = arith.constant 0 : index
      %31 = vector.load %arg8[%30, %c0_12] : memref<8x128xf32, #tpu.memory_space<vmem>>, vector<8x128xf32>
      tpu.vector_store %arg8[%30, %c0_12], %29 {strides = array<i32>} : memref<8x128xf32, #tpu.memory_space<vmem>>, vector<8x128xf32>,
      %32 = vector.broadcast %8 : vector<8x1xf32> to vector<8x128xf32>
      %33 = arith.mulf %29, %32 : vector<8x128xf32>
      %c0_13 = arith.constant 0 : index
      %c0_14 = arith.constant 0 : index
      %34 = vector.load %arg9[%c0_13, %c0_14] : memref<8x128xf32, #tpu.memory_space<vmem>>, vector<1x128xf32>
      %cst_15 = arith.constant dense<0.000000e+00> : vector<128xf32>
      %35 = vector.multi_reduction <add>, %33, %cst_15 [0] : vector<8x128xf32> to vector<128xf32>
      %36 = vector.shape_cast %35 : vector<128xf32> to vector<1x128xf32>
      %37 = arith.addf %34, %36 : vector<1x128xf32>
      %c0_16 = arith.constant 0 : index
      %c0_17 = arith.constant 0 : index
      %38 = vector.load %arg9[%c0_16, %c0_17] : memref<8x128xf32, #tpu.memory_space<vmem>>, vector<1x128xf32>
      tpu.vector_store %arg9[%c0_16, %c0_17], %37 {strides = array<i32>} : memref<8x128xf32, #tpu.memory_space<vmem>>, vector<1x128xf32>,
    } else {
    }
    %c1_i32 = arith.constant 1 : i32
    %17 = arith.cmpi eq, %arg0, %c1_i32 : i32
    %18 = arith.extui %17 : i1 to i32
    %c0_i32_4 = arith.constant 0 : i32
    %19 = arith.cmpi ne, %18, %c0_i32_4 : i32
    scf.if %19 {
      %23 = arith.index_cast %1 : i32 to index
      %c0 = arith.constant 0 : index
      %24 = vector.load %arg8[%23, %c0] : memref<8x128xf32, #tpu.memory_space<vmem>>, vector<8x128xf32>
      %c0_7 = arith.constant 0 : index
      %c0_8 = arith.constant 0 : index
      %25 = vector.load %arg9[%c0_7, %c0_8] : memref<8x128xf32, #tpu.memory_space<vmem>>, vector<1x128xf32>
      %cst = arith.constant 5.000000e-01 : f32
      %26 = vector.broadcast %cst : f32 to vector<1x128xf32>
      %27 = arith.mulf %25, %26 : vector<1x128xf32>
      %28 = vector.broadcast %27 : vector<1x128xf32> to vector<8x128xf32>
      %29 = arith.subf %24, %28 : vector<8x128xf32>
      %30 = vector.broadcast %8 : vector<8x1xf32> to vector<8x128xf32>
      %31 = arith.mulf %29, %30 : vector<8x128xf32>
      %c1 = arith.constant 1 : index
      %c0_9 = arith.constant 0 : index
      %32 = vector.load %arg9[%c1, %c0_9] : memref<8x128xf32, #tpu.memory_space<vmem>>, vector<1x128xf32>
      %33 = arith.mulf %31, %31 : vector<8x128xf32>
      %cst_10 = arith.constant dense<0.000000e+00> : vector<128xf32>
      %34 = vector.multi_reduction <add>, %33, %cst_10 [0] : vector<8x128xf32> to vector<128xf32>
      %35 = vector.shape_cast %34 : vector<128xf32> to vector<1x128xf32>
      %36 = arith.addf %32, %35 : vector<1x128xf32>
      %c1_11 = arith.constant 1 : index
      %c0_12 = arith.constant 0 : index
      %37 = vector.load %arg9[%c1_11, %c0_12] : memref<8x128xf32, #tpu.memory_space<vmem>>, vector<1x128xf32>
      tpu.vector_store %arg9[%c1_11, %c0_12], %36 {strides = array<i32>} : memref<8x128xf32, #tpu.memory_space<vmem>>, vector<1x128xf32>,
    } else {
    }
    %c2_i32_5 = arith.constant 2 : i32
    %20 = arith.cmpi eq, %arg0, %c2_i32_5 : i32
    %21 = arith.extui %20 : i1 to i32
    %c0_i32_6 = arith.constant 0 : i32
    %22 = arith.cmpi ne, %21, %c0_i32_6 : i32
    scf.if %22 {
      %23 = arith.index_cast %1 : i32 to index
      %c0 = arith.constant 0 : index
      %24 = vector.load %arg8[%23, %c0] : memref<8x128xf32, #tpu.memory_space<vmem>>, vector<8x128xf32>
      %c0_7 = arith.constant 0 : index
      %c0_8 = arith.constant 0 : index
      %25 = vector.load %arg9[%c0_7, %c0_8] : memref<8x128xf32, #tpu.memory_space<vmem>>, vector<1x128xf32>
      %cst = arith.constant 5.000000e-01 : f32
      %26 = vector.broadcast %cst : f32 to vector<1x128xf32>
      %27 = arith.mulf %25, %26 : vector<1x128xf32>
      %c1 = arith.constant 1 : index
      %c0_9 = arith.constant 0 : index
      %28 = vector.load %arg9[%c1, %c0_9] : memref<8x128xf32, #tpu.memory_space<vmem>>, vector<1x128xf32>
      %cst_10 = arith.constant 5.000000e-01 : f32
      %29 = vector.broadcast %cst_10 : f32 to vector<1x128xf32>
      %30 = arith.mulf %28, %29 : vector<1x128xf32>
      %31 = vector.broadcast %27 : vector<1x128xf32> to vector<8x128xf32>
      %32 = arith.subf %24, %31 : vector<8x128xf32>
      %cst_11 = arith.constant 9.99999974E-6 : f32
      %33 = vector.broadcast %cst_11 : f32 to vector<1x128xf32>
      %34 = arith.addf %30, %33 : vector<1x128xf32>
      %35 = math.rsqrt %34 : vector<1x128xf32>
      %36 = vector.broadcast %35 : vector<1x128xf32> to vector<8x128xf32>
      %37 = arith.mulf %32, %36 : vector<8x128xf32>
      %c1_12 = arith.constant 1 : index
      %c0_13 = arith.constant 0 : index
      %38 = vector.load %arg4[%c1_12, %c0_13] : memref<8x128xf32, #tpu.memory_space<vmem>>, vector<1x128xf32>
      %39 = vector.broadcast %38 : vector<1x128xf32> to vector<8x128xf32>
      %40 = arith.mulf %37, %39 : vector<8x128xf32>
      %c2 = arith.constant 2 : index
      %c0_14 = arith.constant 0 : index
      %41 = vector.load %arg4[%c2, %c0_14] : memref<8x128xf32, #tpu.memory_space<vmem>>, vector<1x128xf32>
      %42 = vector.broadcast %41 : vector<1x128xf32> to vector<8x128xf32>
      %43 = arith.addf %40, %42 : vector<8x128xf32>
      %cst_15 = arith.constant 0.000000e+00 : f32
      %44 = vector.broadcast %cst_15 : f32 to vector<8x128xf32>
      %45 = arith.maximumf %43, %44 : vector<8x128xf32>
      %46 = arith.truncf %45 : vector<8x128xf32> to vector<8x128xbf16>
      %c0_16 = arith.constant 0 : index
      %c0_17 = arith.constant 0 : index
      %47 = vector.load %arg5[%c0_16, %c0_17] : memref<128x128xbf16, #tpu.memory_space<vmem>>, vector<128x128xbf16>
      %cst_18 = arith.constant dense<0.000000e+00> : vector<8x128xf32>
      %48 = tpu.matmul %46, %47, %cst_18 {dimension_numbers = #tpu.dot_dimension_numbers<[1], [0], [0], [1], [0, 0, 1, 1], [], []>} : vector<8x128xbf16>, vector<128x128xbf16>, vector<8x128xf32> -> vector<8x128xf32>
      %c0_19 = arith.constant 0 : index
      %c0_20 = arith.constant 0 : index
      %49 = vector.load %arg6[%c0_19, %c0_20] : memref<8x128xf32, #tpu.memory_space<vmem>>, vector<1x128xf32>
      %50 = vector.broadcast %49 : vector<1x128xf32> to vector<8x128xf32>
      %51 = arith.addf %48, %50 : vector<8x128xf32>
      %c0_21 = arith.constant 0 : index
      %c0_22 = arith.constant 0 : index
      %52 = vector.load %arg7[%c0_21, %c0_22] : memref<8x128xf32, #tpu.memory_space<vmem>>, vector<8x128xf32>
      tpu.vector_store %arg7[%c0_21, %c0_22], %51 {strides = array<i32>} : memref<8x128xf32, #tpu.memory_space<vmem>>, vector<8x128xf32>,
    } else {
    }
    return
  }
  func.func @transform_0(%arg0: i32, %arg1: i32) -> (i32, i32) {
    %c0_i32 = arith.constant 0 : i32
    %0 = arith.cmpi eq, %arg0, %c0_i32 : i32
    %c0_i32_0 = arith.constant 0 : i32
    %1 = arith.select %0, %arg1, %c0_i32_0 : i32
    %c0_i32_1 = arith.constant 0 : i32
    %c0_i32_2 = arith.constant 0 : i32
    return %1, %c0_i32_1 : i32, i32
  }
  func.func @transform_1(%arg0: i32, %arg1: i32) -> (i32, i32) {
    %c0_i32 = arith.constant 0 : i32
    %c0_i32_0 = arith.constant 0 : i32
    %c0_i32_1 = arith.constant 0 : i32
    return %c0_i32, %c0_i32_0 : i32, i32
  }
  func.func @transform_2(%arg0: i32, %arg1: i32) -> (i32, i32) {
    %c0_i32 = arith.constant 0 : i32
    %c0_i32_0 = arith.constant 0 : i32
    %c0_i32_1 = arith.constant 0 : i32
    return %c0_i32, %c0_i32_0 : i32, i32
  }
  func.func @transform_3(%arg0: i32, %arg1: i32) -> (i32, i32) {
    %c0_i32 = arith.constant 0 : i32
    %c0_i32_0 = arith.constant 0 : i32
    %c0_i32_1 = arith.constant 0 : i32
    return %c0_i32, %c0_i32_0 : i32, i32
  }
  func.func @transform_4(%arg0: i32, %arg1: i32) -> (i32, i32) {
    %c0_i32 = arith.constant 0 : i32
    %c0_i32_0 = arith.constant 0 : i32
    %c0_i32_1 = arith.constant 0 : i32
    return %c0_i32, %c0_i32_0 : i32, i32
  }
  func.func @transform_5(%arg0: i32, %arg1: i32) -> (i32, i32) {
    %c2_i32 = arith.constant 2 : i32
    %0 = arith.cmpi eq, %arg0, %c2_i32 : i32
    %c0_i32 = arith.constant 0 : i32
    %1 = arith.select %0, %arg1, %c0_i32 : i32
    %c0_i32_0 = arith.constant 0 : i32
    %c0_i32_1 = arith.constant 0 : i32
    return %1, %c0_i32_0 : i32, i32
  }
}

</mosaic_0001>

<llo_original>
// kernel: simclr_forward.2
$region0: #{simclr_forward.2}
  #allocation0 [shape = 'u32[]', space=smem, size = 0x4, offset = 0x4, fixed_abs, tag = 'smem constant byte address 0x4 - core index']
  #allocation1 [shape = 'u32[144,128]{1,0:T(1,128)}', space=vmem, size = 0x12000, scoped, tag = 'internal scratch']
  %s0 = inlined_call_operand.vmem [shape: bf16[8,256,128], index: 0, kind: input, shape index: {}]
  %s1 = inlined_call_operand.vmem [shape: bf16[128,128], index: 1, kind: input, shape index: {}]
  %s2 = inlined_call_operand.vmem [shape: f32[1,128], index: 2, kind: input, shape index: {}]
  %s3 = inlined_call_operand.vmem [shape: f32[8,128], index: 3, kind: output, shape index: {}]
  %s4 = sld [smem:[#allocation0]]
  $region22: #{simclr_forward.2} parent=0
    _
  %s6 = ssub.s32 1, %s4
  %s7 = scalar_select 0, %s6, %s4
  // Predicated region
  $region2: #{simclr_forward.2} parent=0 // pred_check
    _
  $region3: #{simclr_forward.2} parent=0 // pred_check_branch
    %9 = sbr.rel (0) target = $region5
  $region4: #{simclr_forward.2} parent=0 // pred_region
    _
  $region5: #{simclr_forward.2} parent=0 // pred_fallthru
    _
  // Predicated region
  $region6: #{simclr_forward.2} parent=0 // pred_check
    _
  $region7: #{simclr_forward.2} parent=0 // pred_check_branch
    %11 = sbr.rel (0) target = $region9
  $region8: #{simclr_forward.2} parent=0 // pred_region
    _
  $region9: #{simclr_forward.2} parent=0 // pred_fallthru
    _
  // Predicated region
  $region10: #{simclr_forward.2} parent=0 // pred_check
    _
  $region11: #{simclr_forward.2} parent=0 // pred_check_branch
    %13 = sbr.rel (0) target = $region13
  $region12: #{simclr_forward.2} parent=0 // pred_region
    _
  $region13: #{simclr_forward.2} parent=0 // pred_fallthru
    _
  %v15 = vld [vmem:[%s0] sm:$0xf]
  %v16 = vld [vmem:[%s0 + $0x4] sm:$0xf]
  %v17 = vld [vmem:[%s0 + $0x8] sm:$0xf]
  %v18 = vld [vmem:[%s0 + $0xc] sm:$0xf]
  %v19 = vld [vmem:[%s0 + $0x10] sm:$0xf]
  %v20 = vld [vmem:[%s0 + $0x14] sm:$0xf]
  %v21 = vld [vmem:[%s0 + $0x18] sm:$0xf]
  %v22 = vld [vmem:[%s0 + $0x1c] sm:$0xf]
  %v23 = vld [vmem:[%s0 + $0x20] sm:$0xf]
  %v24 = vld [vmem:[%s0 + $0x24] sm:$0xf]
  %v25 = vld [vmem:[%s0 + $0x28] sm:$0xf]
  %v26 = vld [vmem:[%s0 + $0x2c] sm:$0xf]
  %v27 = vld [vmem:[%s0 + $0x30] sm:$0xf]
  %v28 = vld [vmem:[%s0 + $0x34] sm:$0xf]
  %v29 = vld [vmem:[%s0 + $0x38] sm:$0xf]
  %v30 = vld [vmem:[%s0 + $0x3c] sm:$0xf]
  %v31 = vld [vmem:[%s0 + $0x40] sm:$0xf]
  %v32 = vld [vmem:[%s0 + $0x44] sm:$0xf]
  %v33 = vld [vmem:[%s0 + $0x48] sm:$0xf]
  %v34 = vld [vmem:[%s0 + $0x4c] sm:$0xf]
  %v35 = vld [vmem:[%s0 + $0x50] sm:$0xf]
  %v36 = vld [vmem:[%s0 + $0x54] sm:$0xf]
  %v37 = vld [vmem:[%s0 + $0x58] sm:$0xf]
  %v38 = vld [vmem:[%s0 + $0x5c] sm:$0xf]
  %v39 = vld [vmem:[%s0 + $0x60] sm:$0xf]
  %v40 = vld [vmem:[%s0 + $0x64] sm:$0xf]
  %v41 = vld [vmem:[%s0 + $0x68] sm:$0xf]
  %v42 = vld [vmem:[%s0 + $0x6c] sm:$0xf]
  %v43 = vld [vmem:[%s0 + $0x70] sm:$0xf]
  %v44 = vld [vmem:[%s0 + $0x74] sm:$0xf]
  %v45 = vld [vmem:[%s0 + $0x78] sm:$0xf]
  %v46 = vld [vmem:[%s0 + $0x7c] sm:$0xf]
  %v47 = vld [vmem:[%s0 + $0x80] sm:$0xf]
  %v48 = vld [vmem:[%s0 + $0x84] sm:$0xf]
  %v49 = vld [vmem:[%s0 + $0x88] sm:$0xf]
  %v50 = vld [vmem:[%s0 + $0x8c] sm:$0xf]
  %v51 = vld [vmem:[%s0 + $0x90] sm:$0xf]
  %v52 = vld [vmem:[%s0 + $0x94] sm:$0xf]
  %v53 = vld [vmem:[%s0 + $0x98] sm:$0xf]
  %v54 = vld [vmem:[%s0 + $0x9c] sm:$0xf]
  %v55 = vld [vmem:[%s0 + $0xa0] sm:$0xf]
  %v56 = vld [vmem:[%s0 + $0xa4] sm:$0xf]
  %v57 = vld [vmem:[%s0 + $0xa8] sm:$0xf]
  %v58 = vld [vmem:[%s0 + $0xac] sm:$0xf]
  %v59 = vld [vmem:[%s0 + $0xb0] sm:$0xf]
  %v60 = vld [vmem:[%s0 + $0xb4] sm:$0xf]
  %v61 = vld [vmem:[%s0 + $0xb8] sm:$0xf]
  %v62 = vld [vmem:[%s0 + $0xbc] sm:$0xf]
  %v63 = vld [vmem:[%s0 + $0xc0] sm:$0xf]
  %v64 = vld [vmem:[%s0 + $0xc4] sm:$0xf]
  %v65 = vld [vmem:[%s0 + $0xc8] sm:$0xf]
  %v66 = vld [vmem:[%s0 + $0xcc] sm:$0xf]
  %v67 = vld [vmem:[%s0 + $0xd0] sm:$0xf]
  %v68 = vld [vmem:[%s0 + $0xd4] sm:$0xf]
  %v69 = vld [vmem:[%s0 + $0xd8] sm:$0xf]
  %v70 = vld [vmem:[%s0 + $0xdc] sm:$0xf]
  %v71 = vld [vmem:[%s0 + $0xe0] sm:$0xf]
  %v72 = vld [vmem:[%s0 + $0xe4] sm:$0xf]
  %v73 = vld [vmem:[%s0 + $0xe8] sm:$0xf]
  %v74 = vld [vmem:[%s0 + $0xec] sm:$0xf]
  %v75 = vld [vmem:[%s0 + $0xf0] sm:$0xf]
  %v76 = vld [vmem:[%s0 + $0xf4] sm:$0xf]
  %v77 = vld [vmem:[%s0 + $0xf8] sm:$0xf]
  %v78 = vld [vmem:[%s0 + $0xfc] sm:$0xf]
  %v79 = vld [vmem:[%s0 + $0x100] sm:$0xf]
  %v80 = vld [vmem:[%s0 + $0x104] sm:$0xf]
  %v81 = vld [vmem:[%s0 + $0x108] sm:$0xf]
  %v82 = vld [vmem:[%s0 + $0x10c] sm:$0xf]
  %v83 = vld [vmem:[%s0 + $0x110] sm:$0xf]
  %v84 = vld [vmem:[%s0 + $0x114] sm:$0xf]
  %v85 = vld [vmem:[%s0 + $0x118] sm:$0xf]
  %v86 = vld [vmem:[%s0 + $0x11c] sm:$0xf]
  %v87 = vld [vmem:[%s0 + $0x120] sm:$0xf]
  %v88 = vld [vmem:[%s0 + $0x124] sm:$0xf]
  %v89 = vld [vmem:[%s0 + $0x128] sm:$0xf]
  %v90 = vld [vmem:[%s0 + $0x12c] sm:$0xf]
  %v91 = vld [vmem:[%s0 + $0x130] sm:$0xf]
  %v92 = vld [vmem:[%s0 + $0x134] sm:$0xf]
  %v93 = vld [vmem:[%s0 + $0x138] sm:$0xf]
  %v94 = vld [vmem:[%s0 + $0x13c] sm:$0xf]
  %v95 = vld [vmem:[%s0 + $0x140] sm:$0xf]
  %v96 = vld [vmem:[%s0 + $0x144] sm:$0xf]
  %v97 = vld [vmem:[%s0 + $0x148] sm:$0xf]
  %v98 = vld [vmem:[%s0 + $0x14c] sm:$0xf]
  %v99 = vld [vmem:[%s0 + $0x150] sm:$0xf]
  %v100 = vld [vmem:[%s0 + $0x154] sm:$0xf]
  %v101 = vld [vmem:[%s0 + $0x158] sm:$0xf]
  %v102 = vld [vmem:[%s0 + $0x15c] sm:$0xf]
  %v103 = vld [vmem:[%s0 + $0x160] sm:$0xf]
  %v104 = vld [vmem:[%s0 + $0x164] sm:$0xf]
  %v105 = vld [vmem:[%s0 + $0x168] sm:$0xf]
  %v106 = vld [vmem:[%s0 + $0x16c] sm:$0xf]
  %v107 = vld [vmem:[%s0 + $0x170] sm:$0xf]
  %v108 = vld [vmem:[%s0 + $0x174] sm:$0xf]
  %v109 = vld [vmem:[%s0 + $0x178] sm:$0xf]
  %v110 = vld [vmem:[%s0 + $0x17c] sm:$0xf]
  %v111 = vld [vmem:[%s0 + $0x180] sm:$0xf]
  %v112 = vld [vmem:[%s0 + $0x184] sm:$0xf]
  %v113 = vld [vmem:[%s0 + $0x188] sm:$0xf]
  %v114 = vld [vmem:[%s0 + $0x18c] sm:$0xf]
  %v115 = vld [vmem:[%s0 + $0x190] sm:$0xf]
  %v116 = vld [vmem:[%s0 + $0x194] sm:$0xf]
  %v117 = vld [vmem:[%s0 + $0x198] sm:$0xf]
  %v118 = vld [vmem:[%s0 + $0x19c] sm:$0xf]
  %v119 = vld [vmem:[%s0 + $0x1a0] sm:$0xf]
  %v120 = vld [vmem:[%s0 + $0x1a4] sm:$0xf]
  %v121 = vld [vmem:[%s0 + $0x1a8] sm:$0xf]
  %v122 = vld [vmem:[%s0 + $0x1ac] sm:$0xf]
  %v123 = vld [vmem:[%s0 + $0x1b0] sm:$0xf]
  %v124 = vld [vmem:[%s0 + $0x1b4] sm:$0xf]
  %v125 = vld [vmem:[%s0 + $0x1b8] sm:$0xf]
  %v126 = vld [vmem:[%s0 + $0x1bc] sm:$0xf]
  %v127 = vld [vmem:[%s0 + $0x1c0] sm:$0xf]
  %v128 = vld [vmem:[%s0 + $0x1c4] sm:$0xf]
  %v129 = vld [vmem:[%s0 + $0x1c8] sm:$0xf]
  %v130 = vld [vmem:[%s0 + $0x1cc] sm:$0xf]
  %v131 = vld [vmem:[%s0 + $0x1d0] sm:$0xf]
  %v132 = vld [vmem:[%s0 + $0x1d4] sm:$0xf]
  %v133 = vld [vmem:[%s0 + $0x1d8] sm:$0xf]
  %v134 = vld [vmem:[%s0 + $0x1dc] sm:$0xf]
  %v135 = vld [vmem:[%s0 + $0x1e0] sm:$0xf]
  %v136 = vld [vmem:[%s0 + $0x1e4] sm:$0xf]
  %v137 = vld [vmem:[%s0 + $0x1e8] sm:$0xf]
  %v138 = vld [vmem:[%s0 + $0x1ec] sm:$0xf]
  %v139 = vld [vmem:[%s0 + $0x1f0] sm:$0xf]
  %v140 = vld [vmem:[%s0 + $0x1f4] sm:$0xf]
  %v141 = vld [vmem:[%s0 + $0x1f8] sm:$0xf]
  %v142 = vld [vmem:[%s0 + $0x1fc] sm:$0xf]
  %v143 = vld [vmem:[%s0 + $0x200] sm:$0xf]
  %v144 = vld [vmem:[%s0 + $0x204] sm:$0xf]
  %v145 = vld [vmem:[%s0 + $0x208] sm:$0xf]
  %v146 = vld [vmem:[%s0 + $0x20c] sm:$0xf]
  %v147 = vld [vmem:[%s0 + $0x210] sm:$0xf]
  %v148 = vld [vmem:[%s0 + $0x214] sm:$0xf]
  %v149 = vld [vmem:[%s0 + $0x218] sm:$0xf]
  %v150 = vld [vmem:[%s0 + $0x21c] sm:$0xf]
  %v151 = vld [vmem:[%s0 + $0x220] sm:$0xf]
  %v152 = vld [vmem:[%s0 + $0x224] sm:$0xf]
  %v153 = vld [vmem:[%s0 + $0x228] sm:$0xf]
  %v154 = vld [vmem:[%s0 + $0x22c] sm:$0xf]
  %v155 = vld [vmem:[%s0 + $0x230] sm:$0xf]
  %v156 = vld [vmem:[%s0 + $0x234] sm:$0xf]
  %v157 = vld [vmem:[%s0 + $0x238] sm:$0xf]
  %v158 = vld [vmem:[%s0 + $0x23c] sm:$0xf]
  %v159 = vld [vmem:[%s0 + $0x240] sm:$0xf]
  %v160 = vld [vmem:[%s0 + $0x244] sm:$0xf]
  %v161 = vld [vmem:[%s0 + $0x248] sm:$0xf]
  %v162 = vld [vmem:[%s0 + $0x24c] sm:$0xf]
  %v163 = vld [vmem:[%s0 + $0x250] sm:$0xf]
  %v164 = vld [vmem:[%s0 + $0x254] sm:$0xf]
  %v165 = vld [vmem:[%s0 + $0x258] sm:$0xf]
  %v166 = vld [vmem:[%s0 + $0x25c] sm:$0xf]
  %v167 = vld [vmem:[%s0 + $0x260] sm:$0xf]
  %v168 = vld [vmem:[%s0 + $0x264] sm:$0xf]
  %v169 = vld [vmem:[%s0 + $0x268] sm:$0xf]
  %v170 = vld [vmem:[%s0 + $0x26c] sm:$0xf]
  %v171 = vld [vmem:[%s0 + $0x270] sm:$0xf]
  %v172 = vld [vmem:[%s0 + $0x274] sm:$0xf]
  %v173 = vld [vmem:[%s0 + $0x278] sm:$0xf]
  %v174 = vld [vmem:[%s0 + $0x27c] sm:$0xf]
  %v175 = vld [vmem:[%s0 + $0x280] sm:$0xf]
  %v176 = vld [vmem:[%s0 + $0x284] sm:$0xf]
  %v177 = vld [vmem:[%s0 + $0x288] sm:$0xf]
  %v178 = vld [vmem:[%s0 + $0x28c] sm:$0xf]
  %v179 = vld [vmem:[%s0 + $0x290] sm:$0xf]
  %v180 = vld [vmem:[%s0 + $0x294] sm:$0xf]
  %v181 = vld [vmem:[%s0 + $0x298] sm:$0xf]
  %v182 = vld [vmem:[%s0 + $0x29c] sm:$0xf]
  %v183 = vld [vmem:[%s0 + $0x2a0] sm:$0xf]
  %v184 = vld [vmem:[%s0 + $0x2a4] sm:$0xf]
  %v185 = vld [vmem:[%s0 + $0x2a8] sm:$0xf]
  %v186 = vld [vmem:[%s0 + $0x2ac] sm:$0xf]
  %v187 = vld [vmem:[%s0 + $0x2b0] sm:$0xf]
  %v188 = vld [vmem:[%s0 + $0x2b4] sm:$0xf]
  %v189 = vld [vmem:[%s0 + $0x2b8] sm:$0xf]
  %v190 = vld [vmem:[%s0 + $0x2bc] sm:$0xf]
  %v191 = vld [vmem:[%s0 + $0x2c0] sm:$0xf]
  %v192 = vld [vmem:[%s0 + $0x2c4] sm:$0xf]
  %v193 = vld [vmem:[%s0 + $0x2c8] sm:$0xf]
  %v194 = vld [vmem:[%s0 + $0x2cc] sm:$0xf]
  %v195 = vld [vmem:[%s0 + $0x2d0] sm:$0xf]
  %v196 = vld [vmem:[%s0 + $0x2d4] sm:$0xf]
  %v197 = vld [vmem:[%s0 + $0x2d8] sm:$0xf]
  %v198 = vld [vmem:[%s0 + $0x2dc] sm:$0xf]
  %v199 = vld [vmem:[%s0 + $0x2e0] sm:$0xf]
  %v200 = vld [vmem:[%s0 + $0x2e4] sm:$0xf]
  %v201 = vld [vmem:[%s0 + $0x2e8] sm:$0xf]
  %v202 = vld [vmem:[%s0 + $0x2ec] sm:$0xf]
  %v203 = vld [vmem:[%s0 + $0x2f0] sm:$0xf]
  %v204 = vld [vmem:[%s0 + $0x2f4] sm:$0xf]
  %v205 = vld [vmem:[%s0 + $0x2f8] sm:$0xf]
  %v206 = vld [vmem:[%s0 + $0x2fc] sm:$0xf]
  %v207 = vld [vmem:[%s0 + $0x300] sm:$0xf]
  %v208 = vld [vmem:[%s0 + $0x304] sm:$0xf]
  %v209 = vld [vmem:[%s0 + $0x308] sm:$0xf]
  %v210 = vld [vmem:[%s0 + $0x30c] sm:$0xf]
  %v211 = vld [vmem:[%s0 + $0x310] sm:$0xf]
  %v212 = vld [vmem:[%s0 + $0x314] sm:$0xf]
  %v213 = vld [vmem:[%s0 + $0x318] sm:$0xf]
  %v214 = vld [vmem:[%s0 + $0x31c] sm:$0xf]
  %v215 = vld [vmem:[%s0 + $0x320] sm:$0xf]
  %v216 = vld [vmem:[%s0 + $0x324] sm:$0xf]
  %v217 = vld [vmem:[%s0 + $0x328] sm:$0xf]
  %v218 = vld [vmem:[%s0 + $0x32c] sm:$0xf]
  %v219 = vld [vmem:[%s0 + $0x330] sm:$0xf]
  %v220 = vld [vmem:[%s0 + $0x334] sm:$0xf]
  %v221 = vld [vmem:[%s0 + $0x338] sm:$0xf]
  %v222 = vld [vmem:[%s0 + $0x33c] sm:$0xf]
  %v223 = vld [vmem:[%s0 + $0x340] sm:$0xf]
  %v224 = vld [vmem:[%s0 + $0x344] sm:$0xf]
  %v225 = vld [vmem:[%s0 + $0x348] sm:$0xf]
  %v226 = vld [vmem:[%s0 + $0x34c] sm:$0xf]
  %v227 = vld [vmem:[%s0 + $0x350] sm:$0xf]
  %v228 = vld [vmem:[%s0 + $0x354] sm:$0xf]
  %v229 = vld [vmem:[%s0 + $0x358] sm:$0xf]
  %v230 = vld [vmem:[%s0 + $0x35c] sm:$0xf]
  %v231 = vld [vmem:[%s0 + $0x360] sm:$0xf]
  %v232 = vld [vmem:[%s0 + $0x364] sm:$0xf]
  %v233 = vld [vmem:[%s0 + $0x368] sm:$0xf]
  %v234 = vld [vmem:[%s0 + $0x36c] sm:$0xf]
  %v235 = vld [vmem:[%s0 + $0x370] sm:$0xf]
  %v236 = vld [vmem:[%s0 + $0x374] sm:$0xf]
  %v237 = vld [vmem:[%s0 + $0x378] sm:$0xf]
  %v238 = vld [vmem:[%s0 + $0x37c] sm:$0xf]
  %v239 = vld [vmem:[%s0 + $0x380] sm:$0xf]
  %v240 = vld [vmem:[%s0 + $0x384] sm:$0xf]
  %v241 = vld [vmem:[%s0 + $0x388] sm:$0xf]
  %v242 = vld [vmem:[%s0 + $0x38c] sm:$0xf]
  %v243 = vld [vmem:[%s0 + $0x390] sm:$0xf]
  %v244 = vld [vmem:[%s0 + $0x394] sm:$0xf]
  %v245 = vld [vmem:[%s0 + $0x398] sm:$0xf]
  %v246 = vld [vmem:[%s0 + $0x39c] sm:$0xf]
  %v247 = vld [vmem:[%s0 + $0x3a0] sm:$0xf]
  %v248 = vld [vmem:[%s0 + $0x3a4] sm:$0xf]
  %v249 = vld [vmem:[%s0 + $0x3a8] sm:$0xf]
  %v250 = vld [vmem:[%s0 + $0x3ac] sm:$0xf]
  %v251 = vld [vmem:[%s0 + $0x3b0] sm:$0xf]
  %v252 = vld [vmem:[%s0 + $0x3b4] sm:$0xf]
  %v253 = vld [vmem:[%s0 + $0x3b8] sm:$0xf]
  %v254 = vld [vmem:[%s0 + $0x3bc] sm:$0xf]
  %v255 = vld [vmem:[%s0 + $0x3c0] sm:$0xf]
  %v256 = vld [vmem:[%s0 + $0x3c4] sm:$0xf]
  %v257 = vld [vmem:[%s0 + $0x3c8] sm:$0xf]
  %v258 = vld [vmem:[%s0 + $0x3cc] sm:$0xf]
  %v259 = vld [vmem:[%s0 + $0x3d0] sm:$0xf]
  %v260 = vld [vmem:[%s0 + $0x3d4] sm:$0xf]
  %v261 = vld [vmem:[%s0 + $0x3d8] sm:$0xf]
  %v262 = vld [vmem:[%s0 + $0x3dc] sm:$0xf]
  %v263 = vld [vmem:[%s0 + $0x3e0] sm:$0xf]
  %v264 = vld [vmem:[%s0 + $0x3e4] sm:$0xf]
  %v265 = vld [vmem:[%s0 + $0x3e8] sm:$0xf]
  %v266 = vld [vmem:[%s0 + $0x3ec] sm:$0xf]
  %v267 = vld [vmem:[%s0 + $0x3f0] sm:$0xf]
  %v268 = vld [vmem:[%s0 + $0x3f4] sm:$0xf]
  %v269 = vld [vmem:[%s0 + $0x3f8] sm:$0xf]
  %v270 = vld [vmem:[%s0 + $0x3fc] sm:$0xf]
  %v271 = vld [vmem:[%s1] sm:$0xf]
  %v272 = vld [vmem:[%s1 + $0x4] sm:$0xf]
  %v273 = vld [vmem:[%s1 + $0x8] sm:$0xf]
  %v274 = vld [vmem:[%s1 + $0xc] sm:$0xf]
  %v275 = vld [vmem:[%s1 + $0x10] sm:$0xf]
  %v276 = vld [vmem:[%s1 + $0x14] sm:$0xf]
  %v277 = vld [vmem:[%s1 + $0x18] sm:$0xf]
  %v278 = vld [vmem:[%s1 + $0x1c] sm:$0xf]
  %v279 = vld [vmem:[%s1 + $0x20] sm:$0xf]
  %v280 = vld [vmem:[%s1 + $0x24] sm:$0xf]
  %v281 = vld [vmem:[%s1 + $0x28] sm:$0xf]
  %v282 = vld [vmem:[%s1 + $0x2c] sm:$0xf]
  %v283 = vld [vmem:[%s1 + $0x30] sm:$0xf]
  %v284 = vld [vmem:[%s1 + $0x34] sm:$0xf]
  %v285 = vld [vmem:[%s1 + $0x38] sm:$0xf]
  %v286 = vld [vmem:[%s1 + $0x3c] sm:$0xf]
  %v287 = vld [vmem:[%s2] sm:$0x1]
  %v289 = vlaneseq
  %v290 = vshrl.u32 %v289, 7
  %v291 = vsub.s32 0, %v290
  %v292 = vrot.slane %v287, %v291
  %v550 = vunpack.c.l.b16 %v15
  %v551 = vunpack.c.l.b16 %v16
  %v552 = vunpack.c.l.b16 %v17
  %v553 = vunpack.c.l.b16 %v18
  %v554 = vunpack.c.l.b16 %v19
  %v555 = vunpack.c.l.b16 %v20
  %v556 = vunpack.c.l.b16 %v21
  %v557 = vunpack.c.l.b16 %v22
  %v558 = vunpack.c.l.b16 %v23
  %v559 = vunpack.c.l.b16 %v24
  %v560 = vunpack.c.l.b16 %v25
  %v561 = vunpack.c.l.b16 %v26
  %v562 = vunpack.c.l.b16 %v27
  %v563 = vunpack.c.l.b16 %v28
  %v564 = vunpack.c.l.b16 %v29
  %v565 = vunpack.c.l.b16 %v30
  %v566 = vunpack.c.l.b16 %v31
  %v567 = vunpack.c.l.b16 %v32
  %v568 = vunpack.c.l.b16 %v33
  %v569 = vunpack.c.l.b16 %v34
  %v570 = vunpack.c.l.b16 %v35
  %v571 = vunpack.c.l.b16 %v36
  %v572 = vunpack.c.l.b16 %v37
  %v573 = vunpack.c.l.b16 %v38
  %v574 = vunpack.c.l.b16 %v39
  %v575 = vunpack.c.l.b16 %v40
  %v576 = vunpack.c.l.b16 %v41
  %v577 = vunpack.c.l.b16 %v42
  %v578 = vunpack.c.l.b16 %v43
  %v579 = vunpack.c.l.b16 %v44
  %v580 = vunpack.c.l.b16 %v45
  %v581 = vunpack.c.l.b16 %v46
  %v582 = vunpack.c.l.b16 %v47
  %v583 = vunpack.c.l.b16 %v48
  %v584 = vunpack.c.l.b16 %v49
  %v585 = vunpack.c.l.b16 %v50
  %v586 = vunpack.c.l.b16 %v51
  %v587 = vunpack.c.l.b16 %v52
  %v588 = vunpack.c.l.b16 %v53
  %v589 = vunpack.c.l.b16 %v54
  %v590 = vunpack.c.l.b16 %v55
  %v591 = vunpack.c.l.b16 %v56
  %v592 = vunpack.c.l.b16 %v57
  %v593 = vunpack.c.l.b16 %v58
  %v594 = vunpack.c.l.b16 %v59
  %v595 = vunpack.c.l.b16 %v60
  %v596 = vunpack.c.l.b16 %v61
  %v597 = vunpack.c.l.b16 %v62
  %v598 = vunpack.c.l.b16 %v63
  %v599 = vunpack.c.l.b16 %v64
  %v600 = vunpack.c.l.b16 %v65
  %v601 = vunpack.c.l.b16 %v66
  %v602 = vunpack.c.l.b16 %v67
  %v603 = vunpack.c.l.b16 %v68
  %v604 = vunpack.c.l.b16 %v69
  %v605 = vunpack.c.l.b16 %v70
  %v606 = vunpack.c.l.b16 %v71
  %v607 = vunpack.c.l.b16 %v72
  %v608 = vunpack.c.l.b16 %v73
  %v609 = vunpack.c.l.b16 %v74
  %v610 = vunpack.c.l.b16 %v75
  %v611 = vunpack.c.l.b16 %v76
  %v612 = vunpack.c.l.b16 %v77
  %v613 = vunpack.c.l.b16 %v78
  %v614 = vunpack.c.l.b16 %v79
  %v615 = vunpack.c.l.b16 %v80
  %v616 = vunpack.c.l.b16 %v81
  %v617 = vunpack.c.l.b16 %v82
  %v618 = vunpack.c.l.b16 %v83
  %v619 = vunpack.c.l.b16 %v84
  %v620 = vunpack.c.l.b16 %v85
  %v621 = vunpack.c.l.b16 %v86
  %v622 = vunpack.c.l.b16 %v87
  %v623 = vunpack.c.l.b16 %v88
  %v624 = vunpack.c.l.b16 %v89
  %v625 = vunpack.c.l.b16 %v90
  %v626 = vunpack.c.l.b16 %v91
  %v627 = vunpack.c.l.b16 %v92
  %v628 = vunpack.c.l.b16 %v93
  %v629 = vunpack.c.l.b16 %v94
  %v630 = vunpack.c.l.b16 %v95
  %v631 = vunpack.c.l.b16 %v96
  %v632 = vunpack.c.l.b16 %v97
  %v633 = vunpack.c.l.b16 %v98
  %v634 = vunpack.c.l.b16 %v99
  %v635 = vunpack.c.l.b16 %v100
  %v636 = vunpack.c.l.b16 %v101
  %v637 = vunpack.c.l.b16 %v102
  %v638 = vunpack.c.l.b16 %v103
  %v639 = vunpack.c.l.b16 %v104
  %v640 = vunpack.c.l.b16 %v105
  %v641 = vunpack.c.l.b16 %v106
  %v642 = vunpack.c.l.b16 %v107
  %v643 = vunpack.c.l.b16 %v108
  %v644 = vunpack.c.l.b16 %v109
  %v645 = vunpack.c.l.b16 %v110
  %v646 = vunpack.c.l.b16 %v111
  %v647 = vunpack.c.l.b16 %v112
  %v648 = vunpack.c.l.b16 %v113
  %v649 = vunpack.c.l.b16 %v114
  %v650 = vunpack.c.l.b16 %v115
  %v651 = vunpack.c.l.b16 %v116
  %v652 = vunpack.c.l.b16 %v117
  %v653 = vunpack.c.l.b16 %v118
  %v654 = vunpack.c.l.b16 %v119
  %v655 = vunpack.c.l.b16 %v120
  %v656 = vunpack.c.l.b16 %v121
  %v657 = vunpack.c.l.b16 %v122
  %v658 = vunpack.c.l.b16 %v123
  %v659 = vunpack.c.l.b16 %v124
  %v660 = vunpack.c.l.b16 %v125
  %v661 = vunpack.c.l.b16 %v126
  %v662 = vunpack.c.l.b16 %v127
  %v663 = vunpack.c.l.b16 %v128
  %v664 = vunpack.c.l.b16 %v129
  %v665 = vunpack.c.l.b16 %v130
  %v666 = vunpack.c.l.b16 %v131
  %v667 = vunpack.c.l.b16 %v132
  %v668 = vunpack.c.l.b16 %v133
  %v669 = vunpack.c.l.b16 %v134
  %v670 = vunpack.c.l.b16 %v135
  %v671 = vunpack.c.l.b16 %v136
  %v672 = vunpack.c.l.b16 %v137
  %v673 = vunpack.c.l.b16 %v138
  %v674 = vunpack.c.l.b16 %v139
  %v675 = vunpack.c.l.b16 %v140
  %v676 = vunpack.c.l.b16 %v141
  %v677 = vunpack.c.l.b16 %v142
  %v678 = vunpack.c.l.b16 %v143
  %v679 = vunpack.c.l.b16 %v144
  %v680 = vunpack.c.l.b16 %v145
  %v681 = vunpack.c.l.b16 %v146
  %v682 = vunpack.c.l.b16 %v147
  %v683 = vunpack.c.l.b16 %v148
  %v684 = vunpack.c.l.b16 %v149
  %v685 = vunpack.c.l.b16 %v150
  %v686 = vunpack.c.l.b16 %v151
  %v687 = vunpack.c.l.b16 %v152
  %v688 = vunpack.c.l.b16 %v153
  %v689 = vunpack.c.l.b16 %v154
  %v690 = vunpack.c.l.b16 %v155
  %v691 = vunpack.c.l.b16 %v156
  %v692 = vunpack.c.l.b16 %v157
  %v693 = vunpack.c.l.b16 %v158
  %v694 = vunpack.c.l.b16 %v159
  %v695 = vunpack.c.l.b16 %v160
  %v696 = vunpack.c.l.b16 %v161
  %v697 = vunpack.c.l.b16 %v162
  %v698 = vunpack.c.l.b16 %v163
  %v699 = vunpack.c.l.b16 %v164
  %v700 = vunpack.c.l.b16 %v165
  %v701 = vunpack.c.l.b16 %v166
  %v702 = vunpack.c.l.b16 %v167
  %v703 = vunpack.c.l.b16 %v168
  %v704 = vunpack.c.l.b16 %v169
  %v705 = vunpack.c.l.b16 %v170
  %v706 = vunpack.c.l.b16 %v171
  %v707 = vunpack.c.l.b16 %v172
  %v708 = vunpack.c.l.b16 %v173
  %v709 = vunpack.c.l.b16 %v174
  %v710 = vunpack.c.l.b16 %v175
  %v711 = vunpack.c.l.b16 %v176
  %v712 = vunpack.c.l.b16 %v177
  %v713 = vunpack.c.l.b16 %v178
  %v714 = vunpack.c.l.b16 %v179
  %v715 = vunpack.c.l.b16 %v180
  %v716 = vunpack.c.l.b16 %v181
  %v717 = vunpack.c.l.b16 %v182
  %v718 = vunpack.c.l.b16 %v183
  %v719 = vunpack.c.l.b16 %v184
  %v720 = vunpack.c.l.b16 %v185
  %v721 = vunpack.c.l.b16 %v186
  %v722 = vunpack.c.l.b16 %v187
  %v723 = vunpack.c.l.b16 %v188
  %v724 = vunpack.c.l.b16 %v189
  %v725 = vunpack.c.l.b16 %v190
  %v726 = vunpack.c.l.b16 %v191
  %v727 = vunpack.c.l.b16 %v192
  %v728 = vunpack.c.l.b16 %v193
  %v729 = vunpack.c.l.b16 %v194
  %v730 = vunpack.c.l.b16 %v195
  %v731 = vunpack.c.l.b16 %v196
  %v732 = vunpack.c.l.b16 %v197
  %v733 = vunpack.c.l.b16 %v198
  %v734 = vunpack.c.l.b16 %v199
  %v735 = vunpack.c.l.b16 %v200
  %v736 = vunpack.c.l.b16 %v201
  %v737 = vunpack.c.l.b16 %v202
  %v738 = vunpack.c.l.b16 %v203
  %v739 = vunpack.c.l.b16 %v204
  %v740 = vunpack.c.l.b16 %v205
  %v741 = vunpack.c.l.b16 %v206
  %v742 = vunpack.c.l.b16 %v207
  %v743 = vunpack.c.l.b16 %v208
  %v744 = vunpack.c.l.b16 %v209
  %v745 = vunpack.c.l.b16 %v210
  %v746 = vunpack.c.l.b16 %v211
  %v747 = vunpack.c.l.b16 %v212
  %v748 = vunpack.c.l.b16 %v213
  %v749 = vunpack.c.l.b16 %v214
  %v750 = vunpack.c.l.b16 %v215
  %v751 = vunpack.c.l.b16 %v216
  %v752 = vunpack.c.l.b16 %v217
  %v753 = vunpack.c.l.b16 %v218
  %v754 = vunpack.c.l.b16 %v219
  %v755 = vunpack.c.l.b16 %v220
  %v756 = vunpack.c.l.b16 %v221
  %v757 = vunpack.c.l.b16 %v222
  %v758 = vunpack.c.l.b16 %v223
  %v759 = vunpack.c.l.b16 %v224
  %v760 = vunpack.c.l.b16 %v225
  %v761 = vunpack.c.l.b16 %v226
  %v762 = vunpack.c.l.b16 %v227
  %v763 = vunpack.c.l.b16 %v228
  %v764 = vunpack.c.l.b16 %v229
  %v765 = vunpack.c.l.b16 %v230
  %v766 = vunpack.c.l.b16 %v231
  %v767 = vunpack.c.l.b16 %v232
  %v768 = vunpack.c.l.b16 %v233
  %v769 = vunpack.c.l.b16 %v234
  %v770 = vunpack.c.l.b16 %v235
  %v771 = vunpack.c.l.b16 %v236
  %v772 = vunpack.c.l.b16 %v237
  %v773 = vunpack.c.l.b16 %v238
  %v774 = vunpack.c.l.b16 %v239
  %v775 = vunpack.c.l.b16 %v240
  %v776 = vunpack.c.l.b16 %v241
  %v777 = vunpack.c.l.b16 %v242
  %v778 = vunpack.c.l.b16 %v243
  %v779 = vunpack.c.l.b16 %v244
  %v780 = vunpack.c.l.b16 %v245
  %v781 = vunpack.c.l.b16 %v246
  %v782 = vunpack.c.l.b16 %v247
  %v783 = vunpack.c.l.b16 %v248
  %v784 = vunpack.c.l.b16 %v249
  %v785 = vunpack.c.l.b16 %v250
  %v786 = vunpack.c.l.b16 %v251
  %v787 = vunpack.c.l.b16 %v252
  %v788 = vunpack.c.l.b16 %v253
  %v789 = vunpack.c.l.b16 %v254
  %v790 = vunpack.c.l.b16 %v255
  %v791 = vunpack.c.l.b16 %v256
  %v792 = vunpack.c.l.b16 %v257
  %v793 = vunpack.c.l.b16 %v258
  %v794 = vunpack.c.l.b16 %v259
  %v795 = vunpack.c.l.b16 %v260
  %v796 = vunpack.c.l.b16 %v261
  %v797 = vunpack.c.l.b16 %v262
  %v798 = vunpack.c.l.b16 %v263
  %v799 = vunpack.c.l.b16 %v264
  %v800 = vunpack.c.l.b16 %v265
  %v801 = vunpack.c.l.b16 %v266
  %v802 = vunpack.c.l.b16 %v267
  %v803 = vunpack.c.l.b16 %v268
  %v804 = vunpack.c.l.b16 %v269
  %v805 = vunpack.c.l.b16 %v270
  %v806 = vpack.c.b16 %v551, %v550
  %v807 = vpack.c.b16 %v553, %v552
  %v808 = vpack.c.b16 %v555, %v554
  %v809 = vpack.c.b16 %v557, %v556
  %v810 = vpack.c.b16 %v559, %v558
  %v811 = vpack.c.b16 %v561, %v560
  %v812 = vpack.c.b16 %v563, %v562
  %v813 = vpack.c.b16 %v565, %v564
  %v814 = vpack.c.b16 %v567, %v566
  %v815 = vpack.c.b16 %v569, %v568
  %v816 = vpack.c.b16 %v571, %v570
  %v817 = vpack.c.b16 %v573, %v572
  %v818 = vpack.c.b16 %v575, %v574
  %v819 = vpack.c.b16 %v577, %v576
  %v820 = vpack.c.b16 %v579, %v578
  %v821 = vpack.c.b16 %v581, %v580
  %v822 = vpack.c.b16 %v583, %v582
  %v823 = vpack.c.b16 %v585, %v584
  %v824 = vpack.c.b16 %v587, %v586
  %v825 = vpack.c.b16 %v589, %v588
  %v826 = vpack.c.b16 %v591, %v590
  %v827 = vpack.c.b16 %v593, %v592
  %v828 = vpack.c.b16 %v595, %v594
  %v829 = vpack.c.b16 %v597, %v596
  %v830 = vpack.c.b16 %v599, %v598
  %v831 = vpack.c.b16 %v601, %v600
  %v832 = vpack.c.b16 %v603, %v602
  %v833 = vpack.c.b16 %v605, %v604
  %v834 = vpack.c.b16 %v607, %v606
  %v835 = vpack.c.b16 %v609, %v608
  %v836 = vpack.c.b16 %v611, %v610
  %v837 = vpack.c.b16 %v613, %v612
  %v838 = vpack.c.b16 %v615, %v614
  %v839 = vpack.c.b16 %v617, %v616
  %v840 = vpack.c.b16 %v619, %v618
  %v841 = vpack.c.b16 %v621, %v620
  %v842 = vpack.c.b16 %v623, %v622
  %v843 = vpack.c.b16 %v625, %v624
  %v844 = vpack.c.b16 %v627, %v626
  %v845 = vpack.c.b16 %v629, %v628
  %v846 = vpack.c.b16 %v631, %v630
  %v847 = vpack.c.b16 %v633, %v632
  %v848 = vpack.c.b16 %v635, %v634
  %v849 = vpack.c.b16 %v637, %v636
  %v850 = vpack.c.b16 %v639, %v638
  %v851 = vpack.c.b16 %v641, %v640
  %v852 = vpack.c.b16 %v643, %v642
  %v853 = vpack.c.b16 %v645, %v644
  %v854 = vpack.c.b16 %v647, %v646
  %v855 = vpack.c.b16 %v649, %v648
  %v856 = vpack.c.b16 %v651, %v650
  %v857 = vpack.c.b16 %v653, %v652
  %v858 = vpack.c.b16 %v655, %v654
  %v859 = vpack.c.b16 %v657, %v656
  %v860 = vpack.c.b16 %v659, %v658
  %v861 = vpack.c.b16 %v661, %v660
  %v862 = vpack.c.b16 %v663, %v662
  %v863 = vpack.c.b16 %v665, %v664
  %v864 = vpack.c.b16 %v667, %v666
  %v865 = vpack.c.b16 %v669, %v668
  %v866 = vpack.c.b16 %v671, %v670
  %v867 = vpack.c.b16 %v673, %v672
  %v868 = vpack.c.b16 %v675, %v674
  %v869 = vpack.c.b16 %v677, %v676
  %v870 = vpack.c.b16 %v679, %v678
  %v871 = vpack.c.b16 %v681, %v680
  %v872 = vpack.c.b16 %v683, %v682
  %v873 = vpack.c.b16 %v685, %v684
  %v874 = vpack.c.b16 %v687, %v686
  %v875 = vpack.c.b16 %v689, %v688
  %v876 = vpack.c.b16 %v691, %v690
  %v877 = vpack.c.b16 %v693, %v692
  %v878 = vpack.c.b16 %v695, %v694
  %v879 = vpack.c.b16 %v697, %v696
  %v880 = vpack.c.b16 %v699, %v698
  %v881 = vpack.c.b16 %v701, %v700
  %v882 = vpack.c.b16 %v703, %v702
  %v883 = vpack.c.b16 %v705, %v704
  %v884 = vpack.c.b16 %v707, %v706
  %v885 = vpack.c.b16 %v709, %v708
  %v886 = vpack.c.b16 %v711, %v710
  %v887 = vpack.c.b16 %v713, %v712
  %v888 = vpack.c.b16 %v715, %v714
  %v889 = vpack.c.b16 %v717, %v716
  %v890 = vpack.c.b16 %v719, %v718
  %v891 = vpack.c.b16 %v721, %v720
  %v892 = vpack.c.b16 %v723, %v722
  %v893 = vpack.c.b16 %v725, %v724
  %v894 = vpack.c.b16 %v727, %v726
  %v895 = vpack.c.b16 %v729, %v728
  %v896 = vpack.c.b16 %v731, %v730
  %v897 = vpack.c.b16 %v733, %v732
  %v898 = vpack.c.b16 %v735, %v734
  %v899 = vpack.c.b16 %v737, %v736
  %v900 = vpack.c.b16 %v739, %v738
  %v901 = vpack.c.b16 %v741, %v740
  %v902 = vpack.c.b16 %v743, %v742
  %v903 = vpack.c.b16 %v745, %v744
  %v904 = vpack.c.b16 %v747, %v746
  %v905 = vpack.c.b16 %v749, %v748
  %v906 = vpack.c.b16 %v751, %v750
  %v907 = vpack.c.b16 %v753, %v752
  %v908 = vpack.c.b16 %v755, %v754
  %v909 = vpack.c.b16 %v757, %v756
  %v910 = vpack.c.b16 %v759, %v758
  %v911 = vpack.c.b16 %v761, %v760
  %v912 = vpack.c.b16 %v763, %v762
  %v913 = vpack.c.b16 %v765, %v764
  %v914 = vpack.c.b16 %v767, %v766
  %v915 = vpack.c.b16 %v769, %v768
  %v916 = vpack.c.b16 %v771, %v770
  %v917 = vpack.c.b16 %v773, %v772
  %v918 = vpack.c.b16 %v775, %v774
  %v919 = vpack.c.b16 %v777, %v776
  %v920 = vpack.c.b16 %v779, %v778
  %v921 = vpack.c.b16 %v781, %v780
  %v922 = vpack.c.b16 %v783, %v782
  %v923 = vpack.c.b16 %v785, %v784
  %v924 = vpack.c.b16 %v787, %v786
  %v925 = vpack.c.b16 %v789, %v788
  %v926 = vpack.c.b16 %v791, %v790
  %v927 = vpack.c.b16 %v793, %v792
  %v928 = vpack.c.b16 %v795, %v794
  %v929 = vpack.c.b16 %v797, %v796
  %v930 = vpack.c.b16 %v799, %v798
  %v931 = vpack.c.b16 %v801, %v800
  %v932 = vpack.c.b16 %v803, %v802
  %v933 = vpack.c.b16 %v805, %v804
  %v1078 = vunpack.c.l.b16 %v271
  %v1079 = vunpack.c.l.b16 %v272
  %v1080 = vunpack.c.l.b16 %v273
  %v1081 = vunpack.c.l.b16 %v274
  %v1082 = vunpack.c.l.b16 %v275
  %v1083 = vunpack.c.l.b16 %v276
  %v1084 = vunpack.c.l.b16 %v277
  %v1085 = vunpack.c.l.b16 %v278
  %v1086 = vunpack.c.l.b16 %v279
  %v1087 = vunpack.c.l.b16 %v280
  %v1088 = vunpack.c.l.b16 %v281
  %v1089 = vunpack.c.l.b16 %v282
  %v1090 = vunpack.c.l.b16 %v283
  %v1091 = vunpack.c.l.b16 %v284
  %v1092 = vunpack.c.l.b16 %v285
  %v1093 = vunpack.c.l.b16 %v286
  %v1094 = vpack.c.b16 %v1079, %v1078
  %v1095 = vpack.c.b16 %v1081, %v1080
  %v1096 = vpack.c.b16 %v1083, %v1082
  %v1097 = vpack.c.b16 %v1085, %v1084
  %v1098 = vpack.c.b16 %v1087, %v1086
  %v1099 = vpack.c.b16 %v1089, %v1088
  %v1100 = vpack.c.b16 %v1091, %v1090
  %v1101 = vpack.c.b16 %v1093, %v1092
  %1110 = vmatprep.subr.bf16.mxu0 0
  %1111 = vmatpush1.bf16.msra.mxu0 %v1094
  %1112 = vmatprep.subr.bf16.mxu0 0
  %1113 = vmatpush1.bf16.msra.mxu0 %v1095
  %1114 = vmatprep.subr.bf16.mxu0 0
  %1115 = vmatpush1.bf16.msra.mxu0 %v1096
  %1116 = vmatprep.subr.bf16.mxu0 0
  %1117 = vmatpush1.bf16.msra.mxu0 %v1097
  %1118 = vmatprep.subr.bf16.mxu0 0
  %1119 = vmatpush1.bf16.msra.mxu0 %v1098
  %1120 = vmatprep.subr.bf16.mxu0 0
  %1121 = vmatpush1.bf16.msra.mxu0 %v1099
  %1122 = vmatprep.subr.bf16.mxu0 0
  %1123 = vmatpush1.bf16.msra.mxu0 %v1100
  %1124 = vmatprep.subr.bf16.mxu0 0
  %1125 = vmatpush1.bf16.msra.mxu0 %v1101
  %1126 = vmatprep.subr.bf16.mxu0 0
  %1127 = vmatpush1.bf16.msra.mxu0 0
  %1128 = vmatprep.subr.bf16.mxu0 0
  %1129 = vmatpush1.bf16.msra.mxu0 0
  %1130 = vmatprep.subr.bf16.mxu0 0
  %1131 = vmatpush1.bf16.msra.mxu0 0
  %1132 = vmatprep.subr.bf16.mxu0 0
  %1133 = vmatpush1.bf16.msra.mxu0 0
  %1134 = vmatprep.subr.bf16.mxu0 0
  %1135 = vmatpush1.bf16.msra.mxu0 0
  %1136 = vmatprep.subr.bf16.mxu0 0
  %1137 = vmatpush1.bf16.msra.mxu0 0
  %1138 = vmatprep.subr.bf16.mxu0 0
  %1139 = vmatpush1.bf16.msra.mxu0 0
  %1140 = vmatprep.subr.bf16.mxu0 0
  %1141 = vmatpush1.bf16.msra.mxu0 0
  %1142 = vmatprep.mubr.bf16.mxu0 0
  %1143 = vmatmul.mubr.bf16.gmra.mrb[0].mxu0 %v806
  %v1144 = vpop.f32.mrb[0].mxu0
  %v1145 = vadd.f32 %v292, %v1144
  %v1146 = vpop.f32.mrb[0].mxu0
  %v1147 = vpop.f32.mrb[0].mxu0
  %v1148 = vadd.f32 %v292, %v1147
  %v1149 = vpop.f32.mrb[0].mxu0
  %1150 = vmatprep.mubr.bf16.mxu0 0
  %1151 = vmatmul.mubr.bf16.gmra.mrb[0].mxu0 %v807
  %v1152 = vpop.f32.mrb[0].mxu0
  %v1153 = vadd.f32 %v292, %v1152
  %v1154 = vpop.f32.mrb[0].mxu0
  %v1155 = vpop.f32.mrb[0].mxu0
  %v1156 = vadd.f32 %v292, %v1155
  %v1157 = vpop.f32.mrb[0].mxu0
  %1158 = vmatprep.mubr.bf16.mxu0 0
  %1159 = vmatmul.mubr.bf16.gmra.mrb[0].mxu0 %v808
  %v1160 = vpop.f32.mrb[0].mxu0
  %v1161 = vadd.f32 %v292, %v1160
  %v1162 = vpop.f32.mrb[0].mxu0
  %v1163 = vpop.f32.mrb[0].mxu0
  %v1164 = vadd.f32 %v292, %v1163
  %v1165 = vpop.f32.mrb[0].mxu0
  %1166 = vmatprep.mubr.bf16.mxu0 0
  %1167 = vmatmul.mubr.bf16.gmra.mrb[0].mxu0 %v809
  %v1168 = vpop.f32.mrb[0].mxu0
  %v1169 = vadd.f32 %v292, %v1168
  %v1170 = vpop.f32.mrb[0].mxu0
  %v1171 = vpop.f32.mrb[0].mxu0
  %v1172 = vadd.f32 %v292, %v1171
  %v1173 = vpop.f32.mrb[0].mxu0
  %1174 = vmatprep.mubr.bf16.mxu0 0
  %1175 = vmatmul.mubr.bf16.gmra.mrb[0].mxu0 %v810
  %v1176 = vpop.f32.mrb[0].mxu0
  %v1177 = vadd.f32 %v292, %v1176
  %v1178 = vpop.f32.mrb[0].mxu0
  %v1179 = vpop.f32.mrb[0].mxu0
  %v1180 = vadd.f32 %v292, %v1179
  %v1181 = vpop.f32.mrb[0].mxu0
  %1182 = vmatprep.mubr.bf16.mxu0 0
  %1183 = vmatmul.mubr.bf16.gmra.mrb[0].mxu0 %v811
  %v1184 = vpop.f32.mrb[0].mxu0
  %v1185 = vadd.f32 %v292, %v1184
  %v1186 = vpop.f32.mrb[0].mxu0
  %v1187 = vpop.f32.mrb[0].mxu0
  %v1188 = vadd.f32 %v292, %v1187
  %v1189 = vpop.f32.mrb[0].mxu0
  %1190 = vmatprep.mubr.bf16.mxu0 0
  %1191 = vmatmul.mubr.bf16.gmra.mrb[0].mxu0 %v812
  %v1192 = vpop.f32.mrb[0].mxu0
  %v1193 = vadd.f32 %v292, %v1192
  %v1194 = vpop.f32.mrb[0].mxu0
  %v1195 = vpop.f32.mrb[0].mxu0
  %v1196 = vadd.f32 %v292, %v1195
  %v1197 = vpop.f32.mrb[0].mxu0
  %1198 = vmatprep.mubr.bf16.mxu0 0
  %1199 = vmatmul.mubr.bf16.gmra.mrb[0].mxu0 %v813
  %v1200 = vpop.f32.mrb[0].mxu0
  %v1201 = vadd.f32 %v292, %v1200
  %v1202 = vpop.f32.mrb[0].mxu0
  %v1203 = vpop.f32.mrb[0].mxu0
  %v1204 = vadd.f32 %v292, %v1203
  %v1205 = vpop.f32.mrb[0].mxu0
  %1206 = vmatprep.mubr.bf16.mxu0 0
  %1207 = vmatmul.mubr.bf16.gmra.mrb[0].mxu0 %v814
  %v1208 = vpop.f32.mrb[0].mxu0
  %v1209 = vadd.f32 %v292, %v1208
  %v1210 = vpop.f32.mrb[0].mxu0
  %v1211 = vpop.f32.mrb[0].mxu0
  %v1212 = vadd.f32 %v292, %v1211
  %v1213 = vpop.f32.mrb[0].mxu0
  %1214 = vmatprep.mubr.bf16.mxu0 0
  %1215 = vmatmul.mubr.bf16.gmra.mrb[0].mxu0 %v815
  %v1216 = vpop.f32.mrb[0].mxu0
  %v1217 = vadd.f32 %v292, %v1216
  %v1218 = vpop.f32.mrb[0].mxu0
  %v1219 = vpop.f32.mrb[0].mxu0
  %v1220 = vadd.f32 %v292, %v1219
  %v1221 = vpop.f32.mrb[0].mxu0
  %1222 = vmatprep.mubr.bf16.mxu0 0
  %1223 = vmatmul.mubr.bf16.gmra.mrb[0].mxu0 %v816
  %v1224 = vpop.f32.mrb[0].mxu0
  %v1225 = vadd.f32 %v292, %v1224
  %v1226 = vpop.f32.mrb[0].mxu0
  %v1227 = vpop.f32.mrb[0].mxu0
  %v1228 = vadd.f32 %v292, %v1227
  %v1229 = vpop.f32.mrb[0].mxu0
  %1230 = vmatprep.mubr.bf16.mxu0 0
  %1231 = vmatmul.mubr.bf16.gmra.mrb[0].mxu0 %v817
  %v1232 = vpop.f32.mrb[0].mxu0
  %v1233 = vadd.f32 %v292, %v1232
  %v1234 = vpop.f32.mrb[0].mxu0
  %v1235 = vpop.f32.mrb[0].mxu0
  %v1236 = vadd.f32 %v292, %v1235
  %v1237 = vpop.f32.mrb[0].mxu0
  %1238 = vmatprep.mubr.bf16.mxu0 0
  %1239 = vmatmul.mubr.bf16.gmra.mrb[0].mxu0 %v818
  %v1240 = vpop.f32.mrb[0].mxu0
  %v1241 = vadd.f32 %v292, %v1240
  %v1242 = vpop.f32.mrb[0].mxu0
  %v1243 = vpop.f32.mrb[0].mxu0
  %v1244 = vadd.f32 %v292, %v1243
  %v1245 = vpop.f32.mrb[0].mxu0
  %1246 = vmatprep.mubr.bf16.mxu0 0
  %1247 = vmatmul.mubr.bf16.gmra.mrb[0].mxu0 %v819
  %v1248 = vpop.f32.mrb[0].mxu0
  %v1249 = vadd.f32 %v292, %v1248
  %v1250 = vpop.f32.mrb[0].mxu0
  %v1251 = vpop.f32.mrb[0].mxu0
  %v1252 = vadd.f32 %v292, %v1251
  %v1253 = vpop.f32.mrb[0].mxu0
  %1254 = vmatprep.mubr.bf16.mxu0 0
  %1255 = vmatmul.mubr.bf16.gmra.mrb[0].mxu0 %v820
  %v1256 = vpop.f32.mrb[0].mxu0
  %v1257 = vadd.f32 %v292, %v1256
  %v1258 = vpop.f32.mrb[0].mxu0
  %v1259 = vpop.f32.mrb[0].mxu0
  %v1260 = vadd.f32 %v292, %v1259
  %v1261 = vpop.f32.mrb[0].mxu0
  %1262 = vmatprep.mubr.bf16.mxu0 0
  %1263 = vmatmul.mubr.bf16.gmra.mrb[0].mxu0 %v821
  %v1264 = vpop.f32.mrb[0].mxu0
  %v1265 = vadd.f32 %v292, %v1264
  %v1266 = vpop.f32.mrb[0].mxu0
  %v1267 = vpop.f32.mrb[0].mxu0
  %v1268 = vadd.f32 %v292, %v1267
  %v1269 = vpop.f32.mrb[0].mxu0
  %1270 = vmatprep.mubr.bf16.mxu0 0
  %1271 = vmatmul.mubr.bf16.gmra.mrb[0].mxu0 %v822
  %v1272 = vpop.f32.mrb[0].mxu0
  %v1273 = vadd.f32 %v292, %v1272
  %v1274 = vpop.f32.mrb[0].mxu0
  %v1275 = vpop.f32.mrb[0].mxu0
  %v1276 = vadd.f32 %v292, %v1275
  %v1277 = vpop.f32.mrb[0].mxu0
  %1278 = vmatprep.mubr.bf16.mxu0 0
  %1279 = vmatmul.mubr.bf16.gmra.mrb[0].mxu0 %v823
  %v1280 = vpop.f32.mrb[0].mxu0
  %v1281 = vadd.f32 %v292, %v1280
  %v1282 = vpop.f32.mrb[0].mxu0
  %v1283 = vpop.f32.mrb[0].mxu0
  %v1284 = vadd.f32 %v292, %v1283
  %v1285 = vpop.f32.mrb[0].mxu0
  %1286 = vmatprep.mubr.bf16.mxu0 0
  %1287 = vmatmul.mubr.bf16.gmra.mrb[0].mxu0 %v824
  %v1288 = vpop.f32.mrb[0].mxu0
  %v1289 = vadd.f32 %v292, %v1288
  %v1290 = vpop.f32.mrb[0].mxu0
  %v1291 = vpop.f32.mrb[0].mxu0
  %v1292 = vadd.f32 %v292, %v1291
  %v1293 = vpop.f32.mrb[0].mxu0
  %1294 = vmatprep.mubr.bf16.mxu0 0
  %1295 = vmatmul.mubr.bf16.gmra.mrb[0].mxu0 %v825
  %v1296 = vpop.f32.mrb[0].mxu0
  %v1297 = vadd.f32 %v292, %v1296
  %v1298 = vpop.f32.mrb[0].mxu0
  %v1299 = vpop.f32.mrb[0].mxu0
  %v1300 = vadd.f32 %v292, %v1299
  %v1301 = vpop.f32.mrb[0].mxu0
  %1302 = vmatprep.mubr.bf16.mxu0 0
  %1303 = vmatmul.mubr.bf16.gmra.mrb[0].mxu0 %v826
  %v1304 = vpop.f32.mrb[0].mxu0
  %v1305 = vadd.f32 %v292, %v1304
  %v1306 = vpop.f32.mrb[0].mxu0
  %v1307 = vpop.f32.mrb[0].mxu0
  %v1308 = vadd.f32 %v292, %v1307
  %v1309 = vpop.f32.mrb[0].mxu0
  %1310 = vmatprep.mubr.bf16.mxu0 0
  %1311 = vmatmul.mubr.bf16.gmra.mrb[0].mxu0 %v827
  %v1312 = vpop.f32.mrb[0].mxu0
  %v1313 = vadd.f32 %v292, %v1312
  %v1314 = vpop.f32.mrb[0].mxu0
  %v1315 = vpop.f32.mrb[0].mxu0
  %v1316 = vadd.f32 %v292, %v1315
  %v1317 = vpop.f32.mrb[0].mxu0
  %1318 = vmatprep.mubr.bf16.mxu0 0
  %1319 = vmatmul.mubr.bf16.gmra.mrb[0].mxu0 %v828
  %v1320 = vpop.f32.mrb[0].mxu0
  %v1321 = vadd.f32 %v292, %v1320
  %v1322 = vpop.f32.mrb[0].mxu0
  %v1323 = vpop.f32.mrb[0].mxu0
  %v1324 = vadd.f32 %v292, %v1323
  %v1325 = vpop.f32.mrb[0].mxu0
  %1326 = vmatprep.mubr.bf16.mxu0 0
  %1327 = vmatmul.mubr.bf16.gmra.mrb[0].mxu0 %v829
  %v1328 = vpop.f32.mrb[0].mxu0
  %v1329 = vadd.f32 %v292, %v1328
  %v1330 = vpop.f32.mrb[0].mxu0
  %v1331 = vpop.f32.mrb[0].mxu0
  %v1332 = vadd.f32 %v292, %v1331
  %v1333 = vpop.f32.mrb[0].mxu0
  %1334 = vmatprep.mubr.bf16.mxu0 0
  %1335 = vmatmul.mubr.bf16.gmra.mrb[0].mxu0 %v830
  %v1336 = vpop.f32.mrb[0].mxu0
  %v1337 = vadd.f32 %v292, %v1336
  %v1338 = vpop.f32.mrb[0].mxu0
  %v1339 = vpop.f32.mrb[0].mxu0
  %v1340 = vadd.f32 %v292, %v1339
  %v1341 = vpop.f32.mrb[0].mxu0
  %1342 = vmatprep.mubr.bf16.mxu0 0
  %1343 = vmatmul.mubr.bf16.gmra.mrb[0].mxu0 %v831
  %v1344 = vpop.f32.mrb[0].mxu0
  %v1345 = vadd.f32 %v292, %v1344
  %v1346 = vpop.f32.mrb[0].mxu0
  %v1347 = vpop.f32.mrb[0].mxu0
  %v1348 = vadd.f32 %v292, %v1347
  %v1349 = vpop.f32.mrb[0].mxu0
  %1350 = vmatprep.mubr.bf16.mxu0 0
  %1351 = vmatmul.mubr.bf16.gmra.mrb[0].mxu0 %v832
  %v1352 = vpop.f32.mrb[0].mxu0
  %v1353 = vadd.f32 %v292, %v1352
  %v1354 = vpop.f32.mrb[0].mxu0
  %v1355 = vpop.f32.mrb[0].mxu0
  %v1356 = vadd.f32 %v292, %v1355
  %v1357 = vpop.f32.mrb[0].mxu0
  %1358 = vmatprep.mubr.bf16.mxu0 0
  %1359 = vmatmul.mubr.bf16.gmra.mrb[0].mxu0 %v833
  %v1360 = vpop.f32.mrb[0].mxu0
  %v1361 = vadd.f32 %v292, %v1360
  %v1362 = vpop.f32.mrb[0].mxu0
  %v1363 = vpop.f32.mrb[0].mxu0
  %v1364 = vadd.f32 %v292, %v1363
  %v1365 = vpop.f32.mrb[0].mxu0
  %1366 = vmatprep.mubr.bf16.mxu0 0
  %1367 = vmatmul.mubr.bf16.gmra.mrb[0].mxu0 %v834
  %v1368 = vpop.f32.mrb[0].mxu0
  %v1369 = vadd.f32 %v292, %v1368
  %v1370 = vpop.f32.mrb[0].mxu0
  %v1371 = vpop.f32.mrb[0].mxu0
  %v1372 = vadd.f32 %v292, %v1371
  %v1373 = vpop.f32.mrb[0].mxu0
  %1374 = vmatprep.mubr.bf16.mxu0 0
  %1375 = vmatmul.mubr.bf16.gmra.mrb[0].mxu0 %v835
  %v1376 = vpop.f32.mrb[0].mxu0
  %v1377 = vadd.f32 %v292, %v1376
  %v1378 = vpop.f32.mrb[0].mxu0
  %v1379 = vpop.f32.mrb[0].mxu0
  %v1380 = vadd.f32 %v292, %v1379
  %v1381 = vpop.f32.mrb[0].mxu0
  %1382 = vmatprep.mubr.bf16.mxu0 0
  %1383 = vmatmul.mubr.bf16.gmra.mrb[0].mxu0 %v836
  %v1384 = vpop.f32.mrb[0].mxu0
  %v1385 = vadd.f32 %v292, %v1384
  %v1386 = vpop.f32.mrb[0].mxu0
  %v1387 = vpop.f32.mrb[0].mxu0
  %v1388 = vadd.f32 %v292, %v1387
  %v1389 = vpop.f32.mrb[0].mxu0
  %1390 = vmatprep.mubr.bf16.mxu0 0
  %1391 = vmatmul.mubr.bf16.gmra.mrb[0].mxu0 %v837
  %v1392 = vpop.f32.mrb[0].mxu0
  %v1393 = vadd.f32 %v292, %v1392
  %v1394 = vpop.f32.mrb[0].mxu0
  %v1395 = vpop.f32.mrb[0].mxu0
  %v1396 = vadd.f32 %v292, %v1395
  %v1397 = vpop.f32.mrb[0].mxu0
  %1398 = vmatprep.mubr.bf16.mxu0 0
  %1399 = vmatmul.mubr.bf16.gmra.mrb[0].mxu0 %v838
  %v1400 = vpop.f32.mrb[0].mxu0
  %v1401 = vadd.f32 %v292, %v1400
  %v1402 = vpop.f32.mrb[0].mxu0
  %v1403 = vpop.f32.mrb[0].mxu0
  %v1404 = vadd.f32 %v292, %v1403
  %v1405 = vpop.f32.mrb[0].mxu0
  %1406 = vmatprep.mubr.bf16.mxu0 0
  %1407 = vmatmul.mubr.bf16.gmra.mrb[0].mxu0 %v839
  %v1408 = vpop.f32.mrb[0].mxu0
  %v1409 = vadd.f32 %v292, %v1408
  %v1410 = vpop.f32.mrb[0].mxu0
  %v1411 = vpop.f32.mrb[0].mxu0
  %v1412 = vadd.f32 %v292, %v1411
  %v1413 = vpop.f32.mrb[0].mxu0
  %1414 = vmatprep.mubr.bf16.mxu0 0
  %1415 = vmatmul.mubr.bf16.gmra.mrb[0].mxu0 %v840
  %v1416 = vpop.f32.mrb[0].mxu0
  %v1417 = vadd.f32 %v292, %v1416
  %v1418 = vpop.f32.mrb[0].mxu0
  %v1419 = vpop.f32.mrb[0].mxu0
  %v1420 = vadd.f32 %v292, %v1419
  %v1421 = vpop.f32.mrb[0].mxu0
  %1422 = vmatprep.mubr.bf16.mxu0 0
  %1423 = vmatmul.mubr.bf16.gmra.mrb[0].mxu0 %v841
  %v1424 = vpop.f32.mrb[0].mxu0
  %v1425 = vadd.f32 %v292, %v1424
  %v1426 = vpop.f32.mrb[0].mxu0
  %v1427 = vpop.f32.mrb[0].mxu0
  %v1428 = vadd.f32 %v292, %v1427
  %v1429 = vpop.f32.mrb[0].mxu0
  %1430 = vmatprep.mubr.bf16.mxu0 0
  %1431 = vmatmul.mubr.bf16.gmra.mrb[0].mxu0 %v842
  %v1432 = vpop.f32.mrb[0].mxu0
  %v1433 = vadd.f32 %v292, %v1432
  %v1434 = vpop.f32.mrb[0].mxu0
  %v1435 = vpop.f32.mrb[0].mxu0
  %v1436 = vadd.f32 %v292, %v1435
  %v1437 = vpop.f32.mrb[0].mxu0
  %1438 = vmatprep.mubr.bf16.mxu0 0
  %1439 = vmatmul.mubr.bf16.gmra.mrb[0].mxu0 %v843
  %v1440 = vpop.f32.mrb[0].mxu0
  %v1441 = vadd.f32 %v292, %v1440
  %v1442 = vpop.f32.mrb[0].mxu0
  %v1443 = vpop.f32.mrb[0].mxu0
  %v1444 = vadd.f32 %v292, %v1443
  %v1445 = vpop.f32.mrb[0].mxu0
  %1446 = vmatprep.mubr.bf16.mxu0 0
  %1447 = vmatmul.mubr.bf16.gmra.mrb[0].mxu0 %v844
  %v1448 = vpop.f32.mrb[0].mxu0
  %v1449 = vadd.f32 %v292, %v1448
  %v1450 = vpop.f32.mrb[0].mxu0
  %v1451 = vpop.f32.mrb[0].mxu0
  %v1452 = vadd.f32 %v292, %v1451
  %v1453 = vpop.f32.mrb[0].mxu0
  %1454 = vmatprep.mubr.bf16.mxu0 0
  %1455 = vmatmul.mubr.bf16.gmra.mrb[0].mxu0 %v845
  %v1456 = vpop.f32.mrb[0].mxu0
  %v1457 = vadd.f32 %v292, %v1456
  %v1458 = vpop.f32.mrb[0].mxu0
  %v1459 = vpop.f32.mrb[0].mxu0
  %v1460 = vadd.f32 %v292, %v1459
  %v1461 = vpop.f32.mrb[0].mxu0
  %1462 = vmatprep.mubr.bf16.mxu0 0
  %1463 = vmatmul.mubr.bf16.gmra.mrb[0].mxu0 %v846
  %v1464 = vpop.f32.mrb[0].mxu0
  %v1465 = vadd.f32 %v292, %v1464
  %v1466 = vpop.f32.mrb[0].mxu0
  %v1467 = vpop.f32.mrb[0].mxu0
  %v1468 = vadd.f32 %v292, %v1467
  %v1469 = vpop.f32.mrb[0].mxu0
  %1470 = vmatprep.mubr.bf16.mxu0 0
  %1471 = vmatmul.mubr.bf16.gmra.mrb[0].mxu0 %v847
  %v1472 = vpop.f32.mrb[0].mxu0
  %v1473 = vadd.f32 %v292, %v1472
  %v1474 = vpop.f32.mrb[0].mxu0
  %v1475 = vpop.f32.mrb[0].mxu0
  %v1476 = vadd.f32 %v292, %v1475
  %v1477 = vpop.f32.mrb[0].mxu0
  %1478 = vmatprep.mubr.bf16.mxu0 0
  %1479 = vmatmul.mubr.bf16.gmra.mrb[0].mxu0 %v848
  %v1480 = vpop.f32.mrb[0].mxu0
  %v1481 = vadd.f32 %v292, %v1480
  %v1482 = vpop.f32.mrb[0].mxu0
  %v1483 = vpop.f32.mrb[0].mxu0
  %v1484 = vadd.f32 %v292, %v1483
  %v1485 = vpop.f32.mrb[0].mxu0
  %1486 = vmatprep.mubr.bf16.mxu0 0
  %1487 = vmatmul.mubr.bf16.gmra.mrb[0].mxu0 %v849
  %v1488 = vpop.f32.mrb[0].mxu0
  %v1489 = vadd.f32 %v292, %v1488
  %v1490 = vpop.f32.mrb[0].mxu0
  %v1491 = vpop.f32.mrb[0].mxu0
  %v1492 = vadd.f32 %v292, %v1491
  %v1493 = vpop.f32.mrb[0].mxu0
  %1494 = vmatprep.mubr.bf16.mxu0 0
  %1495 = vmatmul.mubr.bf16.gmra.mrb[0].mxu0 %v850
  %v1496 = vpop.f32.mrb[0].mxu0
  %v1497 = vadd.f32 %v292, %v1496
  %v1498 = vpop.f32.mrb[0].mxu0
  %v1499 = vpop.f32.mrb[0].mxu0
  %v1500 = vadd.f32 %v292, %v1499
  %v1501 = vpop.f32.mrb[0].mxu0
  %1502 = vmatprep.mubr.bf16.mxu0 0
  %1503 = vmatmul.mubr.bf16.gmra.mrb[0].mxu0 %v851
  %v1504 = vpop.f32.mrb[0].mxu0
  %v1505 = vadd.f32 %v292, %v1504
  %v1506 = vpop.f32.mrb[0].mxu0
  %v1507 = vpop.f32.mrb[0].mxu0
  %v1508 = vadd.f32 %v292, %v1507
  %v1509 = vpop.f32.mrb[0].mxu0
  %1510 = vmatprep.mubr.bf16.mxu0 0
  %1511 = vmatmul.mubr.bf16.gmra.mrb[0].mxu0 %v852
  %v1512 = vpop.f32.mrb[0].mxu0
  %v1513 = vadd.f32 %v292, %v1512
  %v1514 = vpop.f32.mrb[0].mxu0
  %v1515 = vpop.f32.mrb[0].mxu0
  %v1516 = vadd.f32 %v292, %v1515
  %v1517 = vpop.f32.mrb[0].mxu0
  %1518 = vmatprep.mubr.bf16.mxu0 0
  %1519 = vmatmul.mubr.bf16.gmra.mrb[0].mxu0 %v853
  %v1520 = vpop.f32.mrb[0].mxu0
  %v1521 = vadd.f32 %v292, %v1520
  %v1522 = vpop.f32.mrb[0].mxu0
  %v1523 = vpop.f32.mrb[0].mxu0
  %v1524 = vadd.f32 %v292, %v1523
  %v1525 = vpop.f32.mrb[0].mxu0
  %1526 = vmatprep.mubr.bf16.mxu0 0
  %1527 = vmatmul.mubr.bf16.gmra.mrb[0].mxu0 %v854
  %v1528 = vpop.f32.mrb[0].mxu0
  %v1529 = vadd.f32 %v292, %v1528
  %v1530 = vpop.f32.mrb[0].mxu0
  %v1531 = vpop.f32.mrb[0].mxu0
  %v1532 = vadd.f32 %v292, %v1531
  %v1533 = vpop.f32.mrb[0].mxu0
  %1534 = vmatprep.mubr.bf16.mxu0 0
  %1535 = vmatmul.mubr.bf16.gmra.mrb[0].mxu0 %v855
  %v1536 = vpop.f32.mrb[0].mxu0
  %v1537 = vadd.f32 %v292, %v1536
  %v1538 = vpop.f32.mrb[0].mxu0
  %v1539 = vpop.f32.mrb[0].mxu0
  %v1540 = vadd.f32 %v292, %v1539
  %v1541 = vpop.f32.mrb[0].mxu0
  %1542 = vmatprep.mubr.bf16.mxu0 0
  %1543 = vmatmul.mubr.bf16.gmra.mrb[0].mxu0 %v856
  %v1544 = vpop.f32.mrb[0].mxu0
  %v1545 = vadd.f32 %v292, %v1544
  %v1546 = vpop.f32.mrb[0].mxu0
  %v1547 = vpop.f32.mrb[0].mxu0
  %v1548 = vadd.f32 %v292, %v1547
  %v1549 = vpop.f32.mrb[0].mxu0
  %1550 = vmatprep.mubr.bf16.mxu0 0
  %1551 = vmatmul.mubr.bf16.gmra.mrb[0].mxu0 %v857
  %v1552 = vpop.f32.mrb[0].mxu0
  %v1553 = vadd.f32 %v292, %v1552
  %v1554 = vpop.f32.mrb[0].mxu0
  %v1555 = vpop.f32.mrb[0].mxu0
  %v1556 = vadd.f32 %v292, %v1555
  %v1557 = vpop.f32.mrb[0].mxu0
  %1558 = vmatprep.mubr.bf16.mxu0 0
  %1559 = vmatmul.mubr.bf16.gmra.mrb[0].mxu0 %v858
  %v1560 = vpop.f32.mrb[0].mxu0
  %v1561 = vadd.f32 %v292, %v1560
  %v1562 = vpop.f32.mrb[0].mxu0
  %v1563 = vpop.f32.mrb[0].mxu0
  %v1564 = vadd.f32 %v292, %v1563
  %v1565 = vpop.f32.mrb[0].mxu0
  %1566 = vmatprep.mubr.bf16.mxu0 0
  %1567 = vmatmul.mubr.bf16.gmra.mrb[0].mxu0 %v859
  %v1568 = vpop.f32.mrb[0].mxu0
  %v1569 = vadd.f32 %v292, %v1568
  %v1570 = vpop.f32.mrb[0].mxu0
  %v1571 = vpop.f32.mrb[0].mxu0
  %v1572 = vadd.f32 %v292, %v1571
  %v1573 = vpop.f32.mrb[0].mxu0
  %1574 = vmatprep.mubr.bf16.mxu0 0
  %1575 = vmatmul.mubr.bf16.gmra.mrb[0].mxu0 %v860
  %v1576 = vpop.f32.mrb[0].mxu0
  %v1577 = vadd.f32 %v292, %v1576
  %v1578 = vpop.f32.mrb[0].mxu0
  %v1579 = vpop.f32.mrb[0].mxu0
  %v1580 = vadd.f32 %v292, %v1579
  %v1581 = vpop.f32.mrb[0].mxu0
  %1582 = vmatprep.mubr.bf16.mxu0 0
  %1583 = vmatmul.mubr.bf16.gmra.mrb[0].mxu0 %v861
  %v1584 = vpop.f32.mrb[0].mxu0
  %v1585 = vadd.f32 %v292, %v1584
  %v1586 = vpop.f32.mrb[0].mxu0
  %v1587 = vpop.f32.mrb[0].mxu0
  %v1588 = vadd.f32 %v292, %v1587
  %v1589 = vpop.f32.mrb[0].mxu0
  %1590 = vmatprep.mubr.bf16.mxu0 0
  %1591 = vmatmul.mubr.bf16.gmra.mrb[0].mxu0 %v862
  %v1592 = vpop.f32.mrb[0].mxu0
  %v1593 = vadd.f32 %v292, %v1592
  %v1594 = vpop.f32.mrb[0].mxu0
  %v1595 = vpop.f32.mrb[0].mxu0
  %v1596 = vadd.f32 %v292, %v1595
  %v1597 = vpop.f32.mrb[0].mxu0
  %1598 = vmatprep.mubr.bf16.mxu0 0
  %1599 = vmatmul.mubr.bf16.gmra.mrb[0].mxu0 %v863
  %v1600 = vpop.f32.mrb[0].mxu0
  %v1601 = vadd.f32 %v292, %v1600
  %v1602 = vpop.f32.mrb[0].mxu0
  %v1603 = vpop.f32.mrb[0].mxu0
  %v1604 = vadd.f32 %v292, %v1603
  %v1605 = vpop.f32.mrb[0].mxu0
  %1606 = vmatprep.mubr.bf16.mxu0 0
  %1607 = vmatmul.mubr.bf16.gmra.mrb[0].mxu0 %v864
  %v1608 = vpop.f32.mrb[0].mxu0
  %v1609 = vadd.f32 %v292, %v1608
  %v1610 = vpop.f32.mrb[0].mxu0
  %v1611 = vpop.f32.mrb[0].mxu0
  %v1612 = vadd.f32 %v292, %v1611
  %v1613 = vpop.f32.mrb[0].mxu0
  %1614 = vmatprep.mubr.bf16.mxu0 0
  %1615 = vmatmul.mubr.bf16.gmra.mrb[0].mxu0 %v865
  %v1616 = vpop.f32.mrb[0].mxu0
  %v1617 = vadd.f32 %v292, %v1616
  %v1618 = vpop.f32.mrb[0].mxu0
  %v1619 = vpop.f32.mrb[0].mxu0
  %v1620 = vadd.f32 %v292, %v1619
  %v1621 = vpop.f32.mrb[0].mxu0
  %1622 = vmatprep.mubr.bf16.mxu0 0
  %1623 = vmatmul.mubr.bf16.gmra.mrb[0].mxu0 %v866
  %v1624 = vpop.f32.mrb[0].mxu0
  %v1625 = vadd.f32 %v292, %v1624
  %v1626 = vpop.f32.mrb[0].mxu0
  %v1627 = vpop.f32.mrb[0].mxu0
  %v1628 = vadd.f32 %v292, %v1627
  %v1629 = vpop.f32.mrb[0].mxu0
  %1630 = vmatprep.mubr.bf16.mxu0 0
  %1631 = vmatmul.mubr.bf16.gmra.mrb[0].mxu0 %v867
  %v1632 = vpop.f32.mrb[0].mxu0
  %v1633 = vadd.f32 %v292, %v1632
  %v1634 = vpop.f32.mrb[0].mxu0
  %v1635 = vpop.f32.mrb[0].mxu0
  %v1636 = vadd.f32 %v292, %v1635
  %v1637 = vpop.f32.mrb[0].mxu0
  %1638 = vmatprep.mubr.bf16.mxu0 0
  %1639 = vmatmul.mubr.bf16.gmra.mrb[0].mxu0 %v868
  %v1640 = vpop.f32.mrb[0].mxu0
  %v1641 = vadd.f32 %v292, %v1640
  %v1642 = vpop.f32.mrb[0].mxu0
  %v1643 = vpop.f32.mrb[0].mxu0
  %v1644 = vadd.f32 %v292, %v1643
  %v1645 = vpop.f32.mrb[0].mxu0
  %1646 = vmatprep.mubr.bf16.mxu0 0
  %1647 = vmatmul.mubr.bf16.gmra.mrb[0].mxu0 %v869
  %v1648 = vpop.f32.mrb[0].mxu0
  %v1649 = vadd.f32 %v292, %v1648
  %v1650 = vpop.f32.mrb[0].mxu0
  %v1651 = vpop.f32.mrb[0].mxu0
  %v1652 = vadd.f32 %v292, %v1651
  %v1653 = vpop.f32.mrb[0].mxu0
  %1654 = vmatprep.mubr.bf16.mxu0 0
  %1655 = vmatmul.mubr.bf16.gmra.mrb[0].mxu0 %v870
  %v1656 = vpop.f32.mrb[0].mxu0
  %v1657 = vadd.f32 %v292, %v1656
  %v1658 = vpop.f32.mrb[0].mxu0
  %v1659 = vpop.f32.mrb[0].mxu0
  %v1660 = vadd.f32 %v292, %v1659
  %v1661 = vpop.f32.mrb[0].mxu0
  %1662 = vmatprep.mubr.bf16.mxu0 0
  %1663 = vmatmul.mubr.bf16.gmra.mrb[0].mxu0 %v871
  %v1664 = vpop.f32.mrb[0].mxu0
  %v1665 = vadd.f32 %v292, %v1664
  %v1666 = vpop.f32.mrb[0].mxu0
  %v1667 = vpop.f32.mrb[0].mxu0
  %v1668 = vadd.f32 %v292, %v1667
  %v1669 = vpop.f32.mrb[0].mxu0
  %1670 = vmatprep.mubr.bf16.mxu0 0
  %1671 = vmatmul.mubr.bf16.gmra.mrb[0].mxu0 %v872
  %v1672 = vpop.f32.mrb[0].mxu0
  %v1673 = vadd.f32 %v292, %v1672
  %v1674 = vpop.f32.mrb[0].mxu0
  %v1675 = vpop.f32.mrb[0].mxu0
  %v1676 = vadd.f32 %v292, %v1675
  %v1677 = vpop.f32.mrb[0].mxu0
  %1678 = vmatprep.mubr.bf16.mxu0 0
  %1679 = vmatmul.mubr.bf16.gmra.mrb[0].mxu0 %v873
  %v1680 = vpop.f32.mrb[0].mxu0
  %v1681 = vadd.f32 %v292, %v1680
  %v1682 = vpop.f32.mrb[0].mxu0
  %v1683 = vpop.f32.mrb[0].mxu0
  %v1684 = vadd.f32 %v292, %v1683
  %v1685 = vpop.f32.mrb[0].mxu0
  %1686 = vmatprep.mubr.bf16.mxu0 0
  %1687 = vmatmul.mubr.bf16.gmra.mrb[0].mxu0 %v874
  %v1688 = vpop.f32.mrb[0].mxu0
  %v1689 = vadd.f32 %v292, %v1688
  %v1690 = vpop.f32.mrb[0].mxu0
  %v1691 = vpop.f32.mrb[0].mxu0
  %v1692 = vadd.f32 %v292, %v1691
  %v1693 = vpop.f32.mrb[0].mxu0
  %1694 = vmatprep.mubr.bf16.mxu0 0
  %1695 = vmatmul.mubr.bf16.gmra.mrb[0].mxu0 %v875
  %v1696 = vpop.f32.mrb[0].mxu0
  %v1697 = vadd.f32 %v292, %v1696
  %v1698 = vpop.f32.mrb[0].mxu0
  %v1699 = vpop.f32.mrb[0].mxu0
  %v1700 = vadd.f32 %v292, %v1699
  %v1701 = vpop.f32.mrb[0].mxu0
  %1702 = vmatprep.mubr.bf16.mxu0 0
  %1703 = vmatmul.mubr.bf16.gmra.mrb[0].mxu0 %v876
  %v1704 = vpop.f32.mrb[0].mxu0
  %v1705 = vadd.f32 %v292, %v1704
  %v1706 = vpop.f32.mrb[0].mxu0
  %v1707 = vpop.f32.mrb[0].mxu0
  %v1708 = vadd.f32 %v292, %v1707
  %v1709 = vpop.f32.mrb[0].mxu0
  %1710 = vmatprep.mubr.bf16.mxu0 0
  %1711 = vmatmul.mubr.bf16.gmra.mrb[0].mxu0 %v877
  %v1712 = vpop.f32.mrb[0].mxu0
  %v1713 = vadd.f32 %v292, %v1712
  %v1714 = vpop.f32.mrb[0].mxu0
  %v1715 = vpop.f32.mrb[0].mxu0
  %v1716 = vadd.f32 %v292, %v1715
  %v1717 = vpop.f32.mrb[0].mxu0
  %1718 = vmatprep.mubr.bf16.mxu0 0
  %1719 = vmatmul.mubr.bf16.gmra.mrb[0].mxu0 %v878
  %v1720 = vpop.f32.mrb[0].mxu0
  %v1721 = vadd.f32 %v292, %v1720
  %v1722 = vpop.f32.mrb[0].mxu0
  %v1723 = vpop.f32.mrb[0].mxu0
  %v1724 = vadd.f32 %v292, %v1723
  %v1725 = vpop.f32.mrb[0].mxu0
  %1726 = vmatprep.mubr.bf16.mxu0 0
  %1727 = vmatmul.mubr.bf16.gmra.mrb[0].mxu0 %v879
  %v1728 = vpop.f32.mrb[0].mxu0
  %v1729 = vadd.f32 %v292, %v1728
  %v1730 = vpop.f32.mrb[0].mxu0
  %v1731 = vpop.f32.mrb[0].mxu0
  %v1732 = vadd.f32 %v292, %v1731
  %v1733 = vpop.f32.mrb[0].mxu0
  %1734 = vmatprep.mubr.bf16.mxu0 0
  %1735 = vmatmul.mubr.bf16.gmra.mrb[0].mxu0 %v880
  %v1736 = vpop.f32.mrb[0].mxu0
  %v1737 = vadd.f32 %v292, %v1736
  %v1738 = vpop.f32.mrb[0].mxu0
  %v1739 = vpop.f32.mrb[0].mxu0
  %v1740 = vadd.f32 %v292, %v1739
  %v1741 = vpop.f32.mrb[0].mxu0
  %1742 = vmatprep.mubr.bf16.mxu0 0
  %1743 = vmatmul.mubr.bf16.gmra.mrb[0].mxu0 %v881
  %v1744 = vpop.f32.mrb[0].mxu0
  %v1745 = vadd.f32 %v292, %v1744
  %v1746 = vpop.f32.mrb[0].mxu0
  %v1747 = vpop.f32.mrb[0].mxu0
  %v1748 = vadd.f32 %v292, %v1747
  %v1749 = vpop.f32.mrb[0].mxu0
  %1750 = vmatprep.mubr.bf16.mxu0 0
  %1751 = vmatmul.mubr.bf16.gmra.mrb[0].mxu0 %v882
  %v1752 = vpop.f32.mrb[0].mxu0
  %v1753 = vadd.f32 %v292, %v1752
  %v1754 = vpop.f32.mrb[0].mxu0
  %v1755 = vpop.f32.mrb[0].mxu0
  %v1756 = vadd.f32 %v292, %v1755
  %v1757 = vpop.f32.mrb[0].mxu0
  %1758 = vmatprep.mubr.bf16.mxu0 0
  %1759 = vmatmul.mubr.bf16.gmra.mrb[0].mxu0 %v883
  %v1760 = vpop.f32.mrb[0].mxu0
  %v1761 = vadd.f32 %v292, %v1760
  %v1762 = vpop.f32.mrb[0].mxu0
  %v1763 = vpop.f32.mrb[0].mxu0
  %v1764 = vadd.f32 %v292, %v1763
  %v1765 = vpop.f32.mrb[0].mxu0
  %1766 = vmatprep.mubr.bf16.mxu0 0
  %1767 = vmatmul.mubr.bf16.gmra.mrb[0].mxu0 %v884
  %v1768 = vpop.f32.mrb[0].mxu0
  %v1769 = vadd.f32 %v292, %v1768
  %v1770 = vpop.f32.mrb[0].mxu0
  %v1771 = vpop.f32.mrb[0].mxu0
  %v1772 = vadd.f32 %v292, %v1771
  %v1773 = vpop.f32.mrb[0].mxu0
  %1774 = vmatprep.mubr.bf16.mxu0 0
  %1775 = vmatmul.mubr.bf16.gmra.mrb[0].mxu0 %v885
  %v1776 = vpop.f32.mrb[0].mxu0
  %v1777 = vadd.f32 %v292, %v1776
  %v1778 = vpop.f32.mrb[0].mxu0
  %v1779 = vpop.f32.mrb[0].mxu0
  %v1780 = vadd.f32 %v292, %v1779
  %v1781 = vpop.f32.mrb[0].mxu0
  %1782 = vmatprep.mubr.bf16.mxu0 0
  %1783 = vmatmul.mubr.bf16.gmra.mrb[0].mxu0 %v886
  %v1784 = vpop.f32.mrb[0].mxu0
  %v1785 = vadd.f32 %v292, %v1784
  %v1786 = vpop.f32.mrb[0].mxu0
  %v1787 = vpop.f32.mrb[0].mxu0
  %v1788 = vadd.f32 %v292, %v1787
  %v1789 = vpop.f32.mrb[0].mxu0
  %1790 = vmatprep.mubr.bf16.mxu0 0
  %1791 = vmatmul.mubr.bf16.gmra.mrb[0].mxu0 %v887
  %v1792 = vpop.f32.mrb[0].mxu0
  %v1793 = vadd.f32 %v292, %v1792
  %v1794 = vpop.f32.mrb[0].mxu0
  %v1795 = vpop.f32.mrb[0].mxu0
  %v1796 = vadd.f32 %v292, %v1795
  %v1797 = vpop.f32.mrb[0].mxu0
  %1798 = vmatprep.mubr.bf16.mxu0 0
  %1799 = vmatmul.mubr.bf16.gmra.mrb[0].mxu0 %v888
  %v1800 = vpop.f32.mrb[0].mxu0
  %v1801 = vadd.f32 %v292, %v1800
  %v1802 = vpop.f32.mrb[0].mxu0
  %v1803 = vpop.f32.mrb[0].mxu0
  %v1804 = vadd.f32 %v292, %v1803
  %v1805 = vpop.f32.mrb[0].mxu0
  %1806 = vmatprep.mubr.bf16.mxu0 0
  %1807 = vmatmul.mubr.bf16.gmra.mrb[0].mxu0 %v889
  %v1808 = vpop.f32.mrb[0].mxu0
  %v1809 = vadd.f32 %v292, %v1808
  %v1810 = vpop.f32.mrb[0].mxu0
  %v1811 = vpop.f32.mrb[0].mxu0
  %v1812 = vadd.f32 %v292, %v1811
  %v1813 = vpop.f32.mrb[0].mxu0
  %1814 = vmatprep.mubr.bf16.mxu0 0
  %1815 = vmatmul.mubr.bf16.gmra.mrb[0].mxu0 %v890
  %v1816 = vpop.f32.mrb[0].mxu0
  %v1817 = vadd.f32 %v292, %v1816
  %v1818 = vpop.f32.mrb[0].mxu0
  %v1819 = vpop.f32.mrb[0].mxu0
  %v1820 = vadd.f32 %v292, %v1819
  %v1821 = vpop.f32.mrb[0].mxu0
  %1822 = vmatprep.mubr.bf16.mxu0 0
  %1823 = vmatmul.mubr.bf16.gmra.mrb[0].mxu0 %v891
  %v1824 = vpop.f32.mrb[0].mxu0
  %v1825 = vadd.f32 %v292, %v1824
  %v1826 = vpop.f32.mrb[0].mxu0
  %v1827 = vpop.f32.mrb[0].mxu0
  %v1828 = vadd.f32 %v292, %v1827
  %v1829 = vpop.f32.mrb[0].mxu0
  %1830 = vmatprep.mubr.bf16.mxu0 0
  %1831 = vmatmul.mubr.bf16.gmra.mrb[0].mxu0 %v892
  %v1832 = vpop.f32.mrb[0].mxu0
  %v1833 = vadd.f32 %v292, %v1832
  %v1834 = vpop.f32.mrb[0].mxu0
  %v1835 = vpop.f32.mrb[0].mxu0
  %v1836 = vadd.f32 %v292, %v1835
  %v1837 = vpop.f32.mrb[0].mxu0
  %1838 = vmatprep.mubr.bf16.mxu0 0
  %1839 = vmatmul.mubr.bf16.gmra.mrb[0].mxu0 %v893
  %v1840 = vpop.f32.mrb[0].mxu0
  %v1841 = vadd.f32 %v292, %v1840
  %v1842 = vpop.f32.mrb[0].mxu0
  %v1843 = vpop.f32.mrb[0].mxu0
  %v1844 = vadd.f32 %v292, %v1843
  %v1845 = vpop.f32.mrb[0].mxu0
  %1846 = vmatprep.mubr.bf16.mxu0 0
  %1847 = vmatmul.mubr.bf16.gmra.mrb[0].mxu0 %v894
  %v1848 = vpop.f32.mrb[0].mxu0
  %v1849 = vadd.f32 %v292, %v1848
  %v1850 = vpop.f32.mrb[0].mxu0
  %v1851 = vpop.f32.mrb[0].mxu0
  %v1852 = vadd.f32 %v292, %v1851
  %v1853 = vpop.f32.mrb[0].mxu0
  %1854 = vmatprep.mubr.bf16.mxu0 0
  %1855 = vmatmul.mubr.bf16.gmra.mrb[0].mxu0 %v895
  %v1856 = vpop.f32.mrb[0].mxu0
  %v1857 = vadd.f32 %v292, %v1856
  %v1858 = vpop.f32.mrb[0].mxu0
  %v1859 = vpop.f32.mrb[0].mxu0
  %v1860 = vadd.f32 %v292, %v1859
  %v1861 = vpop.f32.mrb[0].mxu0
  %1862 = vmatprep.mubr.bf16.mxu0 0
  %1863 = vmatmul.mubr.bf16.gmra.mrb[0].mxu0 %v896
  %v1864 = vpop.f32.mrb[0].mxu0
  %v1865 = vadd.f32 %v292, %v1864
  %v1866 = vpop.f32.mrb[0].mxu0
  %v1867 = vpop.f32.mrb[0].mxu0
  %v1868 = vadd.f32 %v292, %v1867
  %v1869 = vpop.f32.mrb[0].mxu0
  %1870 = vmatprep.mubr.bf16.mxu0 0
  %1871 = vmatmul.mubr.bf16.gmra.mrb[0].mxu0 %v897
  %v1872 = vpop.f32.mrb[0].mxu0
  %v1873 = vadd.f32 %v292, %v1872
  %v1874 = vpop.f32.mrb[0].mxu0
  %v1875 = vpop.f32.mrb[0].mxu0
  %v1876 = vadd.f32 %v292, %v1875
  %v1877 = vpop.f32.mrb[0].mxu0
  %1878 = vmatprep.mubr.bf16.mxu0 0
  %1879 = vmatmul.mubr.bf16.gmra.mrb[0].mxu0 %v898
  %v1880 = vpop.f32.mrb[0].mxu0
  %v1881 = vadd.f32 %v292, %v1880
  %v1882 = vpop.f32.mrb[0].mxu0
  %v1883 = vpop.f32.mrb[0].mxu0
  %v1884 = vadd.f32 %v292, %v1883
  %v1885 = vpop.f32.mrb[0].mxu0
  %1886 = vmatprep.mubr.bf16.mxu0 0
  %1887 = vmatmul.mubr.bf16.gmra.mrb[0].mxu0 %v899
  %v1888 = vpop.f32.mrb[0].mxu0
  %v1889 = vadd.f32 %v292, %v1888
  %v1890 = vpop.f32.mrb[0].mxu0
  %v1891 = vpop.f32.mrb[0].mxu0
  %v1892 = vadd.f32 %v292, %v1891
  %v1893 = vpop.f32.mrb[0].mxu0
  %1894 = vmatprep.mubr.bf16.mxu0 0
  %1895 = vmatmul.mubr.bf16.gmra.mrb[0].mxu0 %v900
  %v1896 = vpop.f32.mrb[0].mxu0
  %v1897 = vadd.f32 %v292, %v1896
  %v1898 = vpop.f32.mrb[0].mxu0
  %v1899 = vpop.f32.mrb[0].mxu0
  %v1900 = vadd.f32 %v292, %v1899
  %v1901 = vpop.f32.mrb[0].mxu0
  %1902 = vmatprep.mubr.bf16.mxu0 0
  %1903 = vmatmul.mubr.bf16.gmra.mrb[0].mxu0 %v901
  %v1904 = vpop.f32.mrb[0].mxu0
  %v1905 = vadd.f32 %v292, %v1904
  %v1906 = vpop.f32.mrb[0].mxu0
  %v1907 = vpop.f32.mrb[0].mxu0
  %v1908 = vadd.f32 %v292, %v1907
  %v1909 = vpop.f32.mrb[0].mxu0
  %1910 = vmatprep.mubr.bf16.mxu0 0
  %1911 = vmatmul.mubr.bf16.gmra.mrb[0].mxu0 %v902
  %v1912 = vpop.f32.mrb[0].mxu0
  %v1913 = vadd.f32 %v292, %v1912
  %v1914 = vpop.f32.mrb[0].mxu0
  %v1915 = vpop.f32.mrb[0].mxu0
  %v1916 = vadd.f32 %v292, %v1915
  %v1917 = vpop.f32.mrb[0].mxu0
  %1918 = vmatprep.mubr.bf16.mxu0 0
  %1919 = vmatmul.mubr.bf16.gmra.mrb[0].mxu0 %v903
  %v1920 = vpop.f32.mrb[0].mxu0
  %v1921 = vadd.f32 %v292, %v1920
  %v1922 = vpop.f32.mrb[0].mxu0
  %v1923 = vpop.f32.mrb[0].mxu0
  %v1924 = vadd.f32 %v292, %v1923
  %v1925 = vpop.f32.mrb[0].mxu0
  %1926 = vmatprep.mubr.bf16.mxu0 0
  %1927 = vmatmul.mubr.bf16.gmra.mrb[0].mxu0 %v904
  %v1928 = vpop.f32.mrb[0].mxu0
  %v1929 = vadd.f32 %v292, %v1928
  %v1930 = vpop.f32.mrb[0].mxu0
  %v1931 = vpop.f32.mrb[0].mxu0
  %v1932 = vadd.f32 %v292, %v1931
  %v1933 = vpop.f32.mrb[0].mxu0
  %1934 = vmatprep.mubr.bf16.mxu0 0
  %1935 = vmatmul.mubr.bf16.gmra.mrb[0].mxu0 %v905
  %v1936 = vpop.f32.mrb[0].mxu0
  %v1937 = vadd.f32 %v292, %v1936
  %v1938 = vpop.f32.mrb[0].mxu0
  %v1939 = vpop.f32.mrb[0].mxu0
  %v1940 = vadd.f32 %v292, %v1939
  %v1941 = vpop.f32.mrb[0].mxu0
  %1942 = vmatprep.mubr.bf16.mxu0 0
  %1943 = vmatmul.mubr.bf16.gmra.mrb[0].mxu0 %v906
  %v1944 = vpop.f32.mrb[0].mxu0
  %v1945 = vadd.f32 %v292, %v1944
  %v1946 = vpop.f32.mrb[0].mxu0
  %v1947 = vpop.f32.mrb[0].mxu0
  %v1948 = vadd.f32 %v292, %v1947
  %v1949 = vpop.f32.mrb[0].mxu0
  %1950 = vmatprep.mubr.bf16.mxu0 0
  %1951 = vmatmul.mubr.bf16.gmra.mrb[0].mxu0 %v907
  %v1952 = vpop.f32.mrb[0].mxu0
  %v1953 = vadd.f32 %v292, %v1952
  %v1954 = vpop.f32.mrb[0].mxu0
  %v1955 = vpop.f32.mrb[0].mxu0
  %v1956 = vadd.f32 %v292, %v1955
  %v1957 = vpop.f32.mrb[0].mxu0
  %1958 = vmatprep.mubr.bf16.mxu0 0
  %1959 = vmatmul.mubr.bf16.gmra.mrb[0].mxu0 %v908
  %v1960 = vpop.f32.mrb[0].mxu0
  %v1961 = vadd.f32 %v292, %v1960
  %v1962 = vpop.f32.mrb[0].mxu0
  %v1963 = vpop.f32.mrb[0].mxu0
  %v1964 = vadd.f32 %v292, %v1963
  %v1965 = vpop.f32.mrb[0].mxu0
  %1966 = vmatprep.mubr.bf16.mxu0 0
  %1967 = vmatmul.mubr.bf16.gmra.mrb[0].mxu0 %v909
  %v1968 = vpop.f32.mrb[0].mxu0
  %v1969 = vadd.f32 %v292, %v1968
  %v1970 = vpop.f32.mrb[0].mxu0
  %v1971 = vpop.f32.mrb[0].mxu0
  %v1972 = vadd.f32 %v292, %v1971
  %v1973 = vpop.f32.mrb[0].mxu0
  %1974 = vmatprep.mubr.bf16.mxu0 0
  %1975 = vmatmul.mubr.bf16.gmra.mrb[0].mxu0 %v910
  %v1976 = vpop.f32.mrb[0].mxu0
  %v1977 = vadd.f32 %v292, %v1976
  %v1978 = vpop.f32.mrb[0].mxu0
  %v1979 = vpop.f32.mrb[0].mxu0
  %v1980 = vadd.f32 %v292, %v1979
  %v1981 = vpop.f32.mrb[0].mxu0
  %1982 = vmatprep.mubr.bf16.mxu0 0
  %1983 = vmatmul.mubr.bf16.gmra.mrb[0].mxu0 %v911
  %v1984 = vpop.f32.mrb[0].mxu0
  %v1985 = vadd.f32 %v292, %v1984
  %v1986 = vpop.f32.mrb[0].mxu0
  %v1987 = vpop.f32.mrb[0].mxu0
  %v1988 = vadd.f32 %v292, %v1987
  %v1989 = vpop.f32.mrb[0].mxu0
  %1990 = vmatprep.mubr.bf16.mxu0 0
  %1991 = vmatmul.mubr.bf16.gmra.mrb[0].mxu0 %v912
  %v1992 = vpop.f32.mrb[0].mxu0
  %v1993 = vadd.f32 %v292, %v1992
  %v1994 = vpop.f32.mrb[0].mxu0
  %v1995 = vpop.f32.mrb[0].mxu0
  %v1996 = vadd.f32 %v292, %v1995
  %v1997 = vpop.f32.mrb[0].mxu0
  %1998 = vmatprep.mubr.bf16.mxu0 0
  %1999 = vmatmul.mubr.bf16.gmra.mrb[0].mxu0 %v913
  %v2000 = vpop.f32.mrb[0].mxu0
  %v2001 = vadd.f32 %v292, %v2000
  %v2002 = vpop.f32.mrb[0].mxu0
  %v2003 = vpop.f32.mrb[0].mxu0
  %v2004 = vadd.f32 %v292, %v2003
  %v2005 = vpop.f32.mrb[0].mxu0
  %2006 = vmatprep.mubr.bf16.mxu0 0
  %2007 = vmatmul.mubr.bf16.gmra.mrb[0].mxu0 %v914
  %v2008 = vpop.f32.mrb[0].mxu0
  %v2009 = vadd.f32 %v292, %v2008
  %v2010 = vpop.f32.mrb[0].mxu0
  %v2011 = vpop.f32.mrb[0].mxu0
  %v2012 = vadd.f32 %v292, %v2011
  %v2013 = vpop.f32.mrb[0].mxu0
  %2014 = vmatprep.mubr.bf16.mxu0 0
  %2015 = vmatmul.mubr.bf16.gmra.mrb[0].mxu0 %v915
  %v2016 = vpop.f32.mrb[0].mxu0
  %v2017 = vadd.f32 %v292, %v2016
  %v2018 = vpop.f32.mrb[0].mxu0
  %v2019 = vpop.f32.mrb[0].mxu0
  %v2020 = vadd.f32 %v292, %v2019
  %v2021 = vpop.f32.mrb[0].mxu0
  %2022 = vmatprep.mubr.bf16.mxu0 0
  %2023 = vmatmul.mubr.bf16.gmra.mrb[0].mxu0 %v916
  %v2024 = vpop.f32.mrb[0].mxu0
  %v2025 = vadd.f32 %v292, %v2024
  %v2026 = vpop.f32.mrb[0].mxu0
  %v2027 = vpop.f32.mrb[0].mxu0
  %v2028 = vadd.f32 %v292, %v2027
  %v2029 = vpop.f32.mrb[0].mxu0
  %2030 = vmatprep.mubr.bf16.mxu0 0
  %2031 = vmatmul.mubr.bf16.gmra.mrb[0].mxu0 %v917
  %v2032 = vpop.f32.mrb[0].mxu0
  %v2033 = vadd.f32 %v292, %v2032
  %v2034 = vpop.f32.mrb[0].mxu0
  %v2035 = vpop.f32.mrb[0].mxu0
  %v2036 = vadd.f32 %v292, %v2035
  %v2037 = vpop.f32.mrb[0].mxu0
  %2038 = vmatprep.mubr.bf16.mxu0 0
  %2039 = vmatmul.mubr.bf16.gmra.mrb[0].mxu0 %v918
  %v2040 = vpop.f32.mrb[0].mxu0
  %v2041 = vadd.f32 %v292, %v2040
  %v2042 = vpop.f32.mrb[0].mxu0
  %v2043 = vpop.f32.mrb[0].mxu0
  %v2044 = vadd.f32 %v292, %v2043
  %v2045 = vpop.f32.mrb[0].mxu0
  %2046 = vmatprep.mubr.bf16.mxu0 0
  %2047 = vmatmul.mubr.bf16.gmra.mrb[0].mxu0 %v919
  %v2048 = vpop.f32.mrb[0].mxu0
  %v2049 = vadd.f32 %v292, %v2048
  %v2050 = vpop.f32.mrb[0].mxu0
  %v2051 = vpop.f32.mrb[0].mxu0
  %v2052 = vadd.f32 %v292, %v2051
  %v2053 = vpop.f32.mrb[0].mxu0
  %2054 = vmatprep.mubr.bf16.mxu0 0
  %2055 = vmatmul.mubr.bf16.gmra.mrb[0].mxu0 %v920
  %v2056 = vpop.f32.mrb[0].mxu0
  %v2057 = vadd.f32 %v292, %v2056
  %v2058 = vpop.f32.mrb[0].mxu0
  %v2059 = vpop.f32.mrb[0].mxu0
  %v2060 = vadd.f32 %v292, %v2059
  %v2061 = vpop.f32.mrb[0].mxu0
  %2062 = vmatprep.mubr.bf16.mxu0 0
  %2063 = vmatmul.mubr.bf16.gmra.mrb[0].mxu0 %v921
  %v2064 = vpop.f32.mrb[0].mxu0
  %v2065 = vadd.f32 %v292, %v2064
  %v2066 = vpop.f32.mrb[0].mxu0
  %v2067 = vpop.f32.mrb[0].mxu0
  %v2068 = vadd.f32 %v292, %v2067
  %v2069 = vpop.f32.mrb[0].mxu0
  %2070 = vmatprep.mubr.bf16.mxu0 0
  %2071 = vmatmul.mubr.bf16.gmra.mrb[0].mxu0 %v922
  %v2072 = vpop.f32.mrb[0].mxu0
  %v2073 = vadd.f32 %v292, %v2072
  %v2074 = vpop.f32.mrb[0].mxu0
  %v2075 = vpop.f32.mrb[0].mxu0
  %v2076 = vadd.f32 %v292, %v2075
  %v2077 = vpop.f32.mrb[0].mxu0
  %2078 = vmatprep.mubr.bf16.mxu0 0
  %2079 = vmatmul.mubr.bf16.gmra.mrb[0].mxu0 %v923
  %v2080 = vpop.f32.mrb[0].mxu0
  %v2081 = vadd.f32 %v292, %v2080
  %v2082 = vpop.f32.mrb[0].mxu0
  %v2083 = vpop.f32.mrb[0].mxu0
  %v2084 = vadd.f32 %v292, %v2083
  %v2085 = vpop.f32.mrb[0].mxu0
  %2086 = vmatprep.mubr.bf16.mxu0 0
  %2087 = vmatmul.mubr.bf16.gmra.mrb[0].mxu0 %v924
  %v2088 = vpop.f32.mrb[0].mxu0
  %v2089 = vadd.f32 %v292, %v2088
  %v2090 = vpop.f32.mrb[0].mxu0
  %v2091 = vpop.f32.mrb[0].mxu0
  %v2092 = vadd.f32 %v292, %v2091
  %v2093 = vpop.f32.mrb[0].mxu0
  %2094 = vmatprep.mubr.bf16.mxu0 0
  %2095 = vmatmul.mubr.bf16.gmra.mrb[0].mxu0 %v925
  %v2096 = vpop.f32.mrb[0].mxu0
  %v2097 = vadd.f32 %v292, %v2096
  %v2098 = vpop.f32.mrb[0].mxu0
  %v2099 = vpop.f32.mrb[0].mxu0
  %v2100 = vadd.f32 %v292, %v2099
  %v2101 = vpop.f32.mrb[0].mxu0
  %2102 = vmatprep.mubr.bf16.mxu0 0
  %2103 = vmatmul.mubr.bf16.gmra.mrb[0].mxu0 %v926
  %v2104 = vpop.f32.mrb[0].mxu0
  %v2105 = vadd.f32 %v292, %v2104
  %v2106 = vpop.f32.mrb[0].mxu0
  %v2107 = vpop.f32.mrb[0].mxu0
  %v2108 = vadd.f32 %v292, %v2107
  %v2109 = vpop.f32.mrb[0].mxu0
  %2110 = vmatprep.mubr.bf16.mxu0 0
  %2111 = vmatmul.mubr.bf16.gmra.mrb[0].mxu0 %v927
  %v2112 = vpop.f32.mrb[0].mxu0
  %v2113 = vadd.f32 %v292, %v2112
  %v2114 = vpop.f32.mrb[0].mxu0
  %v2115 = vpop.f32.mrb[0].mxu0
  %v2116 = vadd.f32 %v292, %v2115
  %v2117 = vpop.f32.mrb[0].mxu0
  %2118 = vmatprep.mubr.bf16.mxu0 0
  %2119 = vmatmul.mubr.bf16.gmra.mrb[0].mxu0 %v928
  %v2120 = vpop.f32.mrb[0].mxu0
  %v2121 = vadd.f32 %v292, %v2120
  %v2122 = vpop.f32.mrb[0].mxu0
  %v2123 = vpop.f32.mrb[0].mxu0
  %v2124 = vadd.f32 %v292, %v2123
  %v2125 = vpop.f32.mrb[0].mxu0
  %2126 = vmatprep.mubr.bf16.mxu0 0
  %2127 = vmatmul.mubr.bf16.gmra.mrb[0].mxu0 %v929
  %v2128 = vpop.f32.mrb[0].mxu0
  %v2129 = vadd.f32 %v292, %v2128
  %v2130 = vpop.f32.mrb[0].mxu0
  %v2131 = vpop.f32.mrb[0].mxu0
  %v2132 = vadd.f32 %v292, %v2131
  %v2133 = vpop.f32.mrb[0].mxu0
  %2134 = vmatprep.mubr.bf16.mxu0 0
  %2135 = vmatmul.mubr.bf16.gmra.mrb[0].mxu0 %v930
  %v2136 = vpop.f32.mrb[0].mxu0
  %v2137 = vadd.f32 %v292, %v2136
  %v2138 = vpop.f32.mrb[0].mxu0
  %v2139 = vpop.f32.mrb[0].mxu0
  %v2140 = vadd.f32 %v292, %v2139
  %v2141 = vpop.f32.mrb[0].mxu0
  %2142 = vmatprep.mubr.bf16.mxu0 0
  %2143 = vmatmul.mubr.bf16.gmra.mrb[0].mxu0 %v931
  %v2144 = vpop.f32.mrb[0].mxu0
  %v2145 = vadd.f32 %v292, %v2144
  %v2146 = vpop.f32.mrb[0].mxu0
  %v2147 = vpop.f32.mrb[0].mxu0
  %v2148 = vadd.f32 %v292, %v2147
  %v2149 = vpop.f32.mrb[0].mxu0
  %2150 = vmatprep.mubr.bf16.mxu0 0
  %2151 = vmatmul.mubr.bf16.gmra.mrb[0].mxu0 %v932
  %v2152 = vpop.f32.mrb[0].mxu0
  %v2153 = vadd.f32 %v292, %v2152
  %v2154 = vpop.f32.mrb[0].mxu0
  %v2155 = vpop.f32.mrb[0].mxu0
  %v2156 = vadd.f32 %v292, %v2155
  %v2157 = vpop.f32.mrb[0].mxu0
  %2158 = vmatprep.mubr.bf16.mxu0 0
  %2159 = vmatmul.mubr.bf16.gmra.mrb[0].mxu0 %v933
  %v2160 = vpop.f32.mrb[0].mxu0
  %v2161 = vadd.f32 %v292, %v2160
  %v2162 = vpop.f32.mrb[0].mxu0
  %v2163 = vpop.f32.mrb[0].mxu0
  %v2164 = vadd.f32 %v292, %v2163
  %v2165 = vpop.f32.mrb[0].mxu0
  %2166 = vdwg.mxu0
  %v2167 = vmax.f32 %v1145, 0.0
  %v2168 = vmax.f32 %v1148, 0.0
  %v2169 = vmax.f32 %v1153, 0.0
  %v2170 = vmax.f32 %v1156, 0.0
  %v2171 = vmax.f32 %v1161, 0.0
  %v2172 = vmax.f32 %v1164, 0.0
  %v2173 = vmax.f32 %v1169, 0.0
  %v2174 = vmax.f32 %v1172, 0.0
  %v2175 = vmax.f32 %v1177, 0.0
  %v2176 = vmax.f32 %v1180, 0.0
  %v2177 = vmax.f32 %v1185, 0.0
  %v2178 = vmax.f32 %v1188, 0.0
  %v2179 = vmax.f32 %v1193, 0.0
  %v2180 = vmax.f32 %v1196, 0.0
  %v2181 = vmax.f32 %v1201, 0.0
  %v2182 = vmax.f32 %v1204, 0.0
  %v2183 = vmax.f32 %v1209, 0.0
  %v2184 = vmax.f32 %v1212, 0.0
  %v2185 = vmax.f32 %v1217, 0.0
  %v2186 = vmax.f32 %v1220, 0.0
  %v2187 = vmax.f32 %v1225, 0.0
  %v2188 = vmax.f32 %v1228, 0.0
  %v2189 = vmax.f32 %v1233, 0.0
  %v2190 = vmax.f32 %v1236, 0.0
  %v2191 = vmax.f32 %v1241, 0.0
  %v2192 = vmax.f32 %v1244, 0.0
  %v2193 = vmax.f32 %v1249, 0.0
  %v2194 = vmax.f32 %v1252, 0.0
  %v2195 = vmax.f32 %v1257, 0.0
  %v2196 = vmax.f32 %v1260, 0.0
  %v2197 = vmax.f32 %v1265, 0.0
  %v2198 = vmax.f32 %v1268, 0.0
  %v2199 = vmax.f32 %v1273, 0.0
  %v2200 = vmax.f32 %v1276, 0.0
  %v2201 = vmax.f32 %v1281, 0.0
  %v2202 = vmax.f32 %v1284, 0.0
  %v2203 = vmax.f32 %v1289, 0.0
  %v2204 = vmax.f32 %v1292, 0.0
  %v2205 = vmax.f32 %v1297, 0.0
  %v2206 = vmax.f32 %v1300, 0.0
  %v2207 = vmax.f32 %v1305, 0.0
  %v2208 = vmax.f32 %v1308, 0.0
  %v2209 = vmax.f32 %v1313, 0.0
  %v2210 = vmax.f32 %v1316, 0.0
  %v2211 = vmax.f32 %v1321, 0.0
  %v2212 = vmax.f32 %v1324, 0.0
  %v2213 = vmax.f32 %v1329, 0.0
  %v2214 = vmax.f32 %v1332, 0.0
  %v2215 = vmax.f32 %v1337, 0.0
  %v2216 = vmax.f32 %v1340, 0.0
  %v2217 = vmax.f32 %v1345, 0.0
  %v2218 = vmax.f32 %v1348, 0.0
  %v2219 = vmax.f32 %v1353, 0.0
  %v2220 = vmax.f32 %v1356, 0.0
  %v2221 = vmax.f32 %v1361, 0.0
  %v2222 = vmax.f32 %v1364, 0.0
  %v2223 = vmax.f32 %v1369, 0.0
  %v2224 = vmax.f32 %v1372, 0.0
  %v2225 = vmax.f32 %v1377, 0.0
  %v2226 = vmax.f32 %v1380, 0.0
  %v2227 = vmax.f32 %v1385, 0.0
  %v2228 = vmax.f32 %v1388, 0.0
  %v2229 = vmax.f32 %v1393, 0.0
  %v2230 = vmax.f32 %v1396, 0.0
  %v2231 = vmax.f32 %v1401, 0.0
  %v2232 = vmax.f32 %v1404, 0.0
  %v2233 = vmax.f32 %v1409, 0.0
  %v2234 = vmax.f32 %v1412, 0.0
  %v2235 = vmax.f32 %v1417, 0.0
  %v2236 = vmax.f32 %v1420, 0.0
  %v2237 = vmax.f32 %v1425, 0.0
  %v2238 = vmax.f32 %v1428, 0.0
  %v2239 = vmax.f32 %v1433, 0.0
  %v2240 = vmax.f32 %v1436, 0.0
  %v2241 = vmax.f32 %v1441, 0.0
  %v2242 = vmax.f32 %v1444, 0.0
  %v2243 = vmax.f32 %v1449, 0.0
  %v2244 = vmax.f32 %v1452, 0.0
  %v2245 = vmax.f32 %v1457, 0.0
  %v2246 = vmax.f32 %v1460, 0.0
  %v2247 = vmax.f32 %v1465, 0.0
  %v2248 = vmax.f32 %v1468, 0.0
  %v2249 = vmax.f32 %v1473, 0.0
  %v2250 = vmax.f32 %v1476, 0.0
  %v2251 = vmax.f32 %v1481, 0.0
  %v2252 = vmax.f32 %v1484, 0.0
  %v2253 = vmax.f32 %v1489, 0.0
  %v2254 = vmax.f32 %v1492, 0.0
  %v2255 = vmax.f32 %v1497, 0.0
  %v2256 = vmax.f32 %v1500, 0.0
  %v2257 = vmax.f32 %v1505, 0.0
  %v2258 = vmax.f32 %v1508, 0.0
  %v2259 = vmax.f32 %v1513, 0.0
  %v2260 = vmax.f32 %v1516, 0.0
  %v2261 = vmax.f32 %v1521, 0.0
  %v2262 = vmax.f32 %v1524, 0.0
  %v2263 = vmax.f32 %v1529, 0.0
  %v2264 = vmax.f32 %v1532, 0.0
  %v2265 = vmax.f32 %v1537, 0.0
  %v2266 = vmax.f32 %v1540, 0.0
  %v2267 = vmax.f32 %v1545, 0.0
  %v2268 = vmax.f32 %v1548, 0.0
  %v2269 = vmax.f32 %v1553, 0.0
  %v2270 = vmax.f32 %v1556, 0.0
  %v2271 = vmax.f32 %v1561, 0.0
  %v2272 = vmax.f32 %v1564, 0.0
  %v2273 = vmax.f32 %v1569, 0.0
  %v2274 = vmax.f32 %v1572, 0.0
  %v2275 = vmax.f32 %v1577, 0.0
  %v2276 = vmax.f32 %v1580, 0.0
  %v2277 = vmax.f32 %v1585, 0.0
  %v2278 = vmax.f32 %v1588, 0.0
  %v2279 = vmax.f32 %v1593, 0.0
  %v2280 = vmax.f32 %v1596, 0.0
  %v2281 = vmax.f32 %v1601, 0.0
  %v2282 = vmax.f32 %v1604, 0.0
  %v2283 = vmax.f32 %v1609, 0.0
  %v2284 = vmax.f32 %v1612, 0.0
  %v2285 = vmax.f32 %v1617, 0.0
  %v2286 = vmax.f32 %v1620, 0.0
  %v2287 = vmax.f32 %v1625, 0.0
  %v2288 = vmax.f32 %v1628, 0.0
  %v2289 = vmax.f32 %v1633, 0.0
  %v2290 = vmax.f32 %v1636, 0.0
  %v2291 = vmax.f32 %v1641, 0.0
  %v2292 = vmax.f32 %v1644, 0.0
  %v2293 = vmax.f32 %v1649, 0.0
  %v2294 = vmax.f32 %v1652, 0.0
  %v2295 = vmax.f32 %v1657, 0.0
  %v2296 = vmax.f32 %v1660, 0.0
  %v2297 = vmax.f32 %v1665, 0.0
  %v2298 = vmax.f32 %v1668, 0.0
  %v2299 = vmax.f32 %v1673, 0.0
  %v2300 = vmax.f32 %v1676, 0.0
  %v2301 = vmax.f32 %v1681, 0.0
  %v2302 = vmax.f32 %v1684, 0.0
  %v2303 = vmax.f32 %v1689, 0.0
  %v2304 = vmax.f32 %v1692, 0.0
  %v2305 = vmax.f32 %v1697, 0.0
  %v2306 = vmax.f32 %v1700, 0.0
  %v2307 = vmax.f32 %v1705, 0.0
  %v2308 = vmax.f32 %v1708, 0.0
  %v2309 = vmax.f32 %v1713, 0.0
  %v2310 = vmax.f32 %v1716, 0.0
  %v2311 = vmax.f32 %v1721, 0.0
  %v2312 = vmax.f32 %v1724, 0.0
  %v2313 = vmax.f32 %v1729, 0.0
  %v2314 = vmax.f32 %v1732, 0.0
  %v2315 = vmax.f32 %v1737, 0.0
  %v2316 = vmax.f32 %v1740, 0.0
  %v2317 = vmax.f32 %v1745, 0.0
  %v2318 = vmax.f32 %v1748, 0.0
  %v2319 = vmax.f32 %v1753, 0.0
  %v2320 = vmax.f32 %v1756, 0.0
  %v2321 = vmax.f32 %v1761, 0.0
  %v2322 = vmax.f32 %v1764, 0.0
  %v2323 = vmax.f32 %v1769, 0.0
  %v2324 = vmax.f32 %v1772, 0.0
  %v2325 = vmax.f32 %v1777, 0.0
  %v2326 = vmax.f32 %v1780, 0.0
  %v2327 = vmax.f32 %v1785, 0.0
  %v2328 = vmax.f32 %v1788, 0.0
  %v2329 = vmax.f32 %v1793, 0.0
  %v2330 = vmax.f32 %v1796, 0.0
  %v2331 = vmax.f32 %v1801, 0.0
  %v2332 = vmax.f32 %v1804, 0.0
  %v2333 = vmax.f32 %v1809, 0.0
  %v2334 = vmax.f32 %v1812, 0.0
  %v2335 = vmax.f32 %v1817, 0.0
  %v2336 = vmax.f32 %v1820, 0.0
  %v2337 = vmax.f32 %v1825, 0.0
  %v2338 = vmax.f32 %v1828, 0.0
  %v2339 = vmax.f32 %v1833, 0.0
  %v2340 = vmax.f32 %v1836, 0.0
  %v2341 = vmax.f32 %v1841, 0.0
  %v2342 = vmax.f32 %v1844, 0.0
  %v2343 = vmax.f32 %v1849, 0.0
  %v2344 = vmax.f32 %v1852, 0.0
  %v2345 = vmax.f32 %v1857, 0.0
  %v2346 = vmax.f32 %v1860, 0.0
  %v2347 = vmax.f32 %v1865, 0.0
  %v2348 = vmax.f32 %v1868, 0.0
  %v2349 = vmax.f32 %v1873, 0.0
  %v2350 = vmax.f32 %v1876, 0.0
  %v2351 = vmax.f32 %v1881, 0.0
  %v2352 = vmax.f32 %v1884, 0.0
  %v2353 = vmax.f32 %v1889, 0.0
  %v2354 = vmax.f32 %v1892, 0.0
  %v2355 = vmax.f32 %v1897, 0.0
  %v2356 = vmax.f32 %v1900, 0.0
  %v2357 = vmax.f32 %v1905, 0.0
  %v2358 = vmax.f32 %v1908, 0.0
  %v2359 = vmax.f32 %v1913, 0.0
  %v2360 = vmax.f32 %v1916, 0.0
  %v2361 = vmax.f32 %v1921, 0.0
  %v2362 = vmax.f32 %v1924, 0.0
  %v2363 = vmax.f32 %v1929, 0.0
  %v2364 = vmax.f32 %v1932, 0.0
  %v2365 = vmax.f32 %v1937, 0.0
  %v2366 = vmax.f32 %v1940, 0.0
  %v2367 = vmax.f32 %v1945, 0.0
  %v2368 = vmax.f32 %v1948, 0.0
  %v2369 = vmax.f32 %v1953, 0.0
  %v2370 = vmax.f32 %v1956, 0.0
  %v2371 = vmax.f32 %v1961, 0.0
  %v2372 = vmax.f32 %v1964, 0.0
  %v2373 = vmax.f32 %v1969, 0.0
  %v2374 = vmax.f32 %v1972, 0.0
  %v2375 = vmax.f32 %v1977, 0.0
  %v2376 = vmax.f32 %v1980, 0.0
  %v2377 = vmax.f32 %v1985, 0.0
  %v2378 = vmax.f32 %v1988, 0.0
  %v2379 = vmax.f32 %v1993, 0.0
  %v2380 = vmax.f32 %v1996, 0.0
  %v2381 = vmax.f32 %v2001, 0.0
  %v2382 = vmax.f32 %v2004, 0.0
  %v2383 = vmax.f32 %v2009, 0.0
  %v2384 = vmax.f32 %v2012, 0.0
  %v2385 = vmax.f32 %v2017, 0.0
  %v2386 = vmax.f32 %v2020, 0.0
  %v2387 = vmax.f32 %v2025, 0.0
  %v2388 = vmax.f32 %v2028, 0.0
  %v2389 = vmax.f32 %v2033, 0.0
  %v2390 = vmax.f32 %v2036, 0.0
  %v2391 = vmax.f32 %v2041, 0.0
  %v2392 = vmax.f32 %v2044, 0.0
  %v2393 = vmax.f32 %v2049, 0.0
  %v2394 = vmax.f32 %v2052, 0.0
  %v2395 = vmax.f32 %v2057, 0.0
  %v2396 = vmax.f32 %v2060, 0.0
  %v2397 = vmax.f32 %v2065, 0.0
  %v2398 = vmax.f32 %v2068, 0.0
  %v2399 = vmax.f32 %v2073, 0.0
  %v2400 = vmax.f32 %v2076, 0.0
  %v2401 = vmax.f32 %v2081, 0.0
  %v2402 = vmax.f32 %v2084, 0.0
  %v2403 = vmax.f32 %v2089, 0.0
  %v2404 = vmax.f32 %v2092, 0.0
  %v2405 = vmax.f32 %v2097, 0.0
  %v2406 = vmax.f32 %v2100, 0.0
  %v2407 = vmax.f32 %v2105, 0.0
  %v2408 = vmax.f32 %v2108, 0.0
  %v2409 = vmax.f32 %v2113, 0.0
  %v2410 = vmax.f32 %v2116, 0.0
  %v2411 = vmax.f32 %v2121, 0.0
  %v2412 = vmax.f32 %v2124, 0.0
  %v2413 = vmax.f32 %v2129, 0.0
  %v2414 = vmax.f32 %v2132, 0.0
  %v2415 = vmax.f32 %v2137, 0.0
  %v2416 = vmax.f32 %v2140, 0.0
  %v2417 = vmax.f32 %v2145, 0.0
  %v2418 = vmax.f32 %v2148, 0.0
  %v2419 = vmax.f32 %v2153, 0.0
  %v2420 = vmax.f32 %v2156, 0.0
  %v2421 = vmax.f32 %v2161, 0.0
  %v2422 = vmax.f32 %v2164, 0.0
  %v2423 = vadd.f32 %v2167, %v2168
  %v2424 = vadd.f32 %v2423, %v2169
  %v2425 = vadd.f32 %v2424, %v2170
  %v2426 = vadd.f32 %v2425, %v2171
  %v2427 = vadd.f32 %v2426, %v2172
  %v2428 = vadd.f32 %v2427, %v2173
  %v2429 = vadd.f32 %v2428, %v2174
  %v2430 = vadd.f32 %v2429, %v2175
  %v2431 = vadd.f32 %v2430, %v2176
  %v2432 = vadd.f32 %v2431, %v2177
  %v2433 = vadd.f32 %v2432, %v2178
  %v2434 = vadd.f32 %v2433, %v2179
  %v2435 = vadd.f32 %v2434, %v2180
  %v2436 = vadd.f32 %v2435, %v2181
  %v2437 = vadd.f32 %v2436, %v2182
  %v2438 = vadd.f32 %v2437, %v2183
  %v2439 = vadd.f32 %v2438, %v2184
  %v2440 = vadd.f32 %v2439, %v2185
  %v2441 = vadd.f32 %v2440, %v2186
  %v2442 = vadd.f32 %v2441, %v2187
  %v2443 = vadd.f32 %v2442, %v2188
  %v2444 = vadd.f32 %v2443, %v2189
  %v2445 = vadd.f32 %v2444, %v2190
  %v2446 = vadd.f32 %v2445, %v2191
  %v2447 = vadd.f32 %v2446, %v2192
  %v2448 = vadd.f32 %v2447, %v2193
  %v2449 = vadd.f32 %v2448, %v2194
  %v2450 = vadd.f32 %v2449, %v2195
  %v2451 = vadd.f32 %v2450, %v2196
  %v2452 = vadd.f32 %v2451, %v2197
  %v2453 = vadd.f32 %v2452, %v2198
  %v2454 = vrot.slane %v2453, 4
  %v2455 = vadd.f32 %v2453, %v2454
  %v2456 = vrot.slane %v2455, 2
  %v2457 = vadd.f32 %v2455, %v2456
  %v2458 = vrot.slane %v2457, 1
  %v2459 = vadd.f32 %v2457, %v2458
  %v2460 = vadd.f32 %v2199, %v2200
  %v2461 = vadd.f32 %v2460, %v2201
  %v2462 = vadd.f32 %v2461, %v2202
  %v2463 = vadd.f32 %v2462, %v2203
  %v2464 = vadd.f32 %v2463, %v2204
  %v2465 = vadd.f32 %v2464, %v2205
  %v2466 = vadd.f32 %v2465, %v2206
  %v2467 = vadd.f32 %v2466, %v2207
  %v2468 = vadd.f32 %v2467, %v2208
  %v2469 = vadd.f32 %v2468, %v2209
  %v2470 = vadd.f32 %v2469, %v2210
  %v2471 = vadd.f32 %v2470, %v2211
  %v2472 = vadd.f32 %v2471, %v2212
  %v2473 = vadd.f32 %v2472, %v2213
  %v2474 = vadd.f32 %v2473, %v2214
  %v2475 = vadd.f32 %v2474, %v2215
  %v2476 = vadd.f32 %v2475, %v2216
  %v2477 = vadd.f32 %v2476, %v2217
  %v2478 = vadd.f32 %v2477, %v2218
  %v2479 = vadd.f32 %v2478, %v2219
  %v2480 = vadd.f32 %v2479, %v2220
  %v2481 = vadd.f32 %v2480, %v2221
  %v2482 = vadd.f32 %v2481, %v2222
  %v2483 = vadd.f32 %v2482, %v2223
  %v2484 = vadd.f32 %v2483, %v2224
  %v2485 = vadd.f32 %v2484, %v2225
  %v2486 = vadd.f32 %v2485, %v2226
  %v2487 = vadd.f32 %v2486, %v2227
  %v2488 = vadd.f32 %v2487, %v2228
  %v2489 = vadd.f32 %v2488, %v2229
  %v2490 = vadd.f32 %v2489, %v2230
  %v2491 = vrot.slane %v2490, 4
  %v2492 = vadd.f32 %v2490, %v2491
  %v2493 = vrot.slane %v2492, 2
  %v2494 = vadd.f32 %v2492, %v2493
  %v2495 = vrot.slane %v2494, 1
  %v2496 = vadd.f32 %v2494, %v2495
  %v2497 = vadd.f32 %v2231, %v2232
  %v2498 = vadd.f32 %v2497, %v2233
  %v2499 = vadd.f32 %v2498, %v2234
  %v2500 = vadd.f32 %v2499, %v2235
  %v2501 = vadd.f32 %v2500, %v2236
  %v2502 = vadd.f32 %v2501, %v2237
  %v2503 = vadd.f32 %v2502, %v2238
  %v2504 = vadd.f32 %v2503, %v2239
  %v2505 = vadd.f32 %v2504, %v2240
  %v2506 = vadd.f32 %v2505, %v2241
  %v2507 = vadd.f32 %v2506, %v2242
  %v2508 = vadd.f32 %v2507, %v2243
  %v2509 = vadd.f32 %v2508, %v2244
  %v2510 = vadd.f32 %v2509, %v2245
  %v2511 = vadd.f32 %v2510, %v2246
  %v2512 = vadd.f32 %v2511, %v2247
  %v2513 = vadd.f32 %v2512, %v2248
  %v2514 = vadd.f32 %v2513, %v2249
  %v2515 = vadd.f32 %v2514, %v2250
  %v2516 = vadd.f32 %v2515, %v2251
  %v2517 = vadd.f32 %v2516, %v2252
  %v2518 = vadd.f32 %v2517, %v2253
  %v2519 = vadd.f32 %v2518, %v2254
  %v2520 = vadd.f32 %v2519, %v2255
  %v2521 = vadd.f32 %v2520, %v2256
  %v2522 = vadd.f32 %v2521, %v2257
  %v2523 = vadd.f32 %v2522, %v2258
  %v2524 = vadd.f32 %v2523, %v2259
  %v2525 = vadd.f32 %v2524, %v2260
  %v2526 = vadd.f32 %v2525, %v2261
  %v2527 = vadd.f32 %v2526, %v2262
  %v2528 = vrot.slane %v2527, 4
  %v2529 = vadd.f32 %v2527, %v2528
  %v2530 = vrot.slane %v2529, 2
  %v2531 = vadd.f32 %v2529, %v2530
  %v2532 = vrot.slane %v2531, 1
  %v2533 = vadd.f32 %v2531, %v2532
  %v2534 = vadd.f32 %v2263, %v2264
  %v2535 = vadd.f32 %v2534, %v2265
  %v2536 = vadd.f32 %v2535, %v2266
  %v2537 = vadd.f32 %v2536, %v2267
  %v2538 = vadd.f32 %v2537, %v2268
  %v2539 = vadd.f32 %v2538, %v2269
  %v2540 = vadd.f32 %v2539, %v2270
  %v2541 = vadd.f32 %v2540, %v2271
  %v2542 = vadd.f32 %v2541, %v2272
  %v2543 = vadd.f32 %v2542, %v2273
  %v2544 = vadd.f32 %v2543, %v2274
  %v2545 = vadd.f32 %v2544, %v2275
  %v2546 = vadd.f32 %v2545, %v2276
  %v2547 = vadd.f32 %v2546, %v2277
  %v2548 = vadd.f32 %v2547, %v2278
  %v2549 = vadd.f32 %v2548, %v2279
  %v2550 = vadd.f32 %v2549, %v2280
  %v2551 = vadd.f32 %v2550, %v2281
  %v2552 = vadd.f32 %v2551, %v2282
  %v2553 = vadd.f32 %v2552, %v2283
  %v2554 = vadd.f32 %v2553, %v2284
  %v2555 = vadd.f32 %v2554, %v2285
  %v2556 = vadd.f32 %v2555, %v2286
  %v2557 = vadd.f32 %v2556, %v2287
  %v2558 = vadd.f32 %v2557, %v2288
  %v2559 = vadd.f32 %v2558, %v2289
  %v2560 = vadd.f32 %v2559, %v2290
  %v2561 = vadd.f32 %v2560, %v2291
  %v2562 = vadd.f32 %v2561, %v2292
  %v2563 = vadd.f32 %v2562, %v2293
  %v2564 = vadd.f32 %v2563, %v2294
  %v2565 = vrot.slane %v2564, 4
  %v2566 = vadd.f32 %v2564, %v2565
  %v2567 = vrot.slane %v2566, 2
  %v2568 = vadd.f32 %v2566, %v2567
  %v2569 = vrot.slane %v2568, 1
  %v2570 = vadd.f32 %v2568, %v2569
  %v2571 = vadd.f32 %v2295, %v2296
  %v2572 = vadd.f32 %v2571, %v2297
  %v2573 = vadd.f32 %v2572, %v2298
  %v2574 = vadd.f32 %v2573, %v2299
  %v2575 = vadd.f32 %v2574, %v2300
  %v2576 = vadd.f32 %v2575, %v2301
  %v2577 = vadd.f32 %v2576, %v2302
  %v2578 = vadd.f32 %v2577, %v2303
  %v2579 = vadd.f32 %v2578, %v2304
  %v2580 = vadd.f32 %v2579, %v2305
  %v2581 = vadd.f32 %v2580, %v2306
  %v2582 = vadd.f32 %v2581, %v2307
  %v2583 = vadd.f32 %v2582, %v2308
  %v2584 = vadd.f32 %v2583, %v2309
  %v2585 = vadd.f32 %v2584, %v2310
  %v2586 = vadd.f32 %v2585, %v2311
  %v2587 = vadd.f32 %v2586, %v2312
  %v2588 = vadd.f32 %v2587, %v2313
  %v2589 = vadd.f32 %v2588, %v2314
  %v2590 = vadd.f32 %v2589, %v2315
  %v2591 = vadd.f32 %v2590, %v2316
  %v2592 = vadd.f32 %v2591, %v2317
  %v2593 = vadd.f32 %v2592, %v2318
  %v2594 = vadd.f32 %v2593, %v2319
  %v2595 = vadd.f32 %v2594, %v2320
  %v2596 = vadd.f32 %v2595, %v2321
  %v2597 = vadd.f32 %v2596, %v2322
  %v2598 = vadd.f32 %v2597, %v2323
  %v2599 = vadd.f32 %v2598, %v2324
  %v2600 = vadd.f32 %v2599, %v2325
  %v2601 = vadd.f32 %v2600, %v2326
  %v2602 = vrot.slane %v2601, 4
  %v2603 = vadd.f32 %v2601, %v2602
  %v2604 = vrot.slane %v2603, 2
  %v2605 = vadd.f32 %v2603, %v2604
  %v2606 = vrot.slane %v2605, 1
  %v2607 = vadd.f32 %v2605, %v2606
  %v2608 = vadd.f32 %v2327, %v2328
  %v2609 = vadd.f32 %v2608, %v2329
  %v2610 = vadd.f32 %v2609, %v2330
  %v2611 = vadd.f32 %v2610, %v2331
  %v2612 = vadd.f32 %v2611, %v2332
  %v2613 = vadd.f32 %v2612, %v2333
  %v2614 = vadd.f32 %v2613, %v2334
  %v2615 = vadd.f32 %v2614, %v2335
  %v2616 = vadd.f32 %v2615, %v2336
  %v2617 = vadd.f32 %v2616, %v2337
  %v2618 = vadd.f32 %v2617, %v2338
  %v2619 = vadd.f32 %v2618, %v2339
  %v2620 = vadd.f32 %v2619, %v2340
  %v2621 = vadd.f32 %v2620, %v2341
  %v2622 = vadd.f32 %v2621, %v2342
  %v2623 = vadd.f32 %v2622, %v2343
  %v2624 = vadd.f32 %v2623, %v2344
  %v2625 = vadd.f32 %v2624, %v2345
  %v2626 = vadd.f32 %v2625, %v2346
  %v2627 = vadd.f32 %v2626, %v2347
  %v2628 = vadd.f32 %v2627, %v2348
  %v2629 = vadd.f32 %v2628, %v2349
  %v2630 = vadd.f32 %v2629, %v2350
  %v2631 = vadd.f32 %v2630, %v2351
  %v2632 = vadd.f32 %v2631, %v2352
  %v2633 = vadd.f32 %v2632, %v2353
  %v2634 = vadd.f32 %v2633, %v2354
  %v2635 = vadd.f32 %v2634, %v2355
  %v2636 = vadd.f32 %v2635, %v2356
  %v2637 = vadd.f32 %v2636, %v2357
  %v2638 = vadd.f32 %v2637, %v2358
  %v2639 = vrot.slane %v2638, 4
  %v2640 = vadd.f32 %v2638, %v2639
  %v2641 = vrot.slane %v2640, 2
  %v2642 = vadd.f32 %v2640, %v2641
  %v2643 = vrot.slane %v2642, 1
  %v2644 = vadd.f32 %v2642, %v2643
  %v2645 = vadd.f32 %v2359, %v2360
  %v2646 = vadd.f32 %v2645, %v2361
  %v2647 = vadd.f32 %v2646, %v2362
  %v2648 = vadd.f32 %v2647, %v2363
  %v2649 = vadd.f32 %v2648, %v2364
  %v2650 = vadd.f32 %v2649, %v2365
  %v2651 = vadd.f32 %v2650, %v2366
  %v2652 = vadd.f32 %v2651, %v2367
  %v2653 = vadd.f32 %v2652, %v2368
  %v2654 = vadd.f32 %v2653, %v2369
  %v2655 = vadd.f32 %v2654, %v2370
  %v2656 = vadd.f32 %v2655, %v2371
  %v2657 = vadd.f32 %v2656, %v2372
  %v2658 = vadd.f32 %v2657, %v2373
  %v2659 = vadd.f32 %v2658, %v2374
  %v2660 = vadd.f32 %v2659, %v2375
  %v2661 = vadd.f32 %v2660, %v2376
  %v2662 = vadd.f32 %v2661, %v2377
  %v2663 = vadd.f32 %v2662, %v2378
  %v2664 = vadd.f32 %v2663, %v2379
  %v2665 = vadd.f32 %v2664, %v2380
  %v2666 = vadd.f32 %v2665, %v2381
  %v2667 = vadd.f32 %v2666, %v2382
  %v2668 = vadd.f32 %v2667, %v2383
  %v2669 = vadd.f32 %v2668, %v2384
  %v2670 = vadd.f32 %v2669, %v2385
  %v2671 = vadd.f32 %v2670, %v2386
  %v2672 = vadd.f32 %v2671, %v2387
  %v2673 = vadd.f32 %v2672, %v2388
  %v2674 = vadd.f32 %v2673, %v2389
  %v2675 = vadd.f32 %v2674, %v2390
  %v2676 = vrot.slane %v2675, 4
  %v2677 = vadd.f32 %v2675, %v2676
  %v2678 = vrot.slane %v2677, 2
  %v2679 = vadd.f32 %v2677, %v2678
  %v2680 = vrot.slane %v2679, 1
  %v2681 = vadd.f32 %v2679, %v2680
  %v2682 = vadd.f32 %v2391, %v2392
  %v2683 = vadd.f32 %v2682, %v2393
  %v2684 = vadd.f32 %v2683, %v2394
  %v2685 = vadd.f32 %v2684, %v2395
  %v2686 = vadd.f32 %v2685, %v2396
  %v2687 = vadd.f32 %v2686, %v2397
  %v2688 = vadd.f32 %v2687, %v2398
  %v2689 = vadd.f32 %v2688, %v2399
  %v2690 = vadd.f32 %v2689, %v2400
  %v2691 = vadd.f32 %v2690, %v2401
  %v2692 = vadd.f32 %v2691, %v2402
  %v2693 = vadd.f32 %v2692, %v2403
  %v2694 = vadd.f32 %v2693, %v2404
  %v2695 = vadd.f32 %v2694, %v2405
  %v2696 = vadd.f32 %v2695, %v2406
  %v2697 = vadd.f32 %v2696, %v2407
  %v2698 = vadd.f32 %v2697, %v2408
  %v2699 = vadd.f32 %v2698, %v2409
  %v2700 = vadd.f32 %v2699, %v2410
  %v2701 = vadd.f32 %v2700, %v2411
  %v2702 = vadd.f32 %v2701, %v2412
  %v2703 = vadd.f32 %v2702, %v2413
  %v2704 = vadd.f32 %v2703, %v2414
  %v2705 = vadd.f32 %v2704, %v2415
  %v2706 = vadd.f32 %v2705, %v2416
  %v2707 = vadd.f32 %v2706, %v2417
  %v2708 = vadd.f32 %v2707, %v2418
  %v2709 = vadd.f32 %v2708, %v2419
  %v2710 = vadd.f32 %v2709, %v2420
  %v2711 = vadd.f32 %v2710, %v2421
  %v2712 = vadd.f32 %v2711, %v2422
  %v2713 = vrot.slane %v2712, 4
  %v2714 = vadd.f32 %v2712, %v2713
  %v2715 = vrot.slane %v2714, 2
  %v2716 = vadd.f32 %v2714, %v2715
  %v2717 = vrot.slane %v2716, 1
  %v2718 = vadd.f32 %v2716, %v2717
  %v2719 = vmul.f32 %v2459, 0.00390625
  %v2720 = vmul.f32 %v2496, 0.00390625
  %v2721 = vmul.f32 %v2533, 0.00390625
  %v2722 = vmul.f32 %v2570, 0.00390625
  %v2723 = vmul.f32 %v2607, 0.00390625
  %v2724 = vmul.f32 %v2644, 0.00390625
  %v2725 = vmul.f32 %v2681, 0.00390625
  %v2726 = vmul.f32 %v2718, 0.00390625
  %vm2735 = vcmask 1041409
  %v2736 = vsel %vm2735, %v2720, %v2719
  %vm2737 = vcmask 1042434
  %v2738 = vsel %vm2737, %v2721, %v2736
  %vm2739 = vcmask 1043459
  %v2740 = vsel %vm2739, %v2722, %v2738
  %vm2741 = vcmask 1044484
  %v2742 = vsel %vm2741, %v2723, %v2740
  %vm2743 = vcmask 1045509
  %v2744 = vsel %vm2743, %v2724, %v2742
  %vm2745 = vcmask 1046534
  %v2746 = vsel %vm2745, %v2725, %v2744
  %vm2747 = vcmask 1047559
  %v2748 = vsel %vm2747, %v2726, %v2746
  %2750 = vst [vmem:[%s3] sm:$0xff] %v2748
  // Predicated region
  $region14: #{simclr_forward.2} parent=0 // pred_check
    _
  $region15: #{simclr_forward.2} parent=0 // pred_check_branch
    %2752 = sbr.rel (0) target = $region17
  $region16: #{simclr_forward.2} parent=0 // pred_region
    _
  $region17: #{simclr_forward.2} parent=0 // pred_fallthru
    _
  // Predicated region
  $region18: #{simclr_forward.2} parent=0 // pred_check
    _
  $region19: #{simclr_forward.2} parent=0 // pred_check_branch
    %2754 = sbr.rel (0) target = $region21
  $region20: #{simclr_forward.2} parent=0 // pred_region
    _
  $region21: #{simclr_forward.2} parent=0 // pred_fallthru
    _

// kernel: simclr_forward.3
$region0: #{simclr_forward.3}
  #allocation0 [shape = 'u32[]', space=smem, size = 0x4, offset = 0x4, fixed_abs, tag = 'smem constant byte address 0x4 - core index']
  #allocation1 [shape = 'u32[144,128]{1,0:T(1,128)}', space=vmem, size = 0x12000, scoped, tag = 'internal scratch']
  #allocation2 [shape = 'f32[8,128]{1,0:T(8,128)}', space=vmem, size = 0x1000, scoped, tag = 'scratch operand']
  #allocation3 [shape = 'f32[8,128]{1,0:T(8,128)}', space=vmem, size = 0x1000, scoped, tag = 'scratch operand']
  %s0 = inlined_call_operand.vmem [shape: f32[8,128], index: 0, kind: input, shape index: {}]
  %s1 = inlined_call_operand.vmem [shape: bf16[128,128], index: 1, kind: input, shape index: {}]
  %s2 = inlined_call_operand.vmem [shape: f32[8,128], index: 2, kind: input, shape index: {}]
  %s3 = inlined_call_operand.vmem [shape: bf16[128,128], index: 3, kind: input, shape index: {}]
  %s4 = inlined_call_operand.vmem [shape: f32[8,128], index: 4, kind: input, shape index: {}]
  %s5 = inlined_call_operand.vmem [shape: f32[8,128], index: 5, kind: output, shape index: {}]
  %s6 = sld [smem:[#allocation0]]
  $region69: #{simclr_forward.3} parent=0
    _
  %s8 = ssub.s32 1, %s6
  %s9 = scalar_select 0, %s8, %s6
  loop: start=0, step=1, limit=5
  $region2: #{simclr_forward.3} parent=0 // loop_pre_header
    _
  $region3: #{simclr_forward.3} parent=0 // loop_header
    %s11 = sphi 0, %s15
    %p12 = scmp.ge.s32.totalorder %s11, 5
    %s18 = sphi 0, %s30
    %s19 = sphi 0, %s26
    %s20 = sphi 0, %s18
    %s21 = sphi 0, %s19
    %s22 = sphi 0, %s20
    %s23 = sphi 0, %s21
    %s37 = sphi 0, %s39
    %s40 = sphi 0, %s37
    %s41 = sphi 0, %s40
    %s57 = sphi 0, %s41
    %s61 = sphi 0, %s61
    %s63 = sphi 0, %s61
    %s64 = sphi 0, %s63
    %s78 = sphi 0, %s64
    %s82 = sphi 0, %s82
    %s84 = sphi 0, %s82
    %s85 = sphi 0, %s84
    %s99 = sphi 0, %s85
    %s103 = sphi 0, %s103
    %s105 = sphi 0, %s103
    %s106 = sphi 0, %s105
    %s120 = sphi 0, %s106
    %s124 = sphi 0, %s124
    %s126 = sphi 0, %s124
    %s127 = sphi 0, %s126
    %s141 = sphi 0, %s127
    %s151 = sphi 0, %s153
    %s154 = sphi 0, %s151
    %s155 = sphi 0, %s154
    %s171 = sphi 0, %s155
  $region4: #{simclr_forward.3} parent=0 // loop_header_branch
    %14 = sbr.rel (%p12) target = $region8
  $region5: #{simclr_forward.3} parent=0 // loop_body
    %s16 = ssub.s32 %s11, 1
    %s17 = ssub.s32 %s11, 2
    %s24 = sadd.s32 1, %s19
    %p25 = scmp.ge.s32.totalorder %s24, 1
    %s26 = scalar_select %p25, 0, %s24
    %s27 = sadd.s32 1, %s18
    %s28 = scalar_select %p25, %s27, %s18
    %p29 = scmp.ge.s32.totalorder %s28, 3
    %s30 = scalar_select %p29, 0, %s28
    %p31 = scmp.eq.s32.totalorder %s18, 0
    %s32 = scalar_select %p31, %s19, 0
    %p33 = scmp.eq.s32.totalorder %s30, 0
    %s34 = scalar_select %p33, %s26, 0
    %s35 = ssub.s32 %s32, %s34
    %p36 = scmp.eq.s32.totalorder %s35, 0
    %s38 = sadd.s32 %s37, 1
    %s39 = scalar_select %p36, %s37, %s38
    %p42 = pneg %p36
    %p43 = scmp.eq.s32.totalorder %s11, 2
    %p44 = por %p42, %p43
    %p45 = scmp.ne.s32.totalorder %s37, %s40
    %p46 = scmp.eq.s32.totalorder %s11, 0
    %p47 = por %p45, %p46
    %p48 = scmp.ne.s32.totalorder %s37, %s40
    %p49 = scmp.eq.s32.totalorder %s16, 2
    %p50 = por %p48, %p49
    %p51 = scmp.ne.s32.totalorder %s40, %s41
    %p52 = scmp.eq.s32.totalorder %s16, 0
    %p53 = por %p51, %p52
    %p54 = scmp.ne.s32.totalorder %s40, %s41
    %p55 = scmp.eq.s32.totalorder %s17, 2
    %p56 = por %p54, %p55
    %p58 = scmp.ne.s32.totalorder %s41, %s57
    %p59 = scmp.eq.s32.totalorder %s17, 0
    %p60 = por %p58, %p59
    %s62 = sadd.s32 %s61, 1
    %p65 = scmp.eq.s32.totalorder %s11, 2
    %p66 = scmp.ne.s32.totalorder %s61, %s63
    %p67 = scmp.eq.s32.totalorder %s11, 0
    %p68 = por %p66, %p67
    %p69 = scmp.ne.s32.totalorder %s61, %s63
    %p70 = scmp.eq.s32.totalorder %s16, 2
    %p71 = por %p69, %p70
    %p72 = scmp.ne.s32.totalorder %s63, %s64
    %p73 = scmp.eq.s32.totalorder %s16, 0
    %p74 = por %p72, %p73
    %p75 = scmp.ne.s32.totalorder %s63, %s64
    %p76 = scmp.eq.s32.totalorder %s17, 2
    %p77 = por %p75, %p76
    %p79 = scmp.ne.s32.totalorder %s64, %s78
    %p80 = scmp.eq.s32.totalorder %s17, 0
    %p81 = por %p79, %p80
    %s83 = sadd.s32 %s82, 1
    %p86 = scmp.eq.s32.totalorder %s11, 2
    %p87 = scmp.ne.s32.totalorder %s82, %s84
    %p88 = scmp.eq.s32.totalorder %s11, 0
    %p89 = por %p87, %p88
    %p90 = scmp.ne.s32.totalorder %s82, %s84
    %p91 = scmp.eq.s32.totalorder %s16, 2
    %p92 = por %p90, %p91
    %p93 = scmp.ne.s32.totalorder %s84, %s85
    %p94 = scmp.eq.s32.totalorder %s16, 0
    %p95 = por %p93, %p94
    %p96 = scmp.ne.s32.totalorder %s84, %s85
    %p97 = scmp.eq.s32.totalorder %s17, 2
    %p98 = por %p96, %p97
    %p100 = scmp.ne.s32.totalorder %s85, %s99
    %p101 = scmp.eq.s32.totalorder %s17, 0
    %p102 = por %p100, %p101
    %s104 = sadd.s32 %s103, 1
    %p107 = scmp.eq.s32.totalorder %s11, 2
    %p108 = scmp.ne.s32.totalorder %s103, %s105
    %p109 = scmp.eq.s32.totalorder %s11, 0
    %p110 = por %p108, %p109
    %p111 = scmp.ne.s32.totalorder %s103, %s105
    %p112 = scmp.eq.s32.totalorder %s16, 2
    %p113 = por %p111, %p112
    %p114 = scmp.ne.s32.totalorder %s105, %s106
    %p115 = scmp.eq.s32.totalorder %s16, 0
    %p116 = por %p114, %p115
    %p117 = scmp.ne.s32.totalorder %s105, %s106
    %p118 = scmp.eq.s32.totalorder %s17, 2
    %p119 = por %p117, %p118
    %p121 = scmp.ne.s32.totalorder %s106, %s120
    %p122 = scmp.eq.s32.totalorder %s17, 0
    %p123 = por %p121, %p122
    %s125 = sadd.s32 %s124, 1
    %p128 = scmp.eq.s32.totalorder %s11, 2
    %p129 = scmp.ne.s32.totalorder %s124, %s126
    %p130 = scmp.eq.s32.totalorder %s11, 0
    %p131 = por %p129, %p130
    %p132 = scmp.ne.s32.totalorder %s124, %s126
    %p133 = scmp.eq.s32.totalorder %s16, 2
    %p134 = por %p132, %p133
    %p135 = scmp.ne.s32.totalorder %s126, %s127
    %p136 = scmp.eq.s32.totalorder %s16, 0
    %p137 = por %p135, %p136
    %p138 = scmp.ne.s32.totalorder %s126, %s127
    %p139 = scmp.eq.s32.totalorder %s17, 2
    %p140 = por %p138, %p139
    %p142 = scmp.ne.s32.totalorder %s127, %s141
    %p143 = scmp.eq.s32.totalorder %s17, 0
    %p144 = por %p142, %p143
    %p145 = scmp.eq.s32.totalorder %s18, 2
    %s146 = scalar_select %p145, %s19, 0
    %p147 = scmp.eq.s32.totalorder %s30, 2
    %s148 = scalar_select %p147, %s26, 0
    %s149 = ssub.s32 %s146, %s148
    %p150 = scmp.eq.s32.totalorder %s149, 0
    %s152 = sadd.s32 %s151, 1
    %s153 = scalar_select %p150, %s151, %s152
    %p156 = pneg %p150
    %p157 = scmp.eq.s32.totalorder %s11, 2
    %p158 = por %p156, %p157
    %p159 = scmp.ne.s32.totalorder %s151, %s154
    %p160 = scmp.eq.s32.totalorder %s11, 0
    %p161 = por %p159, %p160
    %p162 = scmp.ne.s32.totalorder %s151, %s154
    %p163 = scmp.eq.s32.totalorder %s16, 2
    %p164 = por %p162, %p163
    %p165 = scmp.ne.s32.totalorder %s154, %s155
    %p166 = scmp.eq.s32.totalorder %s16, 0
    %p167 = por %p165, %p166
    %p168 = scmp.ne.s32.totalorder %s154, %s155
    %p169 = scmp.eq.s32.totalorder %s17, 2
    %p170 = por %p168, %p169
    %p172 = scmp.ne.s32.totalorder %s155, %s171
    %p173 = scmp.eq.s32.totalorder %s17, 0
    %p174 = por %p172, %p173
    %p175 = scmp.le.s32.totalorder 1, %s11
    %p176 = scmp.lt.s32.totalorder %s11, 4
    %p177 = pnand %p175, %p176
    %p178 = pneg %p177
    // Predicated region
    $region9: #{simclr_forward.3} parent=5 // pred_check
      _
    $region10: #{simclr_forward.3} parent=5 // pred_check_branch
      %180 = sbr.rel (%p177) target = $region12
    $region11: #{simclr_forward.3} parent=5 // pred_region
      %s181 = ssub.s32 %s11, 1
      // Predicated region
      $region13: #{simclr_forward.3} parent=11 // pred_check
        %p182 = pneg %p74
      $region14: #{simclr_forward.3} parent=11 // pred_check_branch
        %184 = sbr.rel (%p182) target = $region16
      $region15: #{simclr_forward.3} parent=11 // pred_region
        _
      $region16: #{simclr_forward.3} parent=11 // pred_fallthru
        _
      // Predicated region
      $region17: #{simclr_forward.3} parent=11 // pred_check
        %p185 = pneg %p95
      $region18: #{simclr_forward.3} parent=11 // pred_check_branch
        %187 = sbr.rel (%p185) target = $region20
      $region19: #{simclr_forward.3} parent=11 // pred_region
        _
      $region20: #{simclr_forward.3} parent=11 // pred_fallthru
        _
      // Predicated region
      $region21: #{simclr_forward.3} parent=11 // pred_check
        %p188 = pneg %p116
      $region22: #{simclr_forward.3} parent=11 // pred_check_branch
        %190 = sbr.rel (%p188) target = $region24
      $region23: #{simclr_forward.3} parent=11 // pred_region
        _
      $region24: #{simclr_forward.3} parent=11 // pred_fallthru
        _
      // Predicated region
      $region25: #{simclr_forward.3} parent=11 // pred_check
        %p191 = pneg %p137
      $region26: #{simclr_forward.3} parent=11 // pred_check_branch
        %193 = sbr.rel (%p191) target = $region28
      $region27: #{simclr_forward.3} parent=11 // pred_region
        _
      $region28: #{simclr_forward.3} parent=11 // pred_fallthru
        _
    $region12: #{simclr_forward.3} parent=5 // pred_fallthru
      _
    %p194 = scmp.lt.s32.totalorder %s11, 3
    // Predicated region
    $region29: #{simclr_forward.3} parent=5 // pred_check
      %p195 = pneg %p194
    $region30: #{simclr_forward.3} parent=5 // pred_check_branch
      %197 = sbr.rel (%p195) target = $region32
    $region31: #{simclr_forward.3} parent=5 // pred_region
      // Predicated region
      $region33: #{simclr_forward.3} parent=31 // pred_check
        %p198 = pneg %p47
      $region34: #{simclr_forward.3} parent=31 // pred_check_branch
        %200 = sbr.rel (%p198) target = $region36
      $region35: #{simclr_forward.3} parent=31 // pred_region
        %p201 = scmp.eq.s32.totalorder %s18, 0
        %s202 = scalar_select %p201, %s19, 0
        %p203 = scmp.lt.s32.totalorder %s202, 0
        %s204 = scalar_select %p203, %s202, 0
        %s205 = smul.addr %s204, 8
        %s206 = scalar_lea.vmem %s0, %s205
        %p207 = scmp.eq.s32.totalorder %s18, 0
        %s208 = scalar_select %p207, %s19, 0
      $region36: #{simclr_forward.3} parent=31 // pred_fallthru
        _
    $region32: #{simclr_forward.3} parent=5 // pred_fallthru
      _
    %p209 = scmp.le.s32.totalorder 1, %s11
    %p210 = scmp.lt.s32.totalorder %s11, 4
    %p211 = pnand %p209, %p210
    %p212 = pneg %p211
    // Predicated region
    $region37: #{simclr_forward.3} parent=5 // pred_check
      _
    $region38: #{simclr_forward.3} parent=5 // pred_check_branch
      %214 = sbr.rel (%p211) target = $region40
    $region39: #{simclr_forward.3} parent=5 // pred_region
      %s215 = ssub.s32 %s11, 1
      %p216 = scmp.eq.s32.totalorder %s20, 0
      %s217 = scalar_select %p216, %s21, 0
      %p218 = scmp.lt.s32.totalorder %s217, 0
      %s219 = scalar_select %p218, %s217, 0
      %s220 = smul.addr %s219, 8
      %s221 = scalar_lea.vmem %s0, %s220
      %p222 = pneg %p53
      %p223 = pneg %p50
      %p224 = pneg %p74
      %p225 = pneg %p71
      %p226 = pneg %p95
      %p227 = pneg %p92
      %p228 = pneg %p116
      %p229 = pneg %p113
      %p230 = pneg %p137
      %p231 = pneg %p134
      %p232 = pneg %p167
      %p233 = pneg %p164
      %p234 = scmp.eq.s32.totalorder %s20, 2
      %s235 = scalar_select %p234, %s21, 0
      %p236 = scmp.lt.s32.totalorder %s235, 0
      %s237 = scalar_select %p236, %s235, 0
      %s238 = smul.addr %s237, 8
      %s239 = scalar_lea.vmem %s5, %s238
      %p240 = scmp.eq.s32.totalorder %s20, 0
      %s241 = scalar_select %p240, %s21, 0
      %p242 = scmp.lt.s32.totalorder %s241, 0
      %s243 = scalar_select %p242, %s241, 0
      %s244 = smul.addr %s243, 8
      %s245 = scalar_lea.vmem %s0, %s244
      %p246 = scmp.eq.s32.totalorder %s20, 0
      %s247 = scalar_select %p246, %s21, 0
      %p248 = scmp.eq.s32.totalorder %s20, 2
      %s249 = scalar_select %p248, %s21, 0
      %p250 = scmp.lt.s32.totalorder %s249, 0
      %s251 = scalar_select %p250, %s249, 0
      %s252 = smul.addr %s251, 8
      %s253 = scalar_lea.vmem %s5, %s252
      %p254 = scmp.eq.s32.totalorder %s20, 2
      %s255 = scalar_select %p254, %s21, 0
      %s257 = smul.u32 %s21, 8
      %v258 = vlaneseq
      %v259 = vshrl.u32 %v258, 7
      %v260 = vstv %s257
      %v261 = vadd.s32 %v259, %v260
      %vm262 = vcmp.lt.s32.totalorder %v261, 2
      %v263 = vsel %vm262, 1, 0
      %v264 = vcvt.s32.f32 %v263
      %p265 = scmp.eq.s32.totalorder %s20, 0
      %p266 = scmp.eq.s32.totalorder %s21, 0
      %p267 = pnand %p265, %p266
      %p268 = pneg %p267
      // Predicated region
      $region41: #{simclr_forward.3} parent=39 // pred_check
        _
      $region42: #{simclr_forward.3} parent=39 // pred_check_branch
        %270 = sbr.rel (%p267) target = $region44
      $region43: #{simclr_forward.3} parent=39 // pred_region
        %271 = vst [vmem:[#allocation3] sm:$0xff] 0.0
      $region44: #{simclr_forward.3} parent=39 // pred_fallthru
        _
      // Predicated region
      $region45: #{simclr_forward.3} parent=39 // pred_check
        %p272 = pneg %p265
      $region46: #{simclr_forward.3} parent=39 // pred_check_branch
        %274 = sbr.rel (%p272) target = $region48
      $region47: #{simclr_forward.3} parent=39 // pred_region
        %v275 = vld [vmem:[%s245] sm:$0xff]
        %v276 = vpack.c.bf16 %v275, %v275
        %v277 = vld [vmem:[%s1] sm:$0xf]
        %v278 = vld [vmem:[%s1 + $0x4] sm:$0xf]
        %v279 = vld [vmem:[%s1 + $0x8] sm:$0xf]
        %v280 = vld [vmem:[%s1 + $0xc] sm:$0xf]
        %v281 = vld [vmem:[%s1 + $0x10] sm:$0xf]
        %v282 = vld [vmem:[%s1 + $0x14] sm:$0xf]
        %v283 = vld [vmem:[%s1 + $0x18] sm:$0xf]
        %v284 = vld [vmem:[%s1 + $0x1c] sm:$0xf]
        %v285 = vld [vmem:[%s1 + $0x20] sm:$0xf]
        %v286 = vld [vmem:[%s1 + $0x24] sm:$0xf]
        %v287 = vld [vmem:[%s1 + $0x28] sm:$0xf]
        %v288 = vld [vmem:[%s1 + $0x2c] sm:$0xf]
        %v289 = vld [vmem:[%s1 + $0x30] sm:$0xf]
        %v290 = vld [vmem:[%s1 + $0x34] sm:$0xf]
        %v291 = vld [vmem:[%s1 + $0x38] sm:$0xf]
        %v292 = vld [vmem:[%s1 + $0x3c] sm:$0xf]
        %v293 = vld [vmem:[%s2] sm:$0x1]
        %v294 = vlaneseq
        %v295 = vshrl.u32 %v294, 7
        %v296 = vsub.s32 0, %v295
        %v297 = vrot.slane %v293, %v296
        %v314 = vunpack.c.l.b16 %v277
        %v315 = vunpack.c.l.b16 %v278
        %v316 = vunpack.c.l.b16 %v279
        %v317 = vunpack.c.l.b16 %v280
        %v318 = vunpack.c.l.b16 %v281
        %v319 = vunpack.c.l.b16 %v282
        %v320 = vunpack.c.l.b16 %v283
        %v321 = vunpack.c.l.b16 %v284
        %v322 = vunpack.c.l.b16 %v285
        %v323 = vunpack.c.l.b16 %v286
        %v324 = vunpack.c.l.b16 %v287
        %v325 = vunpack.c.l.b16 %v288
        %v326 = vunpack.c.l.b16 %v289
        %v327 = vunpack.c.l.b16 %v290
        %v328 = vunpack.c.l.b16 %v291
        %v329 = vunpack.c.l.b16 %v292
        %v330 = vpack.c.b16 %v315, %v314
        %v331 = vpack.c.b16 %v317, %v316
        %v332 = vpack.c.b16 %v319, %v318
        %v333 = vpack.c.b16 %v321, %v320
        %v334 = vpack.c.b16 %v323, %v322
        %v335 = vpack.c.b16 %v325, %v324
        %v336 = vpack.c.b16 %v327, %v326
        %v337 = vpack.c.b16 %v329, %v328
        %346 = vmatprep.subr.bf16.mxu0 0
        %347 = vmatpush1.bf16.msra.mxu0 %v330
        %348 = vmatprep.subr.bf16.mxu0 0
        %349 = vmatpush1.bf16.msra.mxu0 %v331
        %350 = vmatprep.subr.bf16.mxu0 0
        %351 = vmatpush1.bf16.msra.mxu0 %v332
        %352 = vmatprep.subr.bf16.mxu0 0
        %353 = vmatpush1.bf16.msra.mxu0 %v333
        %354 = vmatprep.subr.bf16.mxu0 0
        %355 = vmatpush1.bf16.msra.mxu0 %v334
        %356 = vmatprep.subr.bf16.mxu0 0
        %357 = vmatpush1.bf16.msra.mxu0 %v335
        %358 = vmatprep.subr.bf16.mxu0 0
        %359 = vmatpush1.bf16.msra.mxu0 %v336
        %360 = vmatprep.subr.bf16.mxu0 0
        %361 = vmatpush1.bf16.msra.mxu0 %v337
        %362 = vmatprep.subr.bf16.mxu0 0
        %363 = vmatpush1.bf16.msra.mxu0 0
        %364 = vmatprep.subr.bf16.mxu0 0
        %365 = vmatpush1.bf16.msra.mxu0 0
        %366 = vmatprep.subr.bf16.mxu0 0
        %367 = vmatpush1.bf16.msra.mxu0 0
        %368 = vmatprep.subr.bf16.mxu0 0
        %369 = vmatpush1.bf16.msra.mxu0 0
        %370 = vmatprep.subr.bf16.mxu0 0
        %371 = vmatpush1.bf16.msra.mxu0 0
        %372 = vmatprep.subr.bf16.mxu0 0
        %373 = vmatpush1.bf16.msra.mxu0 0
        %374 = vmatprep.subr.bf16.mxu0 0
        %375 = vmatpush1.bf16.msra.mxu0 0
        %376 = vmatprep.subr.bf16.mxu0 0
        %377 = vmatpush1.bf16.msra.mxu0 0
        %378 = vmatprep.mubr.bf16.mxu0 0
        %379 = vmatmul.mubr.bf16.gmra.mrb[0].mxu0 %v276
        %v380 = vpop.f32.mrb[0].mxu0
        %v381 = vadd.f32 %v297, %v380
        %v382 = vpop.f32.mrb[0].mxu0
        %v383 = vpop.f32.mrb[0].mxu0
        %v384 = vpop.f32.mrb[0].mxu0
        %385 = vdwg.mxu0
        %s386 = scalar_lea.vmem [#allocation2], %s257
        %387 = vst [vmem:[%s386] sm:$0xff] %v381
        %v388 = vmul.f32 %v381, %v264
        %v389 = vld [vmem:[#allocation3] sm:$0x1]
        %v390 = vrot.slane %v388, 4
        %v391 = vadd.f32 %v388, %v390
        %v392 = vrot.slane %v391, 2
        %v393 = vadd.f32 %v391, %v392
        %v394 = vrot.slane %v393, 1
        %v395 = vadd.f32 %v393, %v394
        %v396 = vadd.f32 %v389, %v395
        %397 = vst [vmem:[#allocation3] sm:$0x1] %v396
      $region48: #{simclr_forward.3} parent=39 // pred_fallthru
        _
      %p398 = scmp.eq.s32.totalorder %s20, 1
      // Predicated region
      $region49: #{simclr_forward.3} parent=39 // pred_check
        %p399 = pneg %p398
      $region50: #{simclr_forward.3} parent=39 // pred_check_branch
        %401 = sbr.rel (%p399) target = $region52
      $region51: #{simclr_forward.3} parent=39 // pred_region
        %s402 = scalar_lea.vmem [#allocation2], %s257
        %v403 = vld [vmem:[%s402] sm:$0xff]
        %v404 = vld [vmem:[#allocation3] sm:$0x1]
        %v405 = vmul.f32 %v404, 0.5
        %v406 = vlaneseq
        %v407 = vshrl.u32 %v406, 7
        %v408 = vsub.s32 0, %v407
        %v409 = vrot.slane %v405, %v408
        %v410 = vsub.f32 %v403, %v409
        %v411 = vmul.f32 %v410, %v264
        %v412 = vld [vmem:[#allocation3 + $0x1] sm:$0x1]
        %v413 = vmul.f32 %v411, %v411
        %v414 = vrot.slane %v413, 4
        %v415 = vadd.f32 %v413, %v414
        %v416 = vrot.slane %v415, 2
        %v417 = vadd.f32 %v415, %v416
        %v418 = vrot.slane %v417, 1
        %v419 = vadd.f32 %v417, %v418
        %v420 = vadd.f32 %v412, %v419
        %421 = vst [vmem:[#allocation3 + $0x1] sm:$0x1] %v420
      $region52: #{simclr_forward.3} parent=39 // pred_fallthru
        _
      %p422 = scmp.eq.s32.totalorder %s20, 2
      // Predicated region
      $region53: #{simclr_forward.3} parent=39 // pred_check
        %p423 = pneg %p422
      $region54: #{simclr_forward.3} parent=39 // pred_check_branch
        %425 = sbr.rel (%p423) target = $region56
      $region55: #{simclr_forward.3} parent=39 // pred_region
        %s426 = scalar_lea.vmem [#allocation2], %s257
        %v427 = vld [vmem:[%s426] sm:$0xff]
        %v428 = vld [vmem:[#allocation3] sm:$0x1]
        %v429 = vmul.f32 %v428, 0.5
        %v430 = vld [vmem:[#allocation3 + $0x1] sm:$0x1]
        %v431 = vmul.f32 %v430, 0.5
        %v432 = vlaneseq
        %v433 = vshrl.u32 %v432, 7
        %v434 = vsub.s32 0, %v433
        %v435 = vrot.slane %v429, %v434
        %v436 = vsub.f32 %v427, %v435
        %v437 = vadd.f32 %v431, 1e-05
        %v438 = vrsqrt.pop %v437
        %v439 = vlaneseq
        %v440 = vshrl.u32 %v439, 7
        %v441 = vsub.s32 0, %v440
        %v442 = vrot.slane %v438, %v441
        %v443 = vmul.f32 %v436, %v442
        %v444 = vld [vmem:[%s2 + $0x1] sm:$0x1]
        %v445 = vlaneseq
        %v446 = vshrl.u32 %v445, 7
        %v447 = vsub.s32 0, %v446
        %v448 = vrot.slane %v444, %v447
        %v449 = vmul.f32 %v443, %v448
        %v450 = vld [vmem:[%s2 + $0x2] sm:$0x1]
        %v451 = vlaneseq
        %v452 = vshrl.u32 %v451, 7
        %v453 = vsub.s32 0, %v452
        %v454 = vrot.slane %v450, %v453
        %v455 = vadd.f32 %v449, %v454
        %v456 = vmax.f32 %v455, 0.0
        %v457 = vpack.c.bf16 %v456, %v456
        %v458 = vld [vmem:[%s3] sm:$0xf]
        %v459 = vld [vmem:[%s3 + $0x4] sm:$0xf]
        %v460 = vld [vmem:[%s3 + $0x8] sm:$0xf]
        %v461 = vld [vmem:[%s3 + $0xc] sm:$0xf]
        %v462 = vld [vmem:[%s3 + $0x10] sm:$0xf]
        %v463 = vld [vmem:[%s3 + $0x14] sm:$0xf]
        %v464 = vld [vmem:[%s3 + $0x18] sm:$0xf]
        %v465 = vld [vmem:[%s3 + $0x1c] sm:$0xf]
        %v466 = vld [vmem:[%s3 + $0x20] sm:$0xf]
        %v467 = vld [vmem:[%s3 + $0x24] sm:$0xf]
        %v468 = vld [vmem:[%s3 + $0x28] sm:$0xf]
        %v469 = vld [vmem:[%s3 + $0x2c] sm:$0xf]
        %v470 = vld [vmem:[%s3 + $0x30] sm:$0xf]
        %v471 = vld [vmem:[%s3 + $0x34] sm:$0xf]
        %v472 = vld [vmem:[%s3 + $0x38] sm:$0xf]
        %v473 = vld [vmem:[%s3 + $0x3c] sm:$0xf]
        %v474 = vld [vmem:[%s4] sm:$0x1]
        %v475 = vlaneseq
        %v476 = vshrl.u32 %v475, 7
        %v477 = vsub.s32 0, %v476
        %v478 = vrot.slane %v474, %v477
        %v495 = vunpack.c.l.b16 %v458
        %v496 = vunpack.c.l.b16 %v459
        %v497 = vunpack.c.l.b16 %v460
        %v498 = vunpack.c.l.b16 %v461
        %v499 = vunpack.c.l.b16 %v462
        %v500 = vunpack.c.l.b16 %v463
        %v501 = vunpack.c.l.b16 %v464
        %v502 = vunpack.c.l.b16 %v465
        %v503 = vunpack.c.l.b16 %v466
        %v504 = vunpack.c.l.b16 %v467
        %v505 = vunpack.c.l.b16 %v468
        %v506 = vunpack.c.l.b16 %v469
        %v507 = vunpack.c.l.b16 %v470
        %v508 = vunpack.c.l.b16 %v471
        %v509 = vunpack.c.l.b16 %v472
        %v510 = vunpack.c.l.b16 %v473
        %v511 = vpack.c.b16 %v496, %v495
        %v512 = vpack.c.b16 %v498, %v497
        %v513 = vpack.c.b16 %v500, %v499
        %v514 = vpack.c.b16 %v502, %v501
        %v515 = vpack.c.b16 %v504, %v503
        %v516 = vpack.c.b16 %v506, %v505
        %v517 = vpack.c.b16 %v508, %v507
        %v518 = vpack.c.b16 %v510, %v509
        %527 = vmatprep.subr.bf16.mxu0 0
        %528 = vmatpush1.bf16.msra.mxu0 %v511
        %529 = vmatprep.subr.bf16.mxu0 0
        %530 = vmatpush1.bf16.msra.mxu0 %v512
        %531 = vmatprep.subr.bf16.mxu0 0
        %532 = vmatpush1.bf16.msra.mxu0 %v513
        %533 = vmatprep.subr.bf16.mxu0 0
        %534 = vmatpush1.bf16.msra.mxu0 %v514
        %535 = vmatprep.subr.bf16.mxu0 0
        %536 = vmatpush1.bf16.msra.mxu0 %v515
        %537 = vmatprep.subr.bf16.mxu0 0
        %538 = vmatpush1.bf16.msra.mxu0 %v516
        %539 = vmatprep.subr.bf16.mxu0 0
        %540 = vmatpush1.bf16.msra.mxu0 %v517
        %541 = vmatprep.subr.bf16.mxu0 0
        %542 = vmatpush1.bf16.msra.mxu0 %v518
        %543 = vmatprep.subr.bf16.mxu0 0
        %544 = vmatpush1.bf16.msra.mxu0 0
        %545 = vmatprep.subr.bf16.mxu0 0
        %546 = vmatpush1.bf16.msra.mxu0 0
        %547 = vmatprep.subr.bf16.mxu0 0
        %548 = vmatpush1.bf16.msra.mxu0 0
        %549 = vmatprep.subr.bf16.mxu0 0
        %550 = vmatpush1.bf16.msra.mxu0 0
        %551 = vmatprep.subr.bf16.mxu0 0
        %552 = vmatpush1.bf16.msra.mxu0 0
        %553 = vmatprep.subr.bf16.mxu0 0
        %554 = vmatpush1.bf16.msra.mxu0 0
        %555 = vmatprep.subr.bf16.mxu0 0
        %556 = vmatpush1.bf16.msra.mxu0 0
        %557 = vmatprep.subr.bf16.mxu0 0
        %558 = vmatpush1.bf16.msra.mxu0 0
        %559 = vmatprep.mubr.bf16.mxu0 0
        %560 = vmatmul.mubr.bf16.gmra.mrb[0].mxu0 %v457
        %v561 = vpop.f32.mrb[0].mxu0
        %v562 = vadd.f32 %v478, %v561
        %v563 = vpop.f32.mrb[0].mxu0
        %v564 = vpop.f32.mrb[0].mxu0
        %v565 = vpop.f32.mrb[0].mxu0
        %566 = vdwg.mxu0
        %567 = vst [vmem:[%s253] sm:$0xff] %v562
      $region56: #{simclr_forward.3} parent=39 // pred_fallthru
        _
      %p568 = scmp.eq.s32.totalorder %s20, 2
      %s569 = scalar_select %p568, %s21, 0
      %p570 = scmp.lt.s32.totalorder %s569, 0
      %s571 = scalar_select %p570, %s569, 0
      %s572 = smul.addr %s571, 8
      %s573 = scalar_lea.vmem %s5, %s572
      // Predicated region
      $region57: #{simclr_forward.3} parent=39 // pred_check
        %p574 = pneg %p164
      $region58: #{simclr_forward.3} parent=39 // pred_check_branch
        %576 = sbr.rel (%p574) target = $region60
      $region59: #{simclr_forward.3} parent=39 // pred_region
        %p577 = scmp.eq.s32.totalorder %s20, 2
        %s578 = scalar_select %p577, %s21, 0
      $region60: #{simclr_forward.3} parent=39 // pred_fallthru
        _
    $region40: #{simclr_forward.3} parent=5 // pred_fallthru
      _
    %p579 = scmp.le.s32.totalorder 2, %s11
    // Predicated region
    $region61: #{simclr_forward.3} parent=5 // pred_check
      %p580 = pneg %p579
    $region62: #{simclr_forward.3} parent=5 // pred_check_branch
      %582 = sbr.rel (%p580) target = $region64
    $region63: #{simclr_forward.3} parent=5 // pred_region
      %s583 = ssub.s32 %s11, 2
      // Predicated region
      $region65: #{simclr_forward.3} parent=63 // pred_check
        %p584 = pneg %p170
      $region66: #{simclr_forward.3} parent=63 // pred_check_branch
        %586 = sbr.rel (%p584) target = $region68
      $region67: #{simclr_forward.3} parent=63 // pred_region
        %p587 = scmp.eq.s32.totalorder %s22, 2
        %s588 = scalar_select %p587, %s23, 0
        %p589 = scmp.lt.s32.totalorder %s588, 0
        %s590 = scalar_select %p589, %s588, 0
        %s591 = smul.addr %s590, 8
        %s592 = scalar_lea.vmem %s5, %s591
      $region68: #{simclr_forward.3} parent=63 // pred_fallthru
        _
    $region64: #{simclr_forward.3} parent=5 // pred_fallthru
      _
  $region6: #{simclr_forward.3} parent=0 // loop_footer
    %s15 = sadd.s32 1, %s11
  $region7: #{simclr_forward.3} parent=0 // loop_footer_branch
    %10 = sbr.rel target = $region3
  $region8: #{simclr_forward.3} parent=0 // loop_exit
    _

</llo_original>
